<compile_context>
chip_gen: v7x
topology: tpu7x:2x2x1
jax: 0.10.0
libtpu: 0.0.40
codegen_flags: <defaults>
</compile_context>

<pallas_src>
import math
import functools

import jax
import jax.numpy as jnp
from jax.experimental import pallas as pl
from jax.experimental.pallas import tpu as pltpu

LN_EPS = 1e-5  # torch.nn.LayerNorm default


# ----------------------------- in-kernel helpers -----------------------------

def _layer_norm(x, gamma, beta):
    # x: (M, E) f32; gamma/beta: (1, E); biased variance like torch
    mu = jnp.mean(x, axis=-1, keepdims=True)
    var = jnp.mean((x - mu) ** 2, axis=-1, keepdims=True)
    return (x - mu) * jax.lax.rsqrt(var + LN_EPS) * gamma + beta


# --------------------------------- kernel ------------------------------------

def encoder_kernel(x_in_ref, pe_ref,
                   wqkv_ref, bqkv_ref, wo_ref, bo_ref,
                   fc1w_ref, fc1b_ref, fc2w_ref, fc2b_ref,
                   ln0g_ref, ln0b_ref, ln1g_ref, ln1b_ref,
                   fng_ref, fnb_ref,
                   out_ref, emb_ref, inter_ref, attn_ref,
                   x_scr,
                   *, num_heads, embed_scale, compute_dtype):
    """One grid step = one TransformerEncoderLayer applied to a whole batch block.
    grid = (batch_blocks, num_layers); activation is carried in x_scr across the layer axis."""
    l = pl.program_id(1)
    n_layers = pl.num_programs(1)

    Bblk, S, E = x_scr.shape
    H = num_heads
    hd = E // H
    scaling = float(hd) ** -0.5
    cd = compute_dtype

    # ---- fused embedding (scale * x + sinusoidal pos-emb), first layer step only ----
    @pl.when(l == 0)
    def _():
        xe = embed_scale * x_in_ref[...].astype(jnp.float32) + pe_ref[...]
        x_scr[...] = xe
        emb_ref[...] = xe.astype(emb_ref.dtype)        # intermediates[0] (post-embed input)

    def mm(a, b):  # MXU matmul with f32 accumulation
        return jnp.dot(a.astype(cd), b.astype(cd), preferred_element_type=jnp.float32)

    x = x_scr[...]                                      # (Bblk, S, E) running activation (f32)
    x2 = x.reshape(Bblk * S, E)                         # batch folded into the matmul M dim

    # ---- self attention: fused QKV projection, one (Bblk*S,E)@(E,3E) matmul --------------
    qkv = (mm(x2, wqkv_ref[0]) + bqkv_ref[0]).reshape(Bblk, S, 3 * E)

    attn_sum = jnp.zeros((Bblk, S, S), jnp.float32)
    ctx_heads = []
    for h in range(H):   # static head loop: heads are lane slices -> no XLU relayouts
        q_h = qkv[:, :, h * hd:(h + 1) * hd] * scaling
        k_h = qkv[:, :, E + h * hd:E + (h + 1) * hd]
        v_h = qkv[:, :, 2 * E + h * hd:2 * E + (h + 1) * hd]
        s_h = jnp.einsum("bqd,bkd->bqk", q_h.astype(cd), k_h.astype(cd),
                         preferred_element_type=jnp.float32)        # (Bblk, S, S)
        s_h = s_h - jnp.max(s_h, axis=-1, keepdims=True)
        p_h = jnp.exp(s_h)
        p_h = p_h / jnp.sum(p_h, axis=-1, keepdims=True)            # exact softmax
        attn_sum = attn_sum + p_h
        ctx_heads.append(jnp.einsum("bqk,bkd->bqd", p_h.astype(cd), v_h.astype(cd),
                                    preferred_element_type=jnp.float32))

    # fairseq MultiheadAttention returns head-averaged weights: (batch, tgt_len, src_len)
    attn_ref[0] = (attn_sum * (1.0 / H)).astype(attn_ref.dtype)

    ctx = jnp.concatenate(ctx_heads, axis=-1).reshape(Bblk * S, E)
    attn_out = mm(ctx, wo_ref[0]) + bo_ref[0]

    # residual + LayerNorm 0 (normalize_before = False -> post-norm)
    x1 = _layer_norm(x2 + attn_out, ln0g_ref[0], ln0b_ref[0])

    # ---- feed forward ----------------------------------------------------------------
    h1 = jnp.maximum(mm(x1, fc1w_ref[0]) + fc1b_ref[0], 0.0)         # ReLU
    h2 = mm(h1, fc2w_ref[0]) + fc2b_ref[0]

    # residual + LayerNorm 1
    xo = _layer_norm(x1 + h2, ln1g_ref[0], ln1b_ref[0])              # (Bblk*S, E)
    xo3 = xo.reshape(Bblk, S, E)

    x_scr[...] = xo3                                                  # carry to next layer step
    inter_ref[0] = xo3.astype(inter_ref.dtype)                        # intermediates[l+1]

    # ---- fused final encoder LayerNorm, last layer step only --------------------------
    @pl.when(l == n_layers - 1)
    def _():
        out_ref[...] = _layer_norm(xo, fng_ref[...], fnb_ref[...]
                                   ).reshape(Bblk, S, E).astype(out_ref.dtype)


# ------------------------------ parameter setup -------------------------------

def xavier_uniform(key, shape):
    fan_out, fan_in = shape  # torch Linear weight is (out_features, in_features)
    bound = math.sqrt(6.0 / (fan_in + fan_out))
    return jax.random.uniform(key, shape, jnp.float32, -bound, bound)


def init_params(key, embed_dim, num_heads, num_layers):
    """Per-layer weights are pre-transposed to (in, out) layout and stacked along a leading
    L axis so a single pallas_call can index layer l's weight slab with a BlockSpec."""
    E = embed_dim
    names = ("wqkv", "bqkv", "wo", "bo", "fc1w", "fc1b", "fc2w", "fc2b",
             "ln0g", "ln0b", "ln1g", "ln1b")
    cols = {n: [] for n in names}
    for _ in range(num_layers):
        key, k1, k2, k3, k4 = jax.random.split(key, 5)
        cols["wqkv"].append(xavier_uniform(k1, (3 * E, E)).T)        # (E, 3E)
        cols["bqkv"].append(jnp.zeros((1, 3 * E), jnp.float32))
        cols["wo"].append(xavier_uniform(k2, (E, E)).T)              # (E, E)
        cols["bo"].append(jnp.zeros((1, E), jnp.float32))
        cols["fc1w"].append(xavier_uniform(k3, (4 * E, E)).T)        # (E, 4E)
        cols["fc1b"].append(jnp.zeros((1, 4 * E), jnp.float32))
        cols["fc2w"].append(xavier_uniform(k4, (E, 4 * E)).T)        # (4E, E)
        cols["fc2b"].append(jnp.zeros((1, E), jnp.float32))
        cols["ln0g"].append(jnp.ones((1, E), jnp.float32))
        cols["ln0b"].append(jnp.zeros((1, E), jnp.float32))
        cols["ln1g"].append(jnp.ones((1, E), jnp.float32))
        cols["ln1b"].append(jnp.zeros((1, E), jnp.float32))
    params = {n: jnp.stack(v) for n, v in cols.items()}
    params["fng"] = jnp.ones((1, E), jnp.float32)     # final encoder LayerNorm
    params["fnb"] = jnp.zeros((1, E), jnp.float32)
    return params


def sinusoidal_positional_embedding(seq_len, embed_dim):
    """fairseq SinusoidalPositionalEmbedding: positions start at padding_idx+1 = 1,
    table row p = [sin(p*freq) | cos(p*freq)] (sin block then cos block)."""
    half = embed_dim // 2
    denom = max(half - 1, 1)
    freq = jnp.exp(jnp.arange(half, dtype=jnp.float32) * -(math.log(10000.0) / denom))
    pos = jnp.arange(1, seq_len + 1, dtype=jnp.float32)[:, None]
    ang = pos * freq[None, :]
    pe = jnp.concatenate([jnp.sin(ang), jnp.cos(ang)], axis=1)
    if embed_dim % 2 == 1:
        pe = jnp.concatenate([pe, jnp.zeros((seq_len, 1), jnp.float32)], axis=1)
    return pe  # (seq_len, embed_dim)


# ----------------------------- full encoder forward ----------------------------

def transformer_encoder(x_in_sbe, params, *, num_heads, compute_dtype=jnp.float32,
                        batch_block=None):
    """x_in_sbe: (src_len, batch, embed_dim) -> (encoder_out, intermediates, attn_intermediates).

    compute_dtype=jnp.bfloat16 gives MXU-peak matmul operands on v5e/v6e/v7x (f32 accumulation,
    f32 softmax/LayerNorm kept).  batch_block < batch keeps >=2 grid steps on the parallel axis
    (v7x megacore); on v5e/v6e one block covering the whole batch is optimal."""
    S, B, E = x_in_sbe.shape
    L = params["wqkv"].shape[0]
    assert E % num_heads == 0, "embed_dim must be divisible by num_heads"
    Bblk = batch_block if batch_block is not None else B
    assert B % Bblk == 0
    embed_scale = math.sqrt(E)

    # single entry transpose into the kernel layout (B, S, E)
    x_bse = jnp.transpose(x_in_sbe, (1, 0, 2)).astype(jnp.float32)
    pe = sinusoidal_positional_embedding(S, E)

    grid = (B // Bblk, L)   # layer axis innermost (sequential carry), batch axis parallel

    def layer_spec(arr):    # stacked (L, ...) weights: select layer l's slab
        nd = arr.ndim
        return pl.BlockSpec((1,) + arr.shape[1:],
                            lambda b, l, _nd=nd: (l,) + (0,) * (_nd - 1))

    def const_spec(arr):    # whole array, same block every step
        nd = arr.ndim
        return pl.BlockSpec(arr.shape, lambda b, l, _nd=nd: (0,) * _nd)

    act_spec = pl.BlockSpec((Bblk, S, E), lambda b, l: (b, 0, 0))
    inter_spec = pl.BlockSpec((1, Bblk, S, E), lambda b, l: (l, b, 0, 0))
    attn_spec = pl.BlockSpec((1, Bblk, S, S), lambda b, l: (l, b, 0, 0))

    weight_names = ("wqkv", "bqkv", "wo", "bo", "fc1w", "fc1b", "fc2w", "fc2b",
                    "ln0g", "ln0b", "ln1g", "ln1b")
    inputs = [x_bse, pe] + [params[n] for n in weight_names] + [params["fng"], params["fnb"]]
    in_specs = ([act_spec, const_spec(pe)]
                + [layer_spec(params[n]) for n in weight_names]
                + [const_spec(params["fng"]), const_spec(params["fnb"])])

    out_shapes = (jax.ShapeDtypeStruct((B, S, E), jnp.float32),      # encoder_out (B,S,E layout)
                  jax.ShapeDtypeStruct((B, S, E), jnp.float32),      # post-embed input
                  jax.ShapeDtypeStruct((L, B, S, E), jnp.float32),   # per-layer outputs
                  jax.ShapeDtypeStruct((L, B, S, S), jnp.float32))   # per-layer attn weights
    out_specs = (act_spec, act_spec, inter_spec, attn_spec)

    enc, emb, inter, attn = pl.pallas_call(
        functools.partial(encoder_kernel, num_heads=num_heads,
                          embed_scale=embed_scale, compute_dtype=compute_dtype),
        out_shape=out_shapes,
        grid=grid,
        in_specs=in_specs,
        out_specs=out_specs,
        scratch_shapes=[pltpu.VMEM((Bblk, S, E), jnp.float32)],      # activation carry
        compiler_params=pltpu.CompilerParams(
            dimension_semantics=("parallel", "arbitrary")),
    )(*inputs)

    # exit transposes back to the module's (src_len, batch, embed_dim) layout (done once)
    encoder_out = jnp.transpose(enc, (1, 0, 2))
    inter_sbe = jnp.transpose(inter, (0, 2, 1, 3))                   # (L, S, B, E)
    intermediates = [jnp.transpose(emb, (1, 0, 2))] + [inter_sbe[i] for i in range(L)]
    attn_intermediates = [attn[i] for i in range(L)]                 # (batch, tgt_len, src_len)
    return encoder_out, intermediates, attn_intermediates


# ------------------------------------ main -------------------------------------

if __name__ == "__main__":
    SEQ, BATCH, EMBED, HEADS, LAYERS = 8, 2, 32, 4, 2

    key = jax.random.PRNGKey(0)
    k_in, k_par = jax.random.split(key)
    x_in = jax.random.normal(k_in, (SEQ, BATCH, EMBED), jnp.float32)  # (src_len, batch, embed)
    params = init_params(k_par, EMBED, HEADS, LAYERS)

    fwd = jax.jit(functools.partial(transformer_encoder, num_heads=HEADS))
    out, intermediates, attn_intermediates = fwd(x_in, params)
    jax.block_until_ready(out)

    assert out.shape == (SEQ, BATCH, EMBED)
    assert len(intermediates) == LAYERS + 1
    assert all(t.shape == (SEQ, BATCH, EMBED) for t in intermediates)
    assert len(attn_intermediates) == LAYERS
    assert attn_intermediates[0].shape == (BATCH, SEQ, SEQ)
    assert bool(jnp.all(jnp.isfinite(out)))
    # attention rows must sum to 1 (exact softmax, per perf-review correctness note)
    assert bool(jnp.allclose(jnp.sum(attn_intermediates[0], axis=-1), 1.0, atol=1e-5))
    print("KERNEL_OK")
</pallas_src>

<mosaic_0001>
module attributes {stable_mosaic.version = 11 : i64} {
  func.func @encoder_kernel(%arg0: i32, %arg1: i32, %arg2: memref<2x8x32xf32, #tpu.memory_space<vmem>>, %arg3: memref<8x32xf32, #tpu.memory_space<vmem>>, %arg4: memref<1x32x96xf32, #tpu.memory_space<vmem>>, %arg5: memref<1x1x96xf32, #tpu.memory_space<vmem>>, %arg6: memref<1x32x32xf32, #tpu.memory_space<vmem>>, %arg7: memref<1x1x32xf32, #tpu.memory_space<vmem>>, %arg8: memref<1x32x128xf32, #tpu.memory_space<vmem>>, %arg9: memref<1x1x128xf32, #tpu.memory_space<vmem>>, %arg10: memref<1x128x32xf32, #tpu.memory_space<vmem>>, %arg11: memref<1x1x32xf32, #tpu.memory_space<vmem>>, %arg12: memref<1x1x32xf32, #tpu.memory_space<vmem>>, %arg13: memref<1x1x32xf32, #tpu.memory_space<vmem>>, %arg14: memref<1x1x32xf32, #tpu.memory_space<vmem>>, %arg15: memref<1x1x32xf32, #tpu.memory_space<vmem>>, %arg16: memref<1x32xf32, #tpu.memory_space<vmem>>, %arg17: memref<1x32xf32, #tpu.memory_space<vmem>>, %arg18: memref<2x8x32xf32, #tpu.memory_space<vmem>>, %arg19: memref<2x8x32xf32, #tpu.memory_space<vmem>>, %arg20: memref<1x2x8x32xf32, #tpu.memory_space<vmem>>, %arg21: memref<1x2x8x8xf32, #tpu.memory_space<vmem>>, %arg22: memref<2x8x32xf32, #tpu.memory_space<vmem>>) attributes {dimension_semantics = [#tpu.dimension_semantics<parallel>, #tpu.dimension_semantics<arbitrary>], iteration_bounds = array<i64: 1, 2>, scalar_prefetch = 0 : i64, scratch_operands = 1 : i64, tpu.core_type = #tpu.core_type<tc>, window_params = [{transform_indices = @transform_0, window_bounds = array<i64: 2, 8, 32>}, {pipeline_mode = #tpu.pipeline_mode<synchronous>, transform_indices = @transform_1, window_bounds = array<i64: 8, 32>}, {transform_indices = @transform_2, window_bounds = array<i64: 1, 32, 96>}, {transform_indices = @transform_3, window_bounds = array<i64: 1, 1, 96>}, {transform_indices = @transform_4, window_bounds = array<i64: 1, 32, 32>}, {transform_indices = @transform_5, window_bounds = array<i64: 1, 1, 32>}, {transform_indices = @transform_6, window_bounds = array<i64: 1, 32, 128>}, {transform_indices = @transform_7, window_bounds = array<i64: 1, 1, 128>}, {transform_indices = @transform_8, window_bounds = array<i64: 1, 128, 32>}, {transform_indices = @transform_9, window_bounds = array<i64: 1, 1, 32>}, {transform_indices = @transform_10, window_bounds = array<i64: 1, 1, 32>}, {transform_indices = @transform_11, window_bounds = array<i64: 1, 1, 32>}, {transform_indices = @transform_12, window_bounds = array<i64: 1, 1, 32>}, {transform_indices = @transform_13, window_bounds = array<i64: 1, 1, 32>}, {pipeline_mode = #tpu.pipeline_mode<synchronous>, transform_indices = @transform_14, window_bounds = array<i64: 1, 32>}, {pipeline_mode = #tpu.pipeline_mode<synchronous>, transform_indices = @transform_15, window_bounds = array<i64: 1, 32>}, {transform_indices = @transform_16, window_bounds = array<i64: 2, 8, 32>}, {transform_indices = @transform_17, window_bounds = array<i64: 2, 8, 32>}, {transform_indices = @transform_18, window_bounds = array<i64: 1, 2, 8, 32>}, {transform_indices = @transform_19, window_bounds = array<i64: 1, 2, 8, 8>}]} {
    %c0_i32 = arith.constant 0 : i32
    %0 = arith.cmpi eq, %arg1, %c0_i32 : i32
    %1 = arith.extui %0 : i1 to i32
    %c0_i32_0 = arith.constant 0 : i32
    %2 = arith.cmpi ne, %1, %c0_i32_0 : i32
    scf.if %2 {
      %c0_87 = arith.constant 0 : index
      %c0_88 = arith.constant 0 : index
      %c0_89 = arith.constant 0 : index
      %174 = vector.load %arg2[%c0_87, %c0_88, %c0_89] : memref<2x8x32xf32, #tpu.memory_space<vmem>>, vector<2x8x32xf32>
      %cst_90 = arith.constant 5.65685415 : f32
      %175 = vector.broadcast %cst_90 : f32 to vector<2x8x32xf32>
      %176 = arith.mulf %175, %174 : vector<2x8x32xf32>
      %c0_91 = arith.constant 0 : index
      %c0_92 = arith.constant 0 : index
      %177 = vector.load %arg3[%c0_91, %c0_92] : memref<8x32xf32, #tpu.memory_space<vmem>>, vector<8x32xf32>
      %178 = vector.shape_cast %177 : vector<8x32xf32> to vector<1x8x32xf32>
      %179 = vector.broadcast %178 : vector<1x8x32xf32> to vector<2x8x32xf32>
      %180 = arith.addf %176, %179 : vector<2x8x32xf32>
      %c0_93 = arith.constant 0 : index
      %c0_94 = arith.constant 0 : index
      %c0_95 = arith.constant 0 : index
      %181 = vector.load %arg22[%c0_93, %c0_94, %c0_95] : memref<2x8x32xf32, #tpu.memory_space<vmem>>, vector<2x8x32xf32>
      tpu.vector_store %arg22[%c0_93, %c0_94, %c0_95], %180 {strides = array<i32>} : memref<2x8x32xf32, #tpu.memory_space<vmem>>, vector<2x8x32xf32>,
      %c0_96 = arith.constant 0 : index
      %c0_97 = arith.constant 0 : index
      %c0_98 = arith.constant 0 : index
      %182 = vector.load %arg19[%c0_96, %c0_97, %c0_98] : memref<2x8x32xf32, #tpu.memory_space<vmem>>, vector<2x8x32xf32>
      tpu.vector_store %arg19[%c0_96, %c0_97, %c0_98], %180 {strides = array<i32>} : memref<2x8x32xf32, #tpu.memory_space<vmem>>, vector<2x8x32xf32>,
    } else {
    }
    %c0 = arith.constant 0 : index
    %c0_1 = arith.constant 0 : index
    %c0_2 = arith.constant 0 : index
    %3 = vector.load %arg22[%c0, %c0_1, %c0_2] : memref<2x8x32xf32, #tpu.memory_space<vmem>>, vector<2x8x32xf32>
    %4 = vector.shape_cast %3 : vector<2x8x32xf32> to vector<16x32xf32>
    %c0_3 = arith.constant 0 : index
    %c0_4 = arith.constant 0 : index
    %c0_5 = arith.constant 0 : index
    %5 = vector.load %arg4[%c0_3, %c0_4, %c0_5] : memref<1x32x96xf32, #tpu.memory_space<vmem>>, vector<1x32x96xf32>
    %6 = vector.shape_cast %5 : vector<1x32x96xf32> to vector<32x96xf32>
    %cst = arith.constant dense<0.000000e+00> : vector<16x96xf32>
    %7 = tpu.matmul %4, %6, %cst {dimension_numbers = #tpu.dot_dimension_numbers<[1], [0], [0], [1], [0, 0, 1, 1], [], []>} : vector<16x32xf32>, vector<32x96xf32>, vector<16x96xf32> -> vector<16x96xf32>
    %c0_6 = arith.constant 0 : index
    %c0_7 = arith.constant 0 : index
    %c0_8 = arith.constant 0 : index
    %8 = vector.load %arg5[%c0_6, %c0_7, %c0_8] : memref<1x1x96xf32, #tpu.memory_space<vmem>>, vector<1x1x96xf32>
    %9 = vector.shape_cast %8 : vector<1x1x96xf32> to vector<1x96xf32>
    %10 = vector.broadcast %9 : vector<1x96xf32> to vector<16x96xf32>
    %11 = arith.addf %7, %10 : vector<16x96xf32>
    %12 = vector.shape_cast %11 : vector<16x96xf32> to vector<2x8x96xf32>
    %cst_9 = arith.constant 0.000000e+00 : f32
    %13 = vector.broadcast %cst_9 : f32 to vector<2x8x8xf32>
    %14 = vector.extract_strided_slice %12 {offsets = [0, 0, 0], sizes = [2, 8, 8], strides = [1, 1, 1]} : vector<2x8x96xf32> to vector<2x8x8xf32>
    %cst_10 = arith.constant 0.353553385 : f32
    %15 = vector.broadcast %cst_10 : f32 to vector<2x8x8xf32>
    %16 = arith.mulf %14, %15 : vector<2x8x8xf32>
    %17 = vector.extract_strided_slice %12 {offsets = [0, 0, 32], sizes = [2, 8, 8], strides = [1, 1, 1]} : vector<2x8x96xf32> to vector<2x8x8xf32>
    %18 = vector.extract_strided_slice %12 {offsets = [0, 0, 64], sizes = [2, 8, 8], strides = [1, 1, 1]} : vector<2x8x96xf32> to vector<2x8x8xf32>
    "tpu.trace_start"() <{level = 10 : i32, message = "bqd,bkd->bqk"}> : () -> ()
    %cst_11 = arith.constant dense<0.000000e+00> : vector<2x8x8xf32>
    %19 = tpu.matmul %16, %17, %cst_11 {dimension_numbers = #tpu.dot_dimension_numbers<[2], [2], [1], [1], [0, 0, 0, 1, 1, 1], [0], [0]>} : vector<2x8x8xf32>, vector<2x8x8xf32>, vector<2x8x8xf32> -> vector<2x8x8xf32>
    "tpu.trace_stop"() : () -> ()
    %cst_12 = arith.constant dense<0xFF800000> : vector<2x8xf32>
    %20 = vector.multi_reduction <maximumf>, %19, %cst_12 [2] : vector<2x8x8xf32> to vector<2x8xf32>
    %21 = vector.shape_cast %20 : vector<2x8xf32> to vector<2x8x1xf32>
    %22 = vector.broadcast %21 : vector<2x8x1xf32> to vector<2x8x8xf32>
    %23 = arith.subf %19, %22 : vector<2x8x8xf32>
    %24 = math.exp %23 : vector<2x8x8xf32>
    %cst_13 = arith.constant dense<0.000000e+00> : vector<2x8xf32>
    %25 = vector.multi_reduction <add>, %24, %cst_13 [2] : vector<2x8x8xf32> to vector<2x8xf32>
    %26 = vector.shape_cast %25 : vector<2x8xf32> to vector<2x8x1xf32>
    %27 = vector.broadcast %26 : vector<2x8x1xf32> to vector<2x8x8xf32>
    %28 = arith.divf %24, %27 : vector<2x8x8xf32>
    %29 = arith.addf %13, %28 : vector<2x8x8xf32>
    "tpu.trace_start"() <{level = 10 : i32, message = "bqk,bkd->bqd"}> : () -> ()
    %cst_14 = arith.constant dense<0.000000e+00> : vector<2x8x8xf32>
    %30 = tpu.matmul %28, %18, %cst_14 {dimension_numbers = #tpu.dot_dimension_numbers<[2], [1], [1], [2], [0, 0, 0, 1, 1, 2], [0], [0]>} : vector<2x8x8xf32>, vector<2x8x8xf32>, vector<2x8x8xf32> -> vector<2x8x8xf32>
    "tpu.trace_stop"() : () -> ()
    %31 = vector.extract_strided_slice %12 {offsets = [0, 0, 8], sizes = [2, 8, 8], strides = [1, 1, 1]} : vector<2x8x96xf32> to vector<2x8x8xf32>
    %cst_15 = arith.constant 0.353553385 : f32
    %32 = vector.broadcast %cst_15 : f32 to vector<2x8x8xf32>
    %33 = arith.mulf %31, %32 : vector<2x8x8xf32>
    %34 = vector.extract_strided_slice %12 {offsets = [0, 0, 40], sizes = [2, 8, 8], strides = [1, 1, 1]} : vector<2x8x96xf32> to vector<2x8x8xf32>
    %35 = vector.extract_strided_slice %12 {offsets = [0, 0, 72], sizes = [2, 8, 8], strides = [1, 1, 1]} : vector<2x8x96xf32> to vector<2x8x8xf32>
    "tpu.trace_start"() <{level = 10 : i32, message = "bqd,bkd->bqk"}> : () -> ()
    %cst_16 = arith.constant dense<0.000000e+00> : vector<2x8x8xf32>
    %36 = tpu.matmul %33, %34, %cst_16 {dimension_numbers = #tpu.dot_dimension_numbers<[2], [2], [1], [1], [0, 0, 0, 1, 1, 1], [0], [0]>} : vector<2x8x8xf32>, vector<2x8x8xf32>, vector<2x8x8xf32> -> vector<2x8x8xf32>
    "tpu.trace_stop"() : () -> ()
    %cst_17 = arith.constant dense<0xFF800000> : vector<2x8xf32>
    %37 = vector.multi_reduction <maximumf>, %36, %cst_17 [2] : vector<2x8x8xf32> to vector<2x8xf32>
    %38 = vector.shape_cast %37 : vector<2x8xf32> to vector<2x8x1xf32>
    %39 = vector.broadcast %38 : vector<2x8x1xf32> to vector<2x8x8xf32>
    %40 = arith.subf %36, %39 : vector<2x8x8xf32>
    %41 = math.exp %40 : vector<2x8x8xf32>
    %cst_18 = arith.constant dense<0.000000e+00> : vector<2x8xf32>
    %42 = vector.multi_reduction <add>, %41, %cst_18 [2] : vector<2x8x8xf32> to vector<2x8xf32>
    %43 = vector.shape_cast %42 : vector<2x8xf32> to vector<2x8x1xf32>
    %44 = vector.broadcast %43 : vector<2x8x1xf32> to vector<2x8x8xf32>
    %45 = arith.divf %41, %44 : vector<2x8x8xf32>
    %46 = arith.addf %29, %45 : vector<2x8x8xf32>
    "tpu.trace_start"() <{level = 10 : i32, message = "bqk,bkd->bqd"}> : () -> ()
    %cst_19 = arith.constant dense<0.000000e+00> : vector<2x8x8xf32>
    %47 = tpu.matmul %45, %35, %cst_19 {dimension_numbers = #tpu.dot_dimension_numbers<[2], [1], [1], [2], [0, 0, 0, 1, 1, 2], [0], [0]>} : vector<2x8x8xf32>, vector<2x8x8xf32>, vector<2x8x8xf32> -> vector<2x8x8xf32>
    "tpu.trace_stop"() : () -> ()
    %48 = vector.extract_strided_slice %12 {offsets = [0, 0, 16], sizes = [2, 8, 8], strides = [1, 1, 1]} : vector<2x8x96xf32> to vector<2x8x8xf32>
    %cst_20 = arith.constant 0.353553385 : f32
    %49 = vector.broadcast %cst_20 : f32 to vector<2x8x8xf32>
    %50 = arith.mulf %48, %49 : vector<2x8x8xf32>
    %51 = vector.extract_strided_slice %12 {offsets = [0, 0, 48], sizes = [2, 8, 8], strides = [1, 1, 1]} : vector<2x8x96xf32> to vector<2x8x8xf32>
    %52 = vector.extract_strided_slice %12 {offsets = [0, 0, 80], sizes = [2, 8, 8], strides = [1, 1, 1]} : vector<2x8x96xf32> to vector<2x8x8xf32>
    "tpu.trace_start"() <{level = 10 : i32, message = "bqd,bkd->bqk"}> : () -> ()
    %cst_21 = arith.constant dense<0.000000e+00> : vector<2x8x8xf32>
    %53 = tpu.matmul %50, %51, %cst_21 {dimension_numbers = #tpu.dot_dimension_numbers<[2], [2], [1], [1], [0, 0, 0, 1, 1, 1], [0], [0]>} : vector<2x8x8xf32>, vector<2x8x8xf32>, vector<2x8x8xf32> -> vector<2x8x8xf32>
    "tpu.trace_stop"() : () -> ()
    %cst_22 = arith.constant dense<0xFF800000> : vector<2x8xf32>
    %54 = vector.multi_reduction <maximumf>, %53, %cst_22 [2] : vector<2x8x8xf32> to vector<2x8xf32>
    %55 = vector.shape_cast %54 : vector<2x8xf32> to vector<2x8x1xf32>
    %56 = vector.broadcast %55 : vector<2x8x1xf32> to vector<2x8x8xf32>
    %57 = arith.subf %53, %56 : vector<2x8x8xf32>
    %58 = math.exp %57 : vector<2x8x8xf32>
    %cst_23 = arith.constant dense<0.000000e+00> : vector<2x8xf32>
    %59 = vector.multi_reduction <add>, %58, %cst_23 [2] : vector<2x8x8xf32> to vector<2x8xf32>
    %60 = vector.shape_cast %59 : vector<2x8xf32> to vector<2x8x1xf32>
    %61 = vector.broadcast %60 : vector<2x8x1xf32> to vector<2x8x8xf32>
    %62 = arith.divf %58, %61 : vector<2x8x8xf32>
    %63 = arith.addf %46, %62 : vector<2x8x8xf32>
    "tpu.trace_start"() <{level = 10 : i32, message = "bqk,bkd->bqd"}> : () -> ()
    %cst_24 = arith.constant dense<0.000000e+00> : vector<2x8x8xf32>
    %64 = tpu.matmul %62, %52, %cst_24 {dimension_numbers = #tpu.dot_dimension_numbers<[2], [1], [1], [2], [0, 0, 0, 1, 1, 2], [0], [0]>} : vector<2x8x8xf32>, vector<2x8x8xf32>, vector<2x8x8xf32> -> vector<2x8x8xf32>
    "tpu.trace_stop"() : () -> ()
    %65 = vector.extract_strided_slice %12 {offsets = [0, 0, 24], sizes = [2, 8, 8], strides = [1, 1, 1]} : vector<2x8x96xf32> to vector<2x8x8xf32>
    %cst_25 = arith.constant 0.353553385 : f32
    %66 = vector.broadcast %cst_25 : f32 to vector<2x8x8xf32>
    %67 = arith.mulf %65, %66 : vector<2x8x8xf32>
    %68 = vector.extract_strided_slice %12 {offsets = [0, 0, 56], sizes = [2, 8, 8], strides = [1, 1, 1]} : vector<2x8x96xf32> to vector<2x8x8xf32>
    %69 = vector.extract_strided_slice %12 {offsets = [0, 0, 88], sizes = [2, 8, 8], strides = [1, 1, 1]} : vector<2x8x96xf32> to vector<2x8x8xf32>
    "tpu.trace_start"() <{level = 10 : i32, message = "bqd,bkd->bqk"}> : () -> ()
    %cst_26 = arith.constant dense<0.000000e+00> : vector<2x8x8xf32>
    %70 = tpu.matmul %67, %68, %cst_26 {dimension_numbers = #tpu.dot_dimension_numbers<[2], [2], [1], [1], [0, 0, 0, 1, 1, 1], [0], [0]>} : vector<2x8x8xf32>, vector<2x8x8xf32>, vector<2x8x8xf32> -> vector<2x8x8xf32>
    "tpu.trace_stop"() : () -> ()
    %cst_27 = arith.constant dense<0xFF800000> : vector<2x8xf32>
    %71 = vector.multi_reduction <maximumf>, %70, %cst_27 [2] : vector<2x8x8xf32> to vector<2x8xf32>
    %72 = vector.shape_cast %71 : vector<2x8xf32> to vector<2x8x1xf32>
    %73 = vector.broadcast %72 : vector<2x8x1xf32> to vector<2x8x8xf32>
    %74 = arith.subf %70, %73 : vector<2x8x8xf32>
    %75 = math.exp %74 : vector<2x8x8xf32>
    %cst_28 = arith.constant dense<0.000000e+00> : vector<2x8xf32>
    %76 = vector.multi_reduction <add>, %75, %cst_28 [2] : vector<2x8x8xf32> to vector<2x8xf32>
    %77 = vector.shape_cast %76 : vector<2x8xf32> to vector<2x8x1xf32>
    %78 = vector.broadcast %77 : vector<2x8x1xf32> to vector<2x8x8xf32>
    %79 = arith.divf %75, %78 : vector<2x8x8xf32>
    %80 = arith.addf %63, %79 : vector<2x8x8xf32>
    "tpu.trace_start"() <{level = 10 : i32, message = "bqk,bkd->bqd"}> : () -> ()
    %cst_29 = arith.constant dense<0.000000e+00> : vector<2x8x8xf32>
    %81 = tpu.matmul %79, %69, %cst_29 {dimension_numbers = #tpu.dot_dimension_numbers<[2], [1], [1], [2], [0, 0, 0, 1, 1, 2], [0], [0]>} : vector<2x8x8xf32>, vector<2x8x8xf32>, vector<2x8x8xf32> -> vector<2x8x8xf32>
    "tpu.trace_stop"() : () -> ()
    %cst_30 = arith.constant 2.500000e-01 : f32
    %82 = vector.broadcast %cst_30 : f32 to vector<2x8x8xf32>
    %83 = arith.mulf %80, %82 : vector<2x8x8xf32>
    %c0_31 = arith.constant 0 : index
    %c0_32 = arith.constant 0 : index
    %c0_33 = arith.constant 0 : index
    %c0_34 = arith.constant 0 : index
    %84 = vector.load %arg21[%c0_31, %c0_32, %c0_33, %c0_34] : memref<1x2x8x8xf32, #tpu.memory_space<vmem>>, vector<1x2x8x8xf32>
    %85 = vector.shape_cast %84 : vector<1x2x8x8xf32> to vector<2x8x8xf32>
    %86 = vector.shape_cast %83 : vector<2x8x8xf32> to vector<1x2x8x8xf32>
    tpu.vector_store %arg21[%c0_31, %c0_32, %c0_33, %c0_34], %86 {strides = array<i32>} : memref<1x2x8x8xf32, #tpu.memory_space<vmem>>, vector<1x2x8x8xf32>,
    %87 = tpu.concatenate %30, %47, %64, %81 in 2 : vector<2x8x8xf32>, vector<2x8x8xf32>, vector<2x8x8xf32>, vector<2x8x8xf32> -> vector<2x8x32xf32>
    %88 = vector.shape_cast %87 : vector<2x8x32xf32> to vector<16x32xf32>
    %c0_35 = arith.constant 0 : index
    %c0_36 = arith.constant 0 : index
    %c0_37 = arith.constant 0 : index
    %89 = vector.load %arg6[%c0_35, %c0_36, %c0_37] : memref<1x32x32xf32, #tpu.memory_space<vmem>>, vector<1x32x32xf32>
    %90 = vector.shape_cast %89 : vector<1x32x32xf32> to vector<32x32xf32>
    %cst_38 = arith.constant dense<0.000000e+00> : vector<16x32xf32>
    %91 = tpu.matmul %88, %90, %cst_38 {dimension_numbers = #tpu.dot_dimension_numbers<[1], [0], [0], [1], [0, 0, 1, 1], [], []>} : vector<16x32xf32>, vector<32x32xf32>, vector<16x32xf32> -> vector<16x32xf32>
    %c0_39 = arith.constant 0 : index
    %c0_40 = arith.constant 0 : index
    %c0_41 = arith.constant 0 : index
    %92 = vector.load %arg7[%c0_39, %c0_40, %c0_41] : memref<1x1x32xf32, #tpu.memory_space<vmem>>, vector<1x1x32xf32>
    %93 = vector.shape_cast %92 : vector<1x1x32xf32> to vector<1x32xf32>
    %94 = vector.broadcast %93 : vector<1x32xf32> to vector<16x32xf32>
    %95 = arith.addf %91, %94 : vector<16x32xf32>
    %96 = arith.addf %4, %95 : vector<16x32xf32>
    %c0_42 = arith.constant 0 : index
    %c0_43 = arith.constant 0 : index
    %c0_44 = arith.constant 0 : index
    %97 = vector.load %arg12[%c0_42, %c0_43, %c0_44] : memref<1x1x32xf32, #tpu.memory_space<vmem>>, vector<1x1x32xf32>
    %98 = vector.shape_cast %97 : vector<1x1x32xf32> to vector<1x32xf32>
    %c0_45 = arith.constant 0 : index
    %c0_46 = arith.constant 0 : index
    %c0_47 = arith.constant 0 : index
    %99 = vector.load %arg13[%c0_45, %c0_46, %c0_47] : memref<1x1x32xf32, #tpu.memory_space<vmem>>, vector<1x1x32xf32>
    %100 = vector.shape_cast %99 : vector<1x1x32xf32> to vector<1x32xf32>
    %cst_48 = arith.constant dense<0.000000e+00> : vector<16xf32>
    %101 = vector.multi_reduction <add>, %96, %cst_48 [1] : vector<16x32xf32> to vector<16xf32>
    %102 = vector.shape_cast %101 : vector<16xf32> to vector<16x1xf32>
    %cst_49 = arith.constant 3.200000e+01 : f32
    %103 = vector.broadcast %cst_49 : f32 to vector<16x1xf32>
    %104 = arith.divf %102, %103 : vector<16x1xf32>
    %105 = vector.broadcast %104 : vector<16x1xf32> to vector<16x32xf32>
    %106 = arith.subf %96, %105 : vector<16x32xf32>
    %107 = arith.mulf %106, %106 : vector<16x32xf32>
    %cst_50 = arith.constant dense<0.000000e+00> : vector<16xf32>
    %108 = vector.multi_reduction <add>, %107, %cst_50 [1] : vector<16x32xf32> to vector<16xf32>
    %109 = vector.shape_cast %108 : vector<16xf32> to vector<16x1xf32>
    %cst_51 = arith.constant 3.200000e+01 : f32
    %110 = vector.broadcast %cst_51 : f32 to vector<16x1xf32>
    %111 = arith.divf %109, %110 : vector<16x1xf32>
    %112 = vector.broadcast %104 : vector<16x1xf32> to vector<16x32xf32>
    %113 = arith.subf %96, %112 : vector<16x32xf32>
    %cst_52 = arith.constant 9.99999974E-6 : f32
    %114 = vector.broadcast %cst_52 : f32 to vector<16x1xf32>
    %115 = arith.addf %111, %114 : vector<16x1xf32>
    %116 = math.rsqrt %115 : vector<16x1xf32>
    %117 = vector.broadcast %116 : vector<16x1xf32> to vector<16x32xf32>
    %118 = arith.mulf %113, %117 : vector<16x32xf32>
    %119 = vector.broadcast %98 : vector<1x32xf32> to vector<16x32xf32>
    %120 = arith.mulf %118, %119 : vector<16x32xf32>
    %121 = vector.broadcast %100 : vector<1x32xf32> to vector<16x32xf32>
    %122 = arith.addf %120, %121 : vector<16x32xf32>
    %c0_53 = arith.constant 0 : index
    %c0_54 = arith.constant 0 : index
    %c0_55 = arith.constant 0 : index
    %123 = vector.load %arg8[%c0_53, %c0_54, %c0_55] : memref<1x32x128xf32, #tpu.memory_space<vmem>>, vector<1x32x128xf32>
    %124 = vector.shape_cast %123 : vector<1x32x128xf32> to vector<32x128xf32>
    %cst_56 = arith.constant dense<0.000000e+00> : vector<16x128xf32>
    %125 = tpu.matmul %122, %124, %cst_56 {dimension_numbers = #tpu.dot_dimension_numbers<[1], [0], [0], [1], [0, 0, 1, 1], [], []>} : vector<16x32xf32>, vector<32x128xf32>, vector<16x128xf32> -> vector<16x128xf32>
    %c0_57 = arith.constant 0 : index
    %c0_58 = arith.constant 0 : index
    %c0_59 = arith.constant 0 : index
    %126 = vector.load %arg9[%c0_57, %c0_58, %c0_59] : memref<1x1x128xf32, #tpu.memory_space<vmem>>, vector<1x1x128xf32>
    %127 = vector.shape_cast %126 : vector<1x1x128xf32> to vector<1x128xf32>
    %128 = vector.broadcast %127 : vector<1x128xf32> to vector<16x128xf32>
    %129 = arith.addf %125, %128 : vector<16x128xf32>
    %cst_60 = arith.constant 0.000000e+00 : f32
    %130 = vector.broadcast %cst_60 : f32 to vector<16x128xf32>
    %131 = arith.maximumf %129, %130 : vector<16x128xf32>
    %c0_61 = arith.constant 0 : index
    %c0_62 = arith.constant 0 : index
    %c0_63 = arith.constant 0 : index
    %132 = vector.load %arg10[%c0_61, %c0_62, %c0_63] : memref<1x128x32xf32, #tpu.memory_space<vmem>>, vector<1x128x32xf32>
    %133 = vector.shape_cast %132 : vector<1x128x32xf32> to vector<128x32xf32>
    %cst_64 = arith.constant dense<0.000000e+00> : vector<16x32xf32>
    %134 = tpu.matmul %131, %133, %cst_64 {dimension_numbers = #tpu.dot_dimension_numbers<[1], [0], [0], [1], [0, 0, 1, 1], [], []>} : vector<16x128xf32>, vector<128x32xf32>, vector<16x32xf32> -> vector<16x32xf32>
    %c0_65 = arith.constant 0 : index
    %c0_66 = arith.constant 0 : index
    %c0_67 = arith.constant 0 : index
    %135 = vector.load %arg11[%c0_65, %c0_66, %c0_67] : memref<1x1x32xf32, #tpu.memory_space<vmem>>, vector<1x1x32xf32>
    %136 = vector.shape_cast %135 : vector<1x1x32xf32> to vector<1x32xf32>
    %137 = vector.broadcast %136 : vector<1x32xf32> to vector<16x32xf32>
    %138 = arith.addf %134, %137 : vector<16x32xf32>
    %139 = arith.addf %122, %138 : vector<16x32xf32>
    %c0_68 = arith.constant 0 : index
    %c0_69 = arith.constant 0 : index
    %c0_70 = arith.constant 0 : index
    %140 = vector.load %arg14[%c0_68, %c0_69, %c0_70] : memref<1x1x32xf32, #tpu.memory_space<vmem>>, vector<1x1x32xf32>
    %141 = vector.shape_cast %140 : vector<1x1x32xf32> to vector<1x32xf32>
    %c0_71 = arith.constant 0 : index
    %c0_72 = arith.constant 0 : index
    %c0_73 = arith.constant 0 : index
    %142 = vector.load %arg15[%c0_71, %c0_72, %c0_73] : memref<1x1x32xf32, #tpu.memory_space<vmem>>, vector<1x1x32xf32>
    %143 = vector.shape_cast %142 : vector<1x1x32xf32> to vector<1x32xf32>
    %cst_74 = arith.constant dense<0.000000e+00> : vector<16xf32>
    %144 = vector.multi_reduction <add>, %139, %cst_74 [1] : vector<16x32xf32> to vector<16xf32>
    %145 = vector.shape_cast %144 : vector<16xf32> to vector<16x1xf32>
    %cst_75 = arith.constant 3.200000e+01 : f32
    %146 = vector.broadcast %cst_75 : f32 to vector<16x1xf32>
    %147 = arith.divf %145, %146 : vector<16x1xf32>
    %148 = vector.broadcast %147 : vector<16x1xf32> to vector<16x32xf32>
    %149 = arith.subf %139, %148 : vector<16x32xf32>
    %150 = arith.mulf %149, %149 : vector<16x32xf32>
    %cst_76 = arith.constant dense<0.000000e+00> : vector<16xf32>
    %151 = vector.multi_reduction <add>, %150, %cst_76 [1] : vector<16x32xf32> to vector<16xf32>
    %152 = vector.shape_cast %151 : vector<16xf32> to vector<16x1xf32>
    %cst_77 = arith.constant 3.200000e+01 : f32
    %153 = vector.broadcast %cst_77 : f32 to vector<16x1xf32>
    %154 = arith.divf %152, %153 : vector<16x1xf32>
    %155 = vector.broadcast %147 : vector<16x1xf32> to vector<16x32xf32>
    %156 = arith.subf %139, %155 : vector<16x32xf32>
    %cst_78 = arith.constant 9.99999974E-6 : f32
    %157 = vector.broadcast %cst_78 : f32 to vector<16x1xf32>
    %158 = arith.addf %154, %157 : vector<16x1xf32>
    %159 = math.rsqrt %158 : vector<16x1xf32>
    %160 = vector.broadcast %159 : vector<16x1xf32> to vector<16x32xf32>
    %161 = arith.mulf %156, %160 : vector<16x32xf32>
    %162 = vector.broadcast %141 : vector<1x32xf32> to vector<16x32xf32>
    %163 = arith.mulf %161, %162 : vector<16x32xf32>
    %164 = vector.broadcast %143 : vector<1x32xf32> to vector<16x32xf32>
    %165 = arith.addf %163, %164 : vector<16x32xf32>
    %166 = vector.shape_cast %165 : vector<16x32xf32> to vector<2x8x32xf32>
    %c0_79 = arith.constant 0 : index
    %c0_80 = arith.constant 0 : index
    %c0_81 = arith.constant 0 : index
    %167 = vector.load %arg22[%c0_79, %c0_80, %c0_81] : memref<2x8x32xf32, #tpu.memory_space<vmem>>, vector<2x8x32xf32>
    tpu.vector_store %arg22[%c0_79, %c0_80, %c0_81], %166 {strides = array<i32>} : memref<2x8x32xf32, #tpu.memory_space<vmem>>, vector<2x8x32xf32>,
    %c0_82 = arith.constant 0 : index
    %c0_83 = arith.constant 0 : index
    %c0_84 = arith.constant 0 : index
    %c0_85 = arith.constant 0 : index
    %168 = vector.load %arg20[%c0_82, %c0_83, %c0_84, %c0_85] : memref<1x2x8x32xf32, #tpu.memory_space<vmem>>, vector<1x2x8x32xf32>
    %169 = vector.shape_cast %168 : vector<1x2x8x32xf32> to vector<2x8x32xf32>
    %170 = vector.shape_cast %166 : vector<2x8x32xf32> to vector<1x2x8x32xf32>
    tpu.vector_store %arg20[%c0_82, %c0_83, %c0_84, %c0_85], %170 {strides = array<i32>} : memref<1x2x8x32xf32, #tpu.memory_space<vmem>>, vector<1x2x8x32xf32>,
    %c1_i32 = arith.constant 1 : i32
    %171 = arith.cmpi eq, %arg1, %c1_i32 : i32
    %172 = arith.extui %171 : i1 to i32
    %c0_i32_86 = arith.constant 0 : i32
    %173 = arith.cmpi ne, %172, %c0_i32_86 : i32
    scf.if %173 {
      %c0_87 = arith.constant 0 : index
      %c0_88 = arith.constant 0 : index
      %174 = vector.load %arg16[%c0_87, %c0_88] : memref<1x32xf32, #tpu.memory_space<vmem>>, vector<1x32xf32>
      %c0_89 = arith.constant 0 : index
      %c0_90 = arith.constant 0 : index
      %175 = vector.load %arg17[%c0_89, %c0_90] : memref<1x32xf32, #tpu.memory_space<vmem>>, vector<1x32xf32>
      %cst_91 = arith.constant dense<0.000000e+00> : vector<16xf32>
      %176 = vector.multi_reduction <add>, %165, %cst_91 [1] : vector<16x32xf32> to vector<16xf32>
      %177 = vector.shape_cast %176 : vector<16xf32> to vector<16x1xf32>
      %cst_92 = arith.constant 3.200000e+01 : f32
      %178 = vector.broadcast %cst_92 : f32 to vector<16x1xf32>
      %179 = arith.divf %177, %178 : vector<16x1xf32>
      %180 = vector.broadcast %179 : vector<16x1xf32> to vector<16x32xf32>
      %181 = arith.subf %165, %180 : vector<16x32xf32>
      %182 = arith.mulf %181, %181 : vector<16x32xf32>
      %cst_93 = arith.constant dense<0.000000e+00> : vector<16xf32>
      %183 = vector.multi_reduction <add>, %182, %cst_93 [1] : vector<16x32xf32> to vector<16xf32>
      %184 = vector.shape_cast %183 : vector<16xf32> to vector<16x1xf32>
      %cst_94 = arith.constant 3.200000e+01 : f32
      %185 = vector.broadcast %cst_94 : f32 to vector<16x1xf32>
      %186 = arith.divf %184, %185 : vector<16x1xf32>
      %187 = vector.broadcast %179 : vector<16x1xf32> to vector<16x32xf32>
      %188 = arith.subf %165, %187 : vector<16x32xf32>
      %cst_95 = arith.constant 9.99999974E-6 : f32
      %189 = vector.broadcast %cst_95 : f32 to vector<16x1xf32>
      %190 = arith.addf %186, %189 : vector<16x1xf32>
      %191 = math.rsqrt %190 : vector<16x1xf32>
      %192 = vector.broadcast %191 : vector<16x1xf32> to vector<16x32xf32>
      %193 = arith.mulf %188, %192 : vector<16x32xf32>
      %194 = vector.broadcast %174 : vector<1x32xf32> to vector<16x32xf32>
      %195 = arith.mulf %193, %194 : vector<16x32xf32>
      %196 = vector.broadcast %175 : vector<1x32xf32> to vector<16x32xf32>
      %197 = arith.addf %195, %196 : vector<16x32xf32>
      %198 = vector.shape_cast %197 : vector<16x32xf32> to vector<2x8x32xf32>
      %c0_96 = arith.constant 0 : index
      %c0_97 = arith.constant 0 : index
      %c0_98 = arith.constant 0 : index
      %199 = vector.load %arg18[%c0_96, %c0_97, %c0_98] : memref<2x8x32xf32, #tpu.memory_space<vmem>>, vector<2x8x32xf32>
      tpu.vector_store %arg18[%c0_96, %c0_97, %c0_98], %198 {strides = array<i32>} : memref<2x8x32xf32, #tpu.memory_space<vmem>>, vector<2x8x32xf32>,
    } else {
    }
    return
  }
  func.func @transform_0(%arg0: i32, %arg1: i32) -> (i32, i32, i32) {
    %c0_i32 = arith.constant 0 : i32
    %c0_i32_0 = arith.constant 0 : i32
    %c0_i32_1 = arith.constant 0 : i32
    return %arg0, %c0_i32, %c0_i32_0 : i32, i32, i32
  }
  func.func @transform_1(%arg0: i32, %arg1: i32) -> (i32, i32) {
    %c0_i32 = arith.constant 0 : i32
    %c0_i32_0 = arith.constant 0 : i32
    %c0_i32_1 = arith.constant 0 : i32
    return %c0_i32, %c0_i32_0 : i32, i32
  }
  func.func @transform_2(%arg0: i32, %arg1: i32) -> (i32, i32, i32) {
    %c0_i32 = arith.constant 0 : i32
    %c0_i32_0 = arith.constant 0 : i32
    %c0_i32_1 = arith.constant 0 : i32
    return %arg1, %c0_i32, %c0_i32_0 : i32, i32, i32
  }
  func.func @transform_3(%arg0: i32, %arg1: i32) -> (i32, i32, i32) {
    %c0_i32 = arith.constant 0 : i32
    %c0_i32_0 = arith.constant 0 : i32
    %c0_i32_1 = arith.constant 0 : i32
    return %arg1, %c0_i32, %c0_i32_0 : i32, i32, i32
  }
  func.func @transform_4(%arg0: i32, %arg1: i32) -> (i32, i32, i32) {
    %c0_i32 = arith.constant 0 : i32
    %c0_i32_0 = arith.constant 0 : i32
    %c0_i32_1 = arith.constant 0 : i32
    return %arg1, %c0_i32, %c0_i32_0 : i32, i32, i32
  }
  func.func @transform_5(%arg0: i32, %arg1: i32) -> (i32, i32, i32) {
    %c0_i32 = arith.constant 0 : i32
    %c0_i32_0 = arith.constant 0 : i32
    %c0_i32_1 = arith.constant 0 : i32
    return %arg1, %c0_i32, %c0_i32_0 : i32, i32, i32
  }
  func.func @transform_6(%arg0: i32, %arg1: i32) -> (i32, i32, i32) {
    %c0_i32 = arith.constant 0 : i32
    %c0_i32_0 = arith.constant 0 : i32
    %c0_i32_1 = arith.constant 0 : i32
    return %arg1, %c0_i32, %c0_i32_0 : i32, i32, i32
  }
  func.func @transform_7(%arg0: i32, %arg1: i32) -> (i32, i32, i32) {
    %c0_i32 = arith.constant 0 : i32
    %c0_i32_0 = arith.constant 0 : i32
    %c0_i32_1 = arith.constant 0 : i32
    return %arg1, %c0_i32, %c0_i32_0 : i32, i32, i32
  }
  func.func @transform_8(%arg0: i32, %arg1: i32) -> (i32, i32, i32) {
    %c0_i32 = arith.constant 0 : i32
    %c0_i32_0 = arith.constant 0 : i32
    %c0_i32_1 = arith.constant 0 : i32
    return %arg1, %c0_i32, %c0_i32_0 : i32, i32, i32
  }
  func.func @transform_9(%arg0: i32, %arg1: i32) -> (i32, i32, i32) {
    %c0_i32 = arith.constant 0 : i32
    %c0_i32_0 = arith.constant 0 : i32
    %c0_i32_1 = arith.constant 0 : i32
    return %arg1, %c0_i32, %c0_i32_0 : i32, i32, i32
  }
  func.func @transform_10(%arg0: i32, %arg1: i32) -> (i32, i32, i32) {
    %c0_i32 = arith.constant 0 : i32
    %c0_i32_0 = arith.constant 0 : i32
    %c0_i32_1 = arith.constant 0 : i32
    return %arg1, %c0_i32, %c0_i32_0 : i32, i32, i32
  }
  func.func @transform_11(%arg0: i32, %arg1: i32) -> (i32, i32, i32) {
    %c0_i32 = arith.constant 0 : i32
    %c0_i32_0 = arith.constant 0 : i32
    %c0_i32_1 = arith.constant 0 : i32
    return %arg1, %c0_i32, %c0_i32_0 : i32, i32, i32
  }
  func.func @transform_12(%arg0: i32, %arg1: i32) -> (i32, i32, i32) {
    %c0_i32 = arith.constant 0 : i32
    %c0_i32_0 = arith.constant 0 : i32
    %c0_i32_1 = arith.constant 0 : i32
    return %arg1, %c0_i32, %c0_i32_0 : i32, i32, i32
  }
  func.func @transform_13(%arg0: i32, %arg1: i32) -> (i32, i32, i32) {
    %c0_i32 = arith.constant 0 : i32
    %c0_i32_0 = arith.constant 0 : i32
    %c0_i32_1 = arith.constant 0 : i32
    return %arg1, %c0_i32, %c0_i32_0 : i32, i32, i32
  }
  func.func @transform_14(%arg0: i32, %arg1: i32) -> (i32, i32) {
    %c0_i32 = arith.constant 0 : i32
    %c0_i32_0 = arith.constant 0 : i32
    %c0_i32_1 = arith.constant 0 : i32
    return %c0_i32, %c0_i32_0 : i32, i32
  }
  func.func @transform_15(%arg0: i32, %arg1: i32) -> (i32, i32) {
    %c0_i32 = arith.constant 0 : i32
    %c0_i32_0 = arith.constant 0 : i32
    %c0_i32_1 = arith.constant 0 : i32
    return %c0_i32, %c0_i32_0 : i32, i32
  }
  func.func @transform_16(%arg0: i32, %arg1: i32) -> (i32, i32, i32) {
    %c0_i32 = arith.constant 0 : i32
    %c0_i32_0 = arith.constant 0 : i32
    %c0_i32_1 = arith.constant 0 : i32
    return %arg0, %c0_i32, %c0_i32_0 : i32, i32, i32
  }
  func.func @transform_17(%arg0: i32, %arg1: i32) -> (i32, i32, i32) {
    %c0_i32 = arith.constant 0 : i32
    %c0_i32_0 = arith.constant 0 : i32
    %c0_i32_1 = arith.constant 0 : i32
    return %arg0, %c0_i32, %c0_i32_0 : i32, i32, i32
  }
  func.func @transform_18(%arg0: i32, %arg1: i32) -> (i32, i32, i32, i32) {
    %c0_i32 = arith.constant 0 : i32
    %c0_i32_0 = arith.constant 0 : i32
    %c0_i32_1 = arith.constant 0 : i32
    return %arg1, %arg0, %c0_i32, %c0_i32_0 : i32, i32, i32, i32
  }
  func.func @transform_19(%arg0: i32, %arg1: i32) -> (i32, i32, i32, i32) {
    %c0_i32 = arith.constant 0 : i32
    %c0_i32_0 = arith.constant 0 : i32
    %c0_i32_1 = arith.constant 0 : i32
    return %arg1, %arg0, %c0_i32, %c0_i32_0 : i32, i32, i32, i32
  }
}

</mosaic_0001>

<llo_original>
// kernel: transformer_encoder.1
$region0: #{transformer_encoder.1}
  #allocation0 [shape = 'u32[]', space=smem, size = 0x4, offset = 0x4, fixed_abs, tag = 'smem constant byte address 0x4 - core index']
  #allocation1 [shape = 'u32[144,128]{1,0:T(1,128)}', space=vmem, size = 0x12000, scoped, tag = 'internal scratch']
  #allocation2 [shape = 'f32[2,8,32]{2,1,0:T(8,128)}', space=vmem, size = 0x2000, scoped, tag = 'scratch operand']
  %s0 = inlined_call_operand.vmem [shape: f32[2,8,32], index: 0, kind: input, shape index: {}]
  %s1 = inlined_call_operand.vmem [shape: f32[8,32], index: 1, kind: input, shape index: {}]
  %s2 = inlined_call_operand.vmem [shape: f32[2,32,96], index: 2, kind: input, shape index: {}]
  %s3 = inlined_call_operand.vmem [shape: f32[2,1,96], index: 3, kind: input, shape index: {}]
  %s4 = inlined_call_operand.vmem [shape: f32[2,32,32], index: 4, kind: input, shape index: {}]
  %s5 = inlined_call_operand.vmem [shape: f32[2,1,32], index: 5, kind: input, shape index: {}]
  %s6 = inlined_call_operand.vmem [shape: f32[2,32,128], index: 6, kind: input, shape index: {}]
  %s7 = inlined_call_operand.vmem [shape: f32[2,1,128], index: 7, kind: input, shape index: {}]
  %s8 = inlined_call_operand.vmem [shape: f32[2,128,32], index: 8, kind: input, shape index: {}]
  %s9 = inlined_call_operand.vmem [shape: f32[2,1,32], index: 9, kind: input, shape index: {}]
  %s10 = inlined_call_operand.vmem [shape: f32[2,1,32], index: 10, kind: input, shape index: {}]
  %s11 = inlined_call_operand.vmem [shape: f32[2,1,32], index: 11, kind: input, shape index: {}]
  %s12 = inlined_call_operand.vmem [shape: f32[2,1,32], index: 12, kind: input, shape index: {}]
  %s13 = inlined_call_operand.vmem [shape: f32[2,1,32], index: 13, kind: input, shape index: {}]
  %s14 = inlined_call_operand.vmem [shape: f32[1,32], index: 14, kind: input, shape index: {}]
  %s15 = inlined_call_operand.vmem [shape: f32[1,32], index: 15, kind: input, shape index: {}]
  %s16 = inlined_call_operand.vmem [shape: f32[2,8,32], index: 16, kind: output, shape index: {0}]
  %s17 = inlined_call_operand.vmem [shape: f32[2,8,32], index: 17, kind: output, shape index: {1}]
  %s18 = inlined_call_operand.vmem [shape: f32[2,2,8,32], index: 18, kind: output, shape index: {2}]
  %s19 = inlined_call_operand.vmem [shape: f32[2,2,8,8], index: 19, kind: output, shape index: {3}]
  %20 = xla_tuple %s16, %s17, %s18, %s19
  %s21 = sld [smem:[#allocation0]]
  $region129: #{transformer_encoder.1} parent=0
    _
  %s23 = ssub.s32 1, %s21
  %s24 = scalar_select 0, %s23, %s21
  loop: start=0, step=1, limit=4
  $region2: #{transformer_encoder.1} parent=0 // loop_pre_header
    _
  $region3: #{transformer_encoder.1} parent=0 // loop_header
    %s26 = sphi 0, %s30
    %p27 = scmp.ge.s32.totalorder %s26, 4
    %s33 = sphi 0, %s45
    %s34 = sphi 0, %s41
    %s35 = sphi 0, %s33
    %s36 = sphi 0, %s34
    %s37 = sphi 0, %s35
    %s38 = sphi 0, %s36
    %s48 = sphi 0, %s50
    %s51 = sphi 0, %s48
    %s52 = sphi 0, %s51
    %s68 = sphi 0, %s52
    %s72 = sphi 0, %s72
    %s74 = sphi 0, %s72
    %s75 = sphi 0, %s74
    %s89 = sphi 0, %s75
    %s95 = sphi 0, %s97
    %s98 = sphi 0, %s95
    %s99 = sphi 0, %s98
    %s115 = sphi 0, %s99
    %s121 = sphi 0, %s123
    %s124 = sphi 0, %s121
    %s125 = sphi 0, %s124
    %s141 = sphi 0, %s125
    %s147 = sphi 0, %s149
    %s150 = sphi 0, %s147
    %s151 = sphi 0, %s150
    %s167 = sphi 0, %s151
    %s173 = sphi 0, %s175
    %s176 = sphi 0, %s173
    %s177 = sphi 0, %s176
    %s193 = sphi 0, %s177
    %s199 = sphi 0, %s201
    %s202 = sphi 0, %s199
    %s203 = sphi 0, %s202
    %s219 = sphi 0, %s203
    %s225 = sphi 0, %s227
    %s228 = sphi 0, %s225
    %s229 = sphi 0, %s228
    %s245 = sphi 0, %s229
    %s251 = sphi 0, %s253
    %s254 = sphi 0, %s251
    %s255 = sphi 0, %s254
    %s271 = sphi 0, %s255
    %s277 = sphi 0, %s279
    %s280 = sphi 0, %s277
    %s281 = sphi 0, %s280
    %s297 = sphi 0, %s281
    %s303 = sphi 0, %s305
    %s306 = sphi 0, %s303
    %s307 = sphi 0, %s306
    %s323 = sphi 0, %s307
    %s329 = sphi 0, %s331
    %s332 = sphi 0, %s329
    %s333 = sphi 0, %s332
    %s349 = sphi 0, %s333
    %s355 = sphi 0, %s357
    %s358 = sphi 0, %s355
    %s359 = sphi 0, %s358
    %s375 = sphi 0, %s359
    %s381 = sphi 0, %s383
    %s384 = sphi 0, %s381
    %s385 = sphi 0, %s384
    %s401 = sphi 0, %s385
    %s405 = sphi 0, %s405
    %s407 = sphi 0, %s405
    %s408 = sphi 0, %s407
    %s422 = sphi 0, %s408
    %s426 = sphi 0, %s426
    %s428 = sphi 0, %s426
    %s429 = sphi 0, %s428
    %s443 = sphi 0, %s429
    %s449 = sphi 0, %s451
    %s452 = sphi 0, %s449
    %s453 = sphi 0, %s452
    %s469 = sphi 0, %s453
    %s475 = sphi 0, %s477
    %s478 = sphi 0, %s475
    %s479 = sphi 0, %s478
    %s495 = sphi 0, %s479
    %s503 = sphi 0, %s505
    %s506 = sphi 0, %s503
    %s507 = sphi 0, %s506
    %s523 = sphi 0, %s507
    %s531 = sphi 0, %s533
    %s534 = sphi 0, %s531
    %s535 = sphi 0, %s534
    %s551 = sphi 0, %s535
  $region4: #{transformer_encoder.1} parent=0 // loop_header_branch
    %29 = sbr.rel (%p27) target = $region8
  $region5: #{transformer_encoder.1} parent=0 // loop_body
    %s31 = ssub.s32 %s26, 1
    %s32 = ssub.s32 %s26, 2
    %s39 = sadd.s32 1, %s34
    %p40 = scmp.ge.s32.totalorder %s39, 2
    %s41 = scalar_select %p40, 0, %s39
    %s42 = sadd.s32 1, %s33
    %s43 = scalar_select %p40, %s42, %s33
    %p44 = scmp.ge.s32.totalorder %s43, 1
    %s45 = scalar_select %p44, 0, %s43
    %s46 = ssub.s32 %s33, %s45
    %p47 = scmp.eq.s32.totalorder %s46, 0
    %s49 = sadd.s32 %s48, 1
    %s50 = scalar_select %p47, %s48, %s49
    %p53 = pneg %p47
    %p54 = scmp.eq.s32.totalorder %s26, 1
    %p55 = por %p53, %p54
    %p56 = scmp.ne.s32.totalorder %s48, %s51
    %p57 = scmp.eq.s32.totalorder %s26, 0
    %p58 = por %p56, %p57
    %p59 = scmp.ne.s32.totalorder %s48, %s51
    %p60 = scmp.eq.s32.totalorder %s31, 1
    %p61 = por %p59, %p60
    %p62 = scmp.ne.s32.totalorder %s51, %s52
    %p63 = scmp.eq.s32.totalorder %s31, 0
    %p64 = por %p62, %p63
    %p65 = scmp.ne.s32.totalorder %s51, %s52
    %p66 = scmp.eq.s32.totalorder %s32, 1
    %p67 = por %p65, %p66
    %p69 = scmp.ne.s32.totalorder %s52, %s68
    %p70 = scmp.eq.s32.totalorder %s32, 0
    %p71 = por %p69, %p70
    %s73 = sadd.s32 %s72, 1
    %p76 = scmp.eq.s32.totalorder %s26, 1
    %p77 = scmp.ne.s32.totalorder %s72, %s74
    %p78 = scmp.eq.s32.totalorder %s26, 0
    %p79 = por %p77, %p78
    %p80 = scmp.ne.s32.totalorder %s72, %s74
    %p81 = scmp.eq.s32.totalorder %s31, 1
    %p82 = por %p80, %p81
    %p83 = scmp.ne.s32.totalorder %s74, %s75
    %p84 = scmp.eq.s32.totalorder %s31, 0
    %p85 = por %p83, %p84
    %p86 = scmp.ne.s32.totalorder %s74, %s75
    %p87 = scmp.eq.s32.totalorder %s32, 1
    %p88 = por %p86, %p87
    %p90 = scmp.ne.s32.totalorder %s75, %s89
    %p91 = scmp.eq.s32.totalorder %s32, 0
    %p92 = por %p90, %p91
    %s93 = ssub.s32 %s34, %s41
    %p94 = scmp.eq.s32.totalorder %s93, 0
    %s96 = sadd.s32 %s95, 1
    %s97 = scalar_select %p94, %s95, %s96
    %p100 = pneg %p94
    %p101 = scmp.eq.s32.totalorder %s26, 1
    %p102 = por %p100, %p101
    %p103 = scmp.ne.s32.totalorder %s95, %s98
    %p104 = scmp.eq.s32.totalorder %s26, 0
    %p105 = por %p103, %p104
    %p106 = scmp.ne.s32.totalorder %s95, %s98
    %p107 = scmp.eq.s32.totalorder %s31, 1
    %p108 = por %p106, %p107
    %p109 = scmp.ne.s32.totalorder %s98, %s99
    %p110 = scmp.eq.s32.totalorder %s31, 0
    %p111 = por %p109, %p110
    %p112 = scmp.ne.s32.totalorder %s98, %s99
    %p113 = scmp.eq.s32.totalorder %s32, 1
    %p114 = por %p112, %p113
    %p116 = scmp.ne.s32.totalorder %s99, %s115
    %p117 = scmp.eq.s32.totalorder %s32, 0
    %p118 = por %p116, %p117
    %s119 = ssub.s32 %s34, %s41
    %p120 = scmp.eq.s32.totalorder %s119, 0
    %s122 = sadd.s32 %s121, 1
    %s123 = scalar_select %p120, %s121, %s122
    %p126 = pneg %p120
    %p127 = scmp.eq.s32.totalorder %s26, 1
    %p128 = por %p126, %p127
    %p129 = scmp.ne.s32.totalorder %s121, %s124
    %p130 = scmp.eq.s32.totalorder %s26, 0
    %p131 = por %p129, %p130
    %p132 = scmp.ne.s32.totalorder %s121, %s124
    %p133 = scmp.eq.s32.totalorder %s31, 1
    %p134 = por %p132, %p133
    %p135 = scmp.ne.s32.totalorder %s124, %s125
    %p136 = scmp.eq.s32.totalorder %s31, 0
    %p137 = por %p135, %p136
    %p138 = scmp.ne.s32.totalorder %s124, %s125
    %p139 = scmp.eq.s32.totalorder %s32, 1
    %p140 = por %p138, %p139
    %p142 = scmp.ne.s32.totalorder %s125, %s141
    %p143 = scmp.eq.s32.totalorder %s32, 0
    %p144 = por %p142, %p143
    %s145 = ssub.s32 %s34, %s41
    %p146 = scmp.eq.s32.totalorder %s145, 0
    %s148 = sadd.s32 %s147, 1
    %s149 = scalar_select %p146, %s147, %s148
    %p152 = pneg %p146
    %p153 = scmp.eq.s32.totalorder %s26, 1
    %p154 = por %p152, %p153
    %p155 = scmp.ne.s32.totalorder %s147, %s150
    %p156 = scmp.eq.s32.totalorder %s26, 0
    %p157 = por %p155, %p156
    %p158 = scmp.ne.s32.totalorder %s147, %s150
    %p159 = scmp.eq.s32.totalorder %s31, 1
    %p160 = por %p158, %p159
    %p161 = scmp.ne.s32.totalorder %s150, %s151
    %p162 = scmp.eq.s32.totalorder %s31, 0
    %p163 = por %p161, %p162
    %p164 = scmp.ne.s32.totalorder %s150, %s151
    %p165 = scmp.eq.s32.totalorder %s32, 1
    %p166 = por %p164, %p165
    %p168 = scmp.ne.s32.totalorder %s151, %s167
    %p169 = scmp.eq.s32.totalorder %s32, 0
    %p170 = por %p168, %p169
    %s171 = ssub.s32 %s34, %s41
    %p172 = scmp.eq.s32.totalorder %s171, 0
    %s174 = sadd.s32 %s173, 1
    %s175 = scalar_select %p172, %s173, %s174
    %p178 = pneg %p172
    %p179 = scmp.eq.s32.totalorder %s26, 1
    %p180 = por %p178, %p179
    %p181 = scmp.ne.s32.totalorder %s173, %s176
    %p182 = scmp.eq.s32.totalorder %s26, 0
    %p183 = por %p181, %p182
    %p184 = scmp.ne.s32.totalorder %s173, %s176
    %p185 = scmp.eq.s32.totalorder %s31, 1
    %p186 = por %p184, %p185
    %p187 = scmp.ne.s32.totalorder %s176, %s177
    %p188 = scmp.eq.s32.totalorder %s31, 0
    %p189 = por %p187, %p188
    %p190 = scmp.ne.s32.totalorder %s176, %s177
    %p191 = scmp.eq.s32.totalorder %s32, 1
    %p192 = por %p190, %p191
    %p194 = scmp.ne.s32.totalorder %s177, %s193
    %p195 = scmp.eq.s32.totalorder %s32, 0
    %p196 = por %p194, %p195
    %s197 = ssub.s32 %s34, %s41
    %p198 = scmp.eq.s32.totalorder %s197, 0
    %s200 = sadd.s32 %s199, 1
    %s201 = scalar_select %p198, %s199, %s200
    %p204 = pneg %p198
    %p205 = scmp.eq.s32.totalorder %s26, 1
    %p206 = por %p204, %p205
    %p207 = scmp.ne.s32.totalorder %s199, %s202
    %p208 = scmp.eq.s32.totalorder %s26, 0
    %p209 = por %p207, %p208
    %p210 = scmp.ne.s32.totalorder %s199, %s202
    %p211 = scmp.eq.s32.totalorder %s31, 1
    %p212 = por %p210, %p211
    %p213 = scmp.ne.s32.totalorder %s202, %s203
    %p214 = scmp.eq.s32.totalorder %s31, 0
    %p215 = por %p213, %p214
    %p216 = scmp.ne.s32.totalorder %s202, %s203
    %p217 = scmp.eq.s32.totalorder %s32, 1
    %p218 = por %p216, %p217
    %p220 = scmp.ne.s32.totalorder %s203, %s219
    %p221 = scmp.eq.s32.totalorder %s32, 0
    %p222 = por %p220, %p221
    %s223 = ssub.s32 %s34, %s41
    %p224 = scmp.eq.s32.totalorder %s223, 0
    %s226 = sadd.s32 %s225, 1
    %s227 = scalar_select %p224, %s225, %s226
    %p230 = pneg %p224
    %p231 = scmp.eq.s32.totalorder %s26, 1
    %p232 = por %p230, %p231
    %p233 = scmp.ne.s32.totalorder %s225, %s228
    %p234 = scmp.eq.s32.totalorder %s26, 0
    %p235 = por %p233, %p234
    %p236 = scmp.ne.s32.totalorder %s225, %s228
    %p237 = scmp.eq.s32.totalorder %s31, 1
    %p238 = por %p236, %p237
    %p239 = scmp.ne.s32.totalorder %s228, %s229
    %p240 = scmp.eq.s32.totalorder %s31, 0
    %p241 = por %p239, %p240
    %p242 = scmp.ne.s32.totalorder %s228, %s229
    %p243 = scmp.eq.s32.totalorder %s32, 1
    %p244 = por %p242, %p243
    %p246 = scmp.ne.s32.totalorder %s229, %s245
    %p247 = scmp.eq.s32.totalorder %s32, 0
    %p248 = por %p246, %p247
    %s249 = ssub.s32 %s34, %s41
    %p250 = scmp.eq.s32.totalorder %s249, 0
    %s252 = sadd.s32 %s251, 1
    %s253 = scalar_select %p250, %s251, %s252
    %p256 = pneg %p250
    %p257 = scmp.eq.s32.totalorder %s26, 1
    %p258 = por %p256, %p257
    %p259 = scmp.ne.s32.totalorder %s251, %s254
    %p260 = scmp.eq.s32.totalorder %s26, 0
    %p261 = por %p259, %p260
    %p262 = scmp.ne.s32.totalorder %s251, %s254
    %p263 = scmp.eq.s32.totalorder %s31, 1
    %p264 = por %p262, %p263
    %p265 = scmp.ne.s32.totalorder %s254, %s255
    %p266 = scmp.eq.s32.totalorder %s31, 0
    %p267 = por %p265, %p266
    %p268 = scmp.ne.s32.totalorder %s254, %s255
    %p269 = scmp.eq.s32.totalorder %s32, 1
    %p270 = por %p268, %p269
    %p272 = scmp.ne.s32.totalorder %s255, %s271
    %p273 = scmp.eq.s32.totalorder %s32, 0
    %p274 = por %p272, %p273
    %s275 = ssub.s32 %s34, %s41
    %p276 = scmp.eq.s32.totalorder %s275, 0
    %s278 = sadd.s32 %s277, 1
    %s279 = scalar_select %p276, %s277, %s278
    %p282 = pneg %p276
    %p283 = scmp.eq.s32.totalorder %s26, 1
    %p284 = por %p282, %p283
    %p285 = scmp.ne.s32.totalorder %s277, %s280
    %p286 = scmp.eq.s32.totalorder %s26, 0
    %p287 = por %p285, %p286
    %p288 = scmp.ne.s32.totalorder %s277, %s280
    %p289 = scmp.eq.s32.totalorder %s31, 1
    %p290 = por %p288, %p289
    %p291 = scmp.ne.s32.totalorder %s280, %s281
    %p292 = scmp.eq.s32.totalorder %s31, 0
    %p293 = por %p291, %p292
    %p294 = scmp.ne.s32.totalorder %s280, %s281
    %p295 = scmp.eq.s32.totalorder %s32, 1
    %p296 = por %p294, %p295
    %p298 = scmp.ne.s32.totalorder %s281, %s297
    %p299 = scmp.eq.s32.totalorder %s32, 0
    %p300 = por %p298, %p299
    %s301 = ssub.s32 %s34, %s41
    %p302 = scmp.eq.s32.totalorder %s301, 0
    %s304 = sadd.s32 %s303, 1
    %s305 = scalar_select %p302, %s303, %s304
    %p308 = pneg %p302
    %p309 = scmp.eq.s32.totalorder %s26, 1
    %p310 = por %p308, %p309
    %p311 = scmp.ne.s32.totalorder %s303, %s306
    %p312 = scmp.eq.s32.totalorder %s26, 0
    %p313 = por %p311, %p312
    %p314 = scmp.ne.s32.totalorder %s303, %s306
    %p315 = scmp.eq.s32.totalorder %s31, 1
    %p316 = por %p314, %p315
    %p317 = scmp.ne.s32.totalorder %s306, %s307
    %p318 = scmp.eq.s32.totalorder %s31, 0
    %p319 = por %p317, %p318
    %p320 = scmp.ne.s32.totalorder %s306, %s307
    %p321 = scmp.eq.s32.totalorder %s32, 1
    %p322 = por %p320, %p321
    %p324 = scmp.ne.s32.totalorder %s307, %s323
    %p325 = scmp.eq.s32.totalorder %s32, 0
    %p326 = por %p324, %p325
    %s327 = ssub.s32 %s34, %s41
    %p328 = scmp.eq.s32.totalorder %s327, 0
    %s330 = sadd.s32 %s329, 1
    %s331 = scalar_select %p328, %s329, %s330
    %p334 = pneg %p328
    %p335 = scmp.eq.s32.totalorder %s26, 1
    %p336 = por %p334, %p335
    %p337 = scmp.ne.s32.totalorder %s329, %s332
    %p338 = scmp.eq.s32.totalorder %s26, 0
    %p339 = por %p337, %p338
    %p340 = scmp.ne.s32.totalorder %s329, %s332
    %p341 = scmp.eq.s32.totalorder %s31, 1
    %p342 = por %p340, %p341
    %p343 = scmp.ne.s32.totalorder %s332, %s333
    %p344 = scmp.eq.s32.totalorder %s31, 0
    %p345 = por %p343, %p344
    %p346 = scmp.ne.s32.totalorder %s332, %s333
    %p347 = scmp.eq.s32.totalorder %s32, 1
    %p348 = por %p346, %p347
    %p350 = scmp.ne.s32.totalorder %s333, %s349
    %p351 = scmp.eq.s32.totalorder %s32, 0
    %p352 = por %p350, %p351
    %s353 = ssub.s32 %s34, %s41
    %p354 = scmp.eq.s32.totalorder %s353, 0
    %s356 = sadd.s32 %s355, 1
    %s357 = scalar_select %p354, %s355, %s356
    %p360 = pneg %p354
    %p361 = scmp.eq.s32.totalorder %s26, 1
    %p362 = por %p360, %p361
    %p363 = scmp.ne.s32.totalorder %s355, %s358
    %p364 = scmp.eq.s32.totalorder %s26, 0
    %p365 = por %p363, %p364
    %p366 = scmp.ne.s32.totalorder %s355, %s358
    %p367 = scmp.eq.s32.totalorder %s31, 1
    %p368 = por %p366, %p367
    %p369 = scmp.ne.s32.totalorder %s358, %s359
    %p370 = scmp.eq.s32.totalorder %s31, 0
    %p371 = por %p369, %p370
    %p372 = scmp.ne.s32.totalorder %s358, %s359
    %p373 = scmp.eq.s32.totalorder %s32, 1
    %p374 = por %p372, %p373
    %p376 = scmp.ne.s32.totalorder %s359, %s375
    %p377 = scmp.eq.s32.totalorder %s32, 0
    %p378 = por %p376, %p377
    %s379 = ssub.s32 %s34, %s41
    %p380 = scmp.eq.s32.totalorder %s379, 0
    %s382 = sadd.s32 %s381, 1
    %s383 = scalar_select %p380, %s381, %s382
    %p386 = pneg %p380
    %p387 = scmp.eq.s32.totalorder %s26, 1
    %p388 = por %p386, %p387
    %p389 = scmp.ne.s32.totalorder %s381, %s384
    %p390 = scmp.eq.s32.totalorder %s26, 0
    %p391 = por %p389, %p390
    %p392 = scmp.ne.s32.totalorder %s381, %s384
    %p393 = scmp.eq.s32.totalorder %s31, 1
    %p394 = por %p392, %p393
    %p395 = scmp.ne.s32.totalorder %s384, %s385
    %p396 = scmp.eq.s32.totalorder %s31, 0
    %p397 = por %p395, %p396
    %p398 = scmp.ne.s32.totalorder %s384, %s385
    %p399 = scmp.eq.s32.totalorder %s32, 1
    %p400 = por %p398, %p399
    %p402 = scmp.ne.s32.totalorder %s385, %s401
    %p403 = scmp.eq.s32.totalorder %s32, 0
    %p404 = por %p402, %p403
    %s406 = sadd.s32 %s405, 1
    %p409 = scmp.eq.s32.totalorder %s26, 1
    %p410 = scmp.ne.s32.totalorder %s405, %s407
    %p411 = scmp.eq.s32.totalorder %s26, 0
    %p412 = por %p410, %p411
    %p413 = scmp.ne.s32.totalorder %s405, %s407
    %p414 = scmp.eq.s32.totalorder %s31, 1
    %p415 = por %p413, %p414
    %p416 = scmp.ne.s32.totalorder %s407, %s408
    %p417 = scmp.eq.s32.totalorder %s31, 0
    %p418 = por %p416, %p417
    %p419 = scmp.ne.s32.totalorder %s407, %s408
    %p420 = scmp.eq.s32.totalorder %s32, 1
    %p421 = por %p419, %p420
    %p423 = scmp.ne.s32.totalorder %s408, %s422
    %p424 = scmp.eq.s32.totalorder %s32, 0
    %p425 = por %p423, %p424
    %s427 = sadd.s32 %s426, 1
    %p430 = scmp.eq.s32.totalorder %s26, 1
    %p431 = scmp.ne.s32.totalorder %s426, %s428
    %p432 = scmp.eq.s32.totalorder %s26, 0
    %p433 = por %p431, %p432
    %p434 = scmp.ne.s32.totalorder %s426, %s428
    %p435 = scmp.eq.s32.totalorder %s31, 1
    %p436 = por %p434, %p435
    %p437 = scmp.ne.s32.totalorder %s428, %s429
    %p438 = scmp.eq.s32.totalorder %s31, 0
    %p439 = por %p437, %p438
    %p440 = scmp.ne.s32.totalorder %s428, %s429
    %p441 = scmp.eq.s32.totalorder %s32, 1
    %p442 = por %p440, %p441
    %p444 = scmp.ne.s32.totalorder %s429, %s443
    %p445 = scmp.eq.s32.totalorder %s32, 0
    %p446 = por %p444, %p445
    %s447 = ssub.s32 %s33, %s45
    %p448 = scmp.eq.s32.totalorder %s447, 0
    %s450 = sadd.s32 %s449, 1
    %s451 = scalar_select %p448, %s449, %s450
    %p454 = pneg %p448
    %p455 = scmp.eq.s32.totalorder %s26, 1
    %p456 = por %p454, %p455
    %p457 = scmp.ne.s32.totalorder %s449, %s452
    %p458 = scmp.eq.s32.totalorder %s26, 0
    %p459 = por %p457, %p458
    %p460 = scmp.ne.s32.totalorder %s449, %s452
    %p461 = scmp.eq.s32.totalorder %s31, 1
    %p462 = por %p460, %p461
    %p463 = scmp.ne.s32.totalorder %s452, %s453
    %p464 = scmp.eq.s32.totalorder %s31, 0
    %p465 = por %p463, %p464
    %p466 = scmp.ne.s32.totalorder %s452, %s453
    %p467 = scmp.eq.s32.totalorder %s32, 1
    %p468 = por %p466, %p467
    %p470 = scmp.ne.s32.totalorder %s453, %s469
    %p471 = scmp.eq.s32.totalorder %s32, 0
    %p472 = por %p470, %p471
    %s473 = ssub.s32 %s33, %s45
    %p474 = scmp.eq.s32.totalorder %s473, 0
    %s476 = sadd.s32 %s475, 1
    %s477 = scalar_select %p474, %s475, %s476
    %p480 = pneg %p474
    %p481 = scmp.eq.s32.totalorder %s26, 1
    %p482 = por %p480, %p481
    %p483 = scmp.ne.s32.totalorder %s475, %s478
    %p484 = scmp.eq.s32.totalorder %s26, 0
    %p485 = por %p483, %p484
    %p486 = scmp.ne.s32.totalorder %s475, %s478
    %p487 = scmp.eq.s32.totalorder %s31, 1
    %p488 = por %p486, %p487
    %p489 = scmp.ne.s32.totalorder %s478, %s479
    %p490 = scmp.eq.s32.totalorder %s31, 0
    %p491 = por %p489, %p490
    %p492 = scmp.ne.s32.totalorder %s478, %s479
    %p493 = scmp.eq.s32.totalorder %s32, 1
    %p494 = por %p492, %p493
    %p496 = scmp.ne.s32.totalorder %s479, %s495
    %p497 = scmp.eq.s32.totalorder %s32, 0
    %p498 = por %p496, %p497
    %s499 = ssub.s32 %s34, %s41
    %s500 = ssub.s32 %s33, %s45
    %s501 = sor.u32 %s499, %s500
    %p502 = scmp.eq.s32.totalorder %s501, 0
    %s504 = sadd.s32 %s503, 1
    %s505 = scalar_select %p502, %s503, %s504
    %p508 = pneg %p502
    %p509 = scmp.eq.s32.totalorder %s26, 1
    %p510 = por %p508, %p509
    %p511 = scmp.ne.s32.totalorder %s503, %s506
    %p512 = scmp.eq.s32.totalorder %s26, 0
    %p513 = por %p511, %p512
    %p514 = scmp.ne.s32.totalorder %s503, %s506
    %p515 = scmp.eq.s32.totalorder %s31, 1
    %p516 = por %p514, %p515
    %p517 = scmp.ne.s32.totalorder %s506, %s507
    %p518 = scmp.eq.s32.totalorder %s31, 0
    %p519 = por %p517, %p518
    %p520 = scmp.ne.s32.totalorder %s506, %s507
    %p521 = scmp.eq.s32.totalorder %s32, 1
    %p522 = por %p520, %p521
    %p524 = scmp.ne.s32.totalorder %s507, %s523
    %p525 = scmp.eq.s32.totalorder %s32, 0
    %p526 = por %p524, %p525
    %s527 = ssub.s32 %s34, %s41
    %s528 = ssub.s32 %s33, %s45
    %s529 = sor.u32 %s527, %s528
    %p530 = scmp.eq.s32.totalorder %s529, 0
    %s532 = sadd.s32 %s531, 1
    %s533 = scalar_select %p530, %s531, %s532
    %p536 = pneg %p530
    %p537 = scmp.eq.s32.totalorder %s26, 1
    %p538 = por %p536, %p537
    %p539 = scmp.ne.s32.totalorder %s531, %s534
    %p540 = scmp.eq.s32.totalorder %s26, 0
    %p541 = por %p539, %p540
    %p542 = scmp.ne.s32.totalorder %s531, %s534
    %p543 = scmp.eq.s32.totalorder %s31, 1
    %p544 = por %p542, %p543
    %p545 = scmp.ne.s32.totalorder %s534, %s535
    %p546 = scmp.eq.s32.totalorder %s31, 0
    %p547 = por %p545, %p546
    %p548 = scmp.ne.s32.totalorder %s534, %s535
    %p549 = scmp.eq.s32.totalorder %s32, 1
    %p550 = por %p548, %p549
    %p552 = scmp.ne.s32.totalorder %s535, %s551
    %p553 = scmp.eq.s32.totalorder %s32, 0
    %p554 = por %p552, %p553
    %p555 = scmp.le.s32.totalorder 1, %s26
    %p556 = scmp.lt.s32.totalorder %s26, 3
    %p557 = pnand %p555, %p556
    %p558 = pneg %p557
    // Predicated region
    $region9: #{transformer_encoder.1} parent=5 // pred_check
      _
    $region10: #{transformer_encoder.1} parent=5 // pred_check_branch
      %560 = sbr.rel (%p557) target = $region12
    $region11: #{transformer_encoder.1} parent=5 // pred_region
      %s561 = ssub.s32 %s26, 1
      // Predicated region
      $region13: #{transformer_encoder.1} parent=11 // pred_check
        %p562 = pneg %p64
      $region14: #{transformer_encoder.1} parent=11 // pred_check_branch
        %564 = sbr.rel (%p562) target = $region16
      $region15: #{transformer_encoder.1} parent=11 // pred_region
        %s565 = smul.u32 2, %s35
        %p566 = scmp.lt.s32.totalorder %s565, 1
        %s567 = scalar_select %p566, %s565, 1
        %s568 = smul.addr %s567, 8
        %s569 = scalar_lea.vmem %s0, %s568
        %s570 = smul.u32 2, %s35
      $region16: #{transformer_encoder.1} parent=11 // pred_fallthru
        _
      // Predicated region
      $region17: #{transformer_encoder.1} parent=11 // pred_check
        %p571 = pneg %p85
      $region18: #{transformer_encoder.1} parent=11 // pred_check_branch
        %573 = sbr.rel (%p571) target = $region20
      $region19: #{transformer_encoder.1} parent=11 // pred_region
        _
      $region20: #{transformer_encoder.1} parent=11 // pred_fallthru
        _
      // Predicated region
      $region21: #{transformer_encoder.1} parent=11 // pred_check
        %p574 = pneg %p418
      $region22: #{transformer_encoder.1} parent=11 // pred_check_branch
        %576 = sbr.rel (%p574) target = $region24
      $region23: #{transformer_encoder.1} parent=11 // pred_region
        _
      $region24: #{transformer_encoder.1} parent=11 // pred_fallthru
        _
      // Predicated region
      $region25: #{transformer_encoder.1} parent=11 // pred_check
        %p577 = pneg %p439
      $region26: #{transformer_encoder.1} parent=11 // pred_check_branch
        %579 = sbr.rel (%p577) target = $region28
      $region27: #{transformer_encoder.1} parent=11 // pred_region
        _
      $region28: #{transformer_encoder.1} parent=11 // pred_fallthru
        _
    $region12: #{transformer_encoder.1} parent=5 // pred_fallthru
      _
    %p580 = scmp.lt.s32.totalorder %s26, 2
    // Predicated region
    $region29: #{transformer_encoder.1} parent=5 // pred_check
      %p581 = pneg %p580
    $region30: #{transformer_encoder.1} parent=5 // pred_check_branch
      %583 = sbr.rel (%p581) target = $region32
    $region31: #{transformer_encoder.1} parent=5 // pred_region
      // Predicated region
      $region33: #{transformer_encoder.1} parent=31 // pred_check
        %p584 = pneg %p105
      $region34: #{transformer_encoder.1} parent=31 // pred_check_branch
        %586 = sbr.rel (%p584) target = $region36
      $region35: #{transformer_encoder.1} parent=31 // pred_region
        %p587 = scmp.lt.s32.totalorder %s34, 1
        %s588 = scalar_select %p587, %s34, 1
        %s589 = smul.addr %s588, 4
        %s590 = smul.addr %s589, 8
        %s591 = scalar_lea.vmem %s2, %s590
      $region36: #{transformer_encoder.1} parent=31 // pred_fallthru
        _
      // Predicated region
      $region37: #{transformer_encoder.1} parent=31 // pred_check
        %p592 = pneg %p131
      $region38: #{transformer_encoder.1} parent=31 // pred_check_branch
        %594 = sbr.rel (%p592) target = $region40
      $region39: #{transformer_encoder.1} parent=31 // pred_region
        %p595 = scmp.lt.s32.totalorder %s34, 1
        %s596 = scalar_select %p595, %s34, 1
        %s597 = scalar_lea.vmem %s3, %s596
      $region40: #{transformer_encoder.1} parent=31 // pred_fallthru
        _
      // Predicated region
      $region41: #{transformer_encoder.1} parent=31 // pred_check
        %p598 = pneg %p157
      $region42: #{transformer_encoder.1} parent=31 // pred_check_branch
        %600 = sbr.rel (%p598) target = $region44
      $region43: #{transformer_encoder.1} parent=31 // pred_region
        %p601 = scmp.lt.s32.totalorder %s34, 1
        %s602 = scalar_select %p601, %s34, 1
        %s603 = smul.addr %s602, 4
        %s604 = smul.addr %s603, 8
        %s605 = scalar_lea.vmem %s4, %s604
      $region44: #{transformer_encoder.1} parent=31 // pred_fallthru
        _
      // Predicated region
      $region45: #{transformer_encoder.1} parent=31 // pred_check
        %p606 = pneg %p183
      $region46: #{transformer_encoder.1} parent=31 // pred_check_branch
        %608 = sbr.rel (%p606) target = $region48
      $region47: #{transformer_encoder.1} parent=31 // pred_region
        %p609 = scmp.lt.s32.totalorder %s34, 1
        %s610 = scalar_select %p609, %s34, 1
        %s611 = scalar_lea.vmem %s5, %s610
      $region48: #{transformer_encoder.1} parent=31 // pred_fallthru
        _
      // Predicated region
      $region49: #{transformer_encoder.1} parent=31 // pred_check
        %p612 = pneg %p209
      $region50: #{transformer_encoder.1} parent=31 // pred_check_branch
        %614 = sbr.rel (%p612) target = $region52
      $region51: #{transformer_encoder.1} parent=31 // pred_region
        %p615 = scmp.lt.s32.totalorder %s34, 1
        %s616 = scalar_select %p615, %s34, 1
        %s617 = smul.addr %s616, 4
        %s618 = smul.addr %s617, 8
        %s619 = scalar_lea.vmem %s6, %s618
      $region52: #{transformer_encoder.1} parent=31 // pred_fallthru
        _
      // Predicated region
      $region53: #{transformer_encoder.1} parent=31 // pred_check
        %p620 = pneg %p235
      $region54: #{transformer_encoder.1} parent=31 // pred_check_branch
        %622 = sbr.rel (%p620) target = $region56
      $region55: #{transformer_encoder.1} parent=31 // pred_region
        %p623 = scmp.lt.s32.totalorder %s34, 1
        %s624 = scalar_select %p623, %s34, 1
        %s625 = scalar_lea.vmem %s7, %s624
      $region56: #{transformer_encoder.1} parent=31 // pred_fallthru
        _
      // Predicated region
      $region57: #{transformer_encoder.1} parent=31 // pred_check
        %p626 = pneg %p261
      $region58: #{transformer_encoder.1} parent=31 // pred_check_branch
        %628 = sbr.rel (%p626) target = $region60
      $region59: #{transformer_encoder.1} parent=31 // pred_region
        %p629 = scmp.lt.s32.totalorder %s34, 1
        %s630 = scalar_select %p629, %s34, 1
        %s631 = smul.addr %s630, 16
        %s632 = smul.addr %s631, 8
        %s633 = scalar_lea.vmem %s8, %s632
      $region60: #{transformer_encoder.1} parent=31 // pred_fallthru
        _
      // Predicated region
      $region61: #{transformer_encoder.1} parent=31 // pred_check
        %p634 = pneg %p287
      $region62: #{transformer_encoder.1} parent=31 // pred_check_branch
        %636 = sbr.rel (%p634) target = $region64
      $region63: #{transformer_encoder.1} parent=31 // pred_region
        %p637 = scmp.lt.s32.totalorder %s34, 1
        %s638 = scalar_select %p637, %s34, 1
        %s639 = scalar_lea.vmem %s9, %s638
      $region64: #{transformer_encoder.1} parent=31 // pred_fallthru
        _
      // Predicated region
      $region65: #{transformer_encoder.1} parent=31 // pred_check
        %p640 = pneg %p313
      $region66: #{transformer_encoder.1} parent=31 // pred_check_branch
        %642 = sbr.rel (%p640) target = $region68
      $region67: #{transformer_encoder.1} parent=31 // pred_region
        %p643 = scmp.lt.s32.totalorder %s34, 1
        %s644 = scalar_select %p643, %s34, 1
        %s645 = scalar_lea.vmem %s10, %s644
      $region68: #{transformer_encoder.1} parent=31 // pred_fallthru
        _
      // Predicated region
      $region69: #{transformer_encoder.1} parent=31 // pred_check
        %p646 = pneg %p339
      $region70: #{transformer_encoder.1} parent=31 // pred_check_branch
        %648 = sbr.rel (%p646) target = $region72
      $region71: #{transformer_encoder.1} parent=31 // pred_region
        %p649 = scmp.lt.s32.totalorder %s34, 1
        %s650 = scalar_select %p649, %s34, 1
        %s651 = scalar_lea.vmem %s11, %s650
      $region72: #{transformer_encoder.1} parent=31 // pred_fallthru
        _
      // Predicated region
      $region73: #{transformer_encoder.1} parent=31 // pred_check
        %p652 = pneg %p365
      $region74: #{transformer_encoder.1} parent=31 // pred_check_branch
        %654 = sbr.rel (%p652) target = $region76
      $region75: #{transformer_encoder.1} parent=31 // pred_region
        %p655 = scmp.lt.s32.totalorder %s34, 1
        %s656 = scalar_select %p655, %s34, 1
        %s657 = scalar_lea.vmem %s12, %s656
      $region76: #{transformer_encoder.1} parent=31 // pred_fallthru
        _
      // Predicated region
      $region77: #{transformer_encoder.1} parent=31 // pred_check
        %p658 = pneg %p391
      $region78: #{transformer_encoder.1} parent=31 // pred_check_branch
        %660 = sbr.rel (%p658) target = $region80
      $region79: #{transformer_encoder.1} parent=31 // pred_region
        %p661 = scmp.lt.s32.totalorder %s34, 1
        %s662 = scalar_select %p661, %s34, 1
        %s663 = scalar_lea.vmem %s13, %s662
      $region80: #{transformer_encoder.1} parent=31 // pred_fallthru
        _
    $region32: #{transformer_encoder.1} parent=5 // pred_fallthru
      _
    %p664 = scmp.le.s32.totalorder 1, %s26
    %p665 = scmp.lt.s32.totalorder %s26, 3
    %p666 = pnand %p664, %p665
    %p667 = pneg %p666
    // Predicated region
    $region81: #{transformer_encoder.1} parent=5 // pred_check
      _
    $region82: #{transformer_encoder.1} parent=5 // pred_check_branch
      %669 = sbr.rel (%p666) target = $region84
    $region83: #{transformer_encoder.1} parent=5 // pred_region
      %s670 = ssub.s32 %s26, 1
      %s671 = smul.u32 2, %s35
      %p672 = scmp.lt.s32.totalorder %s671, 1
      %s673 = scalar_select %p672, %s671, 1
      %s674 = smul.addr %s673, 8
      %s675 = scalar_lea.vmem %s0, %s674
      %p676 = pneg %p64
      %p677 = pneg %p61
      %p678 = pneg %p85
      %p679 = pneg %p82
      %p680 = scmp.lt.s32.totalorder %s36, 1
      %s681 = scalar_select %p680, %s36, 1
      %s682 = smul.addr %s681, 4
      %s683 = smul.addr %s682, 8
      %s684 = scalar_lea.vmem %s2, %s683
      %p685 = pneg %p111
      %p686 = pneg %p108
      %p687 = scmp.lt.s32.totalorder %s36, 1
      %s688 = scalar_select %p687, %s36, 1
      %s689 = scalar_lea.vmem %s3, %s688
      %p690 = pneg %p137
      %p691 = pneg %p134
      %p692 = scmp.lt.s32.totalorder %s36, 1
      %s693 = scalar_select %p692, %s36, 1
      %s694 = smul.addr %s693, 4
      %s695 = smul.addr %s694, 8
      %s696 = scalar_lea.vmem %s4, %s695
      %p697 = pneg %p163
      %p698 = pneg %p160
      %p699 = scmp.lt.s32.totalorder %s36, 1
      %s700 = scalar_select %p699, %s36, 1
      %s701 = scalar_lea.vmem %s5, %s700
      %p702 = pneg %p189
      %p703 = pneg %p186
      %p704 = scmp.lt.s32.totalorder %s36, 1
      %s705 = scalar_select %p704, %s36, 1
      %s706 = smul.addr %s705, 4
      %s707 = smul.addr %s706, 8
      %s708 = scalar_lea.vmem %s6, %s707
      %p709 = pneg %p215
      %p710 = pneg %p212
      %p711 = scmp.lt.s32.totalorder %s36, 1
      %s712 = scalar_select %p711, %s36, 1
      %s713 = scalar_lea.vmem %s7, %s712
      %p714 = pneg %p241
      %p715 = pneg %p238
      %p716 = scmp.lt.s32.totalorder %s36, 1
      %s717 = scalar_select %p716, %s36, 1
      %s718 = smul.addr %s717, 16
      %s719 = smul.addr %s718, 8
      %s720 = scalar_lea.vmem %s8, %s719
      %p721 = pneg %p267
      %p722 = pneg %p264
      %p723 = scmp.lt.s32.totalorder %s36, 1
      %s724 = scalar_select %p723, %s36, 1
      %s725 = scalar_lea.vmem %s9, %s724
      %p726 = pneg %p293
      %p727 = pneg %p290
      %p728 = scmp.lt.s32.totalorder %s36, 1
      %s729 = scalar_select %p728, %s36, 1
      %s730 = scalar_lea.vmem %s10, %s729
      %p731 = pneg %p319
      %p732 = pneg %p316
      %p733 = scmp.lt.s32.totalorder %s36, 1
      %s734 = scalar_select %p733, %s36, 1
      %s735 = scalar_lea.vmem %s11, %s734
      %p736 = pneg %p345
      %p737 = pneg %p342
      %p738 = scmp.lt.s32.totalorder %s36, 1
      %s739 = scalar_select %p738, %s36, 1
      %s740 = scalar_lea.vmem %s12, %s739
      %p741 = pneg %p371
      %p742 = pneg %p368
      %p743 = scmp.lt.s32.totalorder %s36, 1
      %s744 = scalar_select %p743, %s36, 1
      %s745 = scalar_lea.vmem %s13, %s744
      %p746 = pneg %p397
      %p747 = pneg %p394
      %p748 = pneg %p418
      %p749 = pneg %p415
      %p750 = pneg %p439
      %p751 = pneg %p436
      %p752 = pneg %p465
      %p753 = pneg %p462
      %s754 = smul.u32 2, %s35
      %p755 = scmp.lt.s32.totalorder %s754, 1
      %s756 = scalar_select %p755, %s754, 1
      %s757 = smul.addr %s756, 8
      %s758 = scalar_lea.vmem %s16, %s757
      %p759 = pneg %p491
      %p760 = pneg %p488
      %s761 = smul.u32 2, %s35
      %p762 = scmp.lt.s32.totalorder %s761, 1
      %s763 = scalar_select %p762, %s761, 1
      %s764 = smul.addr %s763, 8
      %s765 = scalar_lea.vmem %s17, %s764
      %p766 = pneg %p519
      %p767 = pneg %p516
      %s768 = smul.u32 2, %s35
      %p769 = scmp.lt.s32.totalorder %s36, 1
      %s770 = scalar_select %p769, %s36, 1
      %p771 = scmp.lt.s32.totalorder %s768, 1
      %s772 = scalar_select %p771, %s768, 1
      %s773 = smul.addr %s770, 2
      %s774 = sadd.s32 %s772, %s773
      %s775 = smul.addr %s774, 8
      %s776 = scalar_lea.vmem %s18, %s775
      %p777 = pneg %p547
      %p778 = pneg %p544
      %s779 = smul.u32 2, %s35
      %p780 = scmp.lt.s32.totalorder %s36, 1
      %s781 = scalar_select %p780, %s36, 1
      %p782 = scmp.lt.s32.totalorder %s779, 1
      %s783 = scalar_select %p782, %s779, 1
      %s784 = smul.addr %s781, 2
      %s785 = sadd.s32 %s783, %s784
      %s786 = smul.addr %s785, 8
      %s787 = scalar_lea.vmem %s19, %s786
      %s788 = smul.u32 2, %s35
      %p789 = scmp.lt.s32.totalorder %s788, 1
      %s790 = scalar_select %p789, %s788, 1
      %s791 = smul.addr %s790, 8
      %s792 = scalar_lea.vmem %s0, %s791
      %s793 = smul.u32 2, %s35
      %p794 = scmp.lt.s32.totalorder %s36, 1
      %s795 = scalar_select %p794, %s36, 1
      %s796 = smul.addr %s795, 4
      %s797 = smul.addr %s796, 8
      %s798 = scalar_lea.vmem %s2, %s797
      %p799 = scmp.lt.s32.totalorder %s36, 1
      %s800 = scalar_select %p799, %s36, 1
      %s801 = scalar_lea.vmem %s3, %s800
      %p802 = scmp.lt.s32.totalorder %s36, 1
      %s803 = scalar_select %p802, %s36, 1
      %s804 = smul.addr %s803, 4
      %s805 = smul.addr %s804, 8
      %s806 = scalar_lea.vmem %s4, %s805
      %p807 = scmp.lt.s32.totalorder %s36, 1
      %s808 = scalar_select %p807, %s36, 1
      %s809 = scalar_lea.vmem %s5, %s808
      %p810 = scmp.lt.s32.totalorder %s36, 1
      %s811 = scalar_select %p810, %s36, 1
      %s812 = smul.addr %s811, 4
      %s813 = smul.addr %s812, 8
      %s814 = scalar_lea.vmem %s6, %s813
      %p815 = scmp.lt.s32.totalorder %s36, 1
      %s816 = scalar_select %p815, %s36, 1
      %s817 = scalar_lea.vmem %s7, %s816
      %p818 = scmp.lt.s32.totalorder %s36, 1
      %s819 = scalar_select %p818, %s36, 1
      %s820 = smul.addr %s819, 16
      %s821 = smul.addr %s820, 8
      %s822 = scalar_lea.vmem %s8, %s821
      %p823 = scmp.lt.s32.totalorder %s36, 1
      %s824 = scalar_select %p823, %s36, 1
      %s825 = scalar_lea.vmem %s9, %s824
      %p826 = scmp.lt.s32.totalorder %s36, 1
      %s827 = scalar_select %p826, %s36, 1
      %s828 = scalar_lea.vmem %s10, %s827
      %p829 = scmp.lt.s32.totalorder %s36, 1
      %s830 = scalar_select %p829, %s36, 1
      %s831 = scalar_lea.vmem %s11, %s830
      %p832 = scmp.lt.s32.totalorder %s36, 1
      %s833 = scalar_select %p832, %s36, 1
      %s834 = scalar_lea.vmem %s12, %s833
      %p835 = scmp.lt.s32.totalorder %s36, 1
      %s836 = scalar_select %p835, %s36, 1
      %s837 = scalar_lea.vmem %s13, %s836
      %s838 = smul.u32 2, %s35
      %p839 = scmp.lt.s32.totalorder %s838, 1
      %s840 = scalar_select %p839, %s838, 1
      %s841 = smul.addr %s840, 8
      %s842 = scalar_lea.vmem %s16, %s841
      %s843 = smul.u32 2, %s35
      %s844 = smul.u32 2, %s35
      %p845 = scmp.lt.s32.totalorder %s844, 1
      %s846 = scalar_select %p845, %s844, 1
      %s847 = smul.addr %s846, 8
      %s848 = scalar_lea.vmem %s17, %s847
      %s849 = smul.u32 2, %s35
      %s850 = smul.u32 2, %s35
      %p851 = scmp.lt.s32.totalorder %s36, 1
      %s852 = scalar_select %p851, %s36, 1
      %p853 = scmp.lt.s32.totalorder %s850, 1
      %s854 = scalar_select %p853, %s850, 1
      %s855 = smul.addr %s852, 2
      %s856 = sadd.s32 %s854, %s855
      %s857 = smul.addr %s856, 8
      %s858 = scalar_lea.vmem %s18, %s857
      %s859 = smul.u32 2, %s35
      %s860 = smul.u32 2, %s35
      %p861 = scmp.lt.s32.totalorder %s36, 1
      %s862 = scalar_select %p861, %s36, 1
      %p863 = scmp.lt.s32.totalorder %s860, 1
      %s864 = scalar_select %p863, %s860, 1
      %s865 = smul.addr %s862, 2
      %s866 = sadd.s32 %s864, %s865
      %s867 = smul.addr %s866, 8
      %s868 = scalar_lea.vmem %s19, %s867
      %s869 = smul.u32 2, %s35
      %p870 = scmp.eq.s32.totalorder %s36, 0
      // Predicated region
      $region85: #{transformer_encoder.1} parent=83 // pred_check
        %p871 = pneg %p870
      $region86: #{transformer_encoder.1} parent=83 // pred_check_branch
        %873 = sbr.rel (%p871) target = $region88
      $region87: #{transformer_encoder.1} parent=83 // pred_region
        %v874 = vld [vmem:[%s792] sm:$0xff]
        %v875 = vld [vmem:[%s792 + $0x8] sm:$0xff]
        %v876 = vmul.f32 %v874, 5.656854
        %v877 = vmul.f32 %v875, 5.656854
        %v878 = vld [vmem:[%s1] sm:$0xff]
        %v879 = vadd.f32 %v876, %v878
        %v880 = vadd.f32 %v877, %v878
        %vm881 = vcmask 261120
        %882 = vst.msk [vmem:[#allocation2] sm:$0xff] %vm881, %v879
        %883 = vst.msk [vmem:[#allocation2 + $0x8] sm:$0xff] %vm881, %v880
        %884 = vst.msk [vmem:[%s848] sm:$0xff] %vm881, %v879
        %885 = vst.msk [vmem:[%s848 + $0x8] sm:$0xff] %vm881, %v880
      $region88: #{transformer_encoder.1} parent=83 // pred_fallthru
        _
      %v886 = vld [vmem:[#allocation2] sm:$0xff]
      %v887 = vld [vmem:[#allocation2 + $0x8] sm:$0xff]
      %v888 = vld [vmem:[%s798] sm:$0xff]
      %v889 = vld [vmem:[%s798 + $0x8] sm:$0xff]
      %v890 = vld [vmem:[%s798 + $0x10] sm:$0xff]
      %v891 = vld [vmem:[%s798 + $0x18] sm:$0xff]
      %v892 = vld [vmem:[%s801] sm:$0x1]
      %v894 = vlaneseq
      %v895 = vshrl.u32 %v894, 7
      %v896 = vsub.s32 0, %v895
      %v897 = vrot.slane %v892, %v896
      %vm899 = vcmask 261120
      %v901 = vsel %vm899, %v886, 0
      %v904 = vsel %vm899, %v887, 0
      %906 = vmatprep.subr.mxu0 0.0
      %907 = vmatpush1.msra.mxu0 %v888
      %908 = vmatprep.subr.mxu0 0.0
      %909 = vmatpush1.msra.mxu0 %v889
      %910 = vmatprep.subr.mxu0 0.0
      %911 = vmatpush1.msra.mxu0 %v890
      %912 = vmatprep.subr.mxu0 0.0
      %913 = vmatpush1.msra.mxu0 %v891
      %914 = vmatprep.subr.mxu0 0.0
      %915 = vmatpush1.msra.mxu0 0.0
      %916 = vmatprep.subr.mxu0 0.0
      %917 = vmatpush1.msra.mxu0 0.0
      %918 = vmatprep.subr.mxu0 0.0
      %919 = vmatpush1.msra.mxu0 0.0
      %920 = vmatprep.subr.mxu0 0.0
      %921 = vmatpush1.msra.mxu0 0.0
      %922 = vmatprep.subr.mxu0 0.0
      %923 = vmatpush1.msra.mxu0 0.0
      %924 = vmatprep.subr.mxu0 0.0
      %925 = vmatpush1.msra.mxu0 0.0
      %926 = vmatprep.subr.mxu0 0.0
      %927 = vmatpush1.msra.mxu0 0.0
      %928 = vmatprep.subr.mxu0 0.0
      %929 = vmatpush1.msra.mxu0 0.0
      %930 = vmatprep.subr.mxu0 0.0
      %931 = vmatpush1.msra.mxu0 0.0
      %932 = vmatprep.subr.mxu0 0.0
      %933 = vmatpush1.msra.mxu0 0.0
      %934 = vmatprep.subr.mxu0 0.0
      %935 = vmatpush1.msra.mxu0 0.0
      %936 = vmatprep.subr.mxu0 0.0
      %937 = vmatpush1.msra.mxu0 0.0
      %938 = vmatprep.subr.mxu0 0.0
      %939 = vmatpush1.msra.mxu0 0.0
      %940 = vmatprep.subr.mxu0 0.0
      %941 = vmatpush1.msra.mxu0 0.0
      %942 = vmatprep.subr.mxu0 0.0
      %943 = vmatpush1.msra.mxu0 0.0
      %944 = vmatprep.subr.mxu0 0.0
      %945 = vmatpush1.msra.mxu0 0.0
      %946 = vmatprep.subr.mxu0 0.0
      %947 = vmatpush1.msra.mxu0 0.0
      %948 = vmatprep.subr.mxu0 0.0
      %949 = vmatpush1.msra.mxu0 0.0
      %950 = vmatprep.subr.mxu0 0.0
      %951 = vmatpush1.msra.mxu0 0.0
      %952 = vmatprep.subr.mxu0 0.0
      %953 = vmatpush1.msra.mxu0 0.0
      %954 = vmatprep.subr.mxu0 0.0
      %955 = vmatpush1.msra.mxu0 0.0
      %956 = vmatprep.subr.mxu0 0.0
      %957 = vmatpush1.msra.mxu0 0.0
      %958 = vmatprep.subr.mxu0 0.0
      %959 = vmatpush1.msra.mxu0 0.0
      %960 = vmatprep.subr.mxu0 0.0
      %961 = vmatpush1.msra.mxu0 0.0
      %962 = vmatprep.subr.mxu0 0.0
      %963 = vmatpush1.msra.mxu0 0.0
      %964 = vmatprep.subr.mxu0 0.0
      %965 = vmatpush1.msra.mxu0 0.0
      %966 = vmatprep.subr.mxu0 0.0
      %967 = vmatpush1.msra.mxu0 0.0
      %968 = vmatprep.subr.mxu0 0.0
      %969 = vmatpush1.msra.mxu0 0.0
      %970 = vmatprep.mubr.f32.mxu0 0.0
      %971 = vmatmul.mubr.f32.gmra.mrb[0].mxu0 %v901
      %v972 = vpop.f32.mrb[0].mxu0
      %v973 = vadd.f32 %v897, %v972
      %v974 = vpop.f32.mrb[0].mxu0
      %975 = vmatprep.mubr.f32.mxu0 0.0
      %976 = vmatmul.mubr.f32.gmra.mrb[0].mxu0 %v904
      %v977 = vpop.f32.mrb[0].mxu0
      %v978 = vadd.f32 %v897, %v977
      %v979 = vpop.f32.mrb[0].mxu0
      %980 = vdwg.mxu0
      %v981 = vmul.f32 %v973, 0.35355338
      %v982 = vmul.f32 %v978, 0.35355338
      %984 = vrot.lane.b32.xlu0 %v973, 96
      %v985 = vpop.permute.xlu0 %984
      %vm986 = vcmask 64512
      %v988 = vsel %vm986, %v981, 0
      %v990 = vsel %vm986, %v985, 0
      %992 = vmatprep.subr.mxu0 0.0
      %993 = vmatpush1.xpose.msra.mxu0 %v990
      %994 = vmatprep.subr.mxu0 0.0
      %995 = vmatpush1.xpose.msra.mxu0 0.0
      %996 = vmatprep.subr.mxu0 0.0
      %997 = vmatpush1.xpose.msra.mxu0 0.0
      %998 = vmatprep.subr.mxu0 0.0
      %999 = vmatpush1.xpose.msra.mxu0 0.0
      %1000 = vmatprep.subr.mxu0 0.0
      %1001 = vmatpush1.xpose.msra.mxu0 0.0
      %1002 = vmatprep.subr.mxu0 0.0
      %1003 = vmatpush1.xpose.msra.mxu0 0.0
      %1004 = vmatprep.subr.mxu0 0.0
      %1005 = vmatpush1.xpose.msra.mxu0 0.0
      %1006 = vmatprep.subr.mxu0 0.0
      %1007 = vmatpush1.xpose.msra.mxu0 0.0
      %1008 = vmatprep.subr.mxu0 0.0
      %1009 = vmatpush1.xpose.msra.mxu0 0.0
      %1010 = vmatprep.subr.mxu0 0.0
      %1011 = vmatpush1.xpose.msra.mxu0 0.0
      %1012 = vmatprep.subr.mxu0 0.0
      %1013 = vmatpush1.xpose.msra.mxu0 0.0
      %1014 = vmatprep.subr.mxu0 0.0
      %1015 = vmatpush1.xpose.msra.mxu0 0.0
      %1016 = vmatprep.subr.mxu0 0.0
      %1017 = vmatpush1.xpose.msra.mxu0 0.0
      %1018 = vmatprep.subr.mxu0 0.0
      %1019 = vmatpush1.xpose.msra.mxu0 0.0
      %1020 = vmatprep.subr.mxu0 0.0
      %1021 = vmatpush1.xpose.msra.mxu0 0.0
      %1022 = vmatprep.subr.mxu0 0.0
      %1023 = vmatpush1.xpose.msra.mxu0 0.0
      %1024 = vmatprep.subr.mxu0 0.0
      %1025 = vmatpush1.xpose.msra.mxu0 0.0
      %1026 = vmatprep.subr.mxu0 0.0
      %1027 = vmatpush1.xpose.msra.mxu0 0.0
      %1028 = vmatprep.subr.mxu0 0.0
      %1029 = vmatpush1.xpose.msra.mxu0 0.0
      %1030 = vmatprep.subr.mxu0 0.0
      %1031 = vmatpush1.xpose.msra.mxu0 0.0
      %1032 = vmatprep.subr.mxu0 0.0
      %1033 = vmatpush1.xpose.msra.mxu0 0.0
      %1034 = vmatprep.subr.mxu0 0.0
      %1035 = vmatpush1.xpose.msra.mxu0 0.0
      %1036 = vmatprep.subr.mxu0 0.0
      %1037 = vmatpush1.xpose.msra.mxu0 0.0
      %1038 = vmatprep.subr.mxu0 0.0
      %1039 = vmatpush1.xpose.msra.mxu0 0.0
      %1040 = vmatprep.subr.mxu0 0.0
      %1041 = vmatpush1.xpose.msra.mxu0 0.0
      %1042 = vmatprep.subr.mxu0 0.0
      %1043 = vmatpush1.xpose.msra.mxu0 0.0
      %1044 = vmatprep.subr.mxu0 0.0
      %1045 = vmatpush1.xpose.msra.mxu0 0.0
      %1046 = vmatprep.subr.mxu0 0.0
      %1047 = vmatpush1.xpose.msra.mxu0 0.0
      %1048 = vmatprep.subr.mxu0 0.0
      %1049 = vmatpush1.xpose.msra.mxu0 0.0
      %1050 = vmatprep.subr.mxu0 0.0
      %1051 = vmatpush1.xpose.msra.mxu0 0.0
      %1052 = vmatprep.subr.mxu0 0.0
      %1053 = vmatpush1.xpose.msra.mxu0 0.0
      %1054 = vmatprep.subr.mxu0 0.0
      %1055 = vmatpush1.xpose.msra.mxu0 0.0
      %1056 = vmatprep.mubr.f32.mxu0 0.0
      %1057 = vmatmul.mubr.f32.gmra.mrb[0].mxu0 %v988
      %v1058 = vpop.f32.mrb[0].mxu0
      %v1059 = vadd.f32 0.0, %v1058
      %v1060 = vpop.f32.mrb[0].mxu0
      %1061 = vdwg.mxu0
      %1063 = vrot.lane.b32.xlu0 %v978, 96
      %v1064 = vpop.permute.xlu0 %1063
      %v1066 = vsel %vm986, %v982, 0
      %v1068 = vsel %vm986, %v1064, 0
      %1070 = vmatprep.subr.mxu0 0.0
      %1071 = vmatpush1.xpose.msra.mxu0 %v1068
      %1072 = vmatprep.subr.mxu0 0.0
      %1073 = vmatpush1.xpose.msra.mxu0 0.0
      %1074 = vmatprep.subr.mxu0 0.0
      %1075 = vmatpush1.xpose.msra.mxu0 0.0
      %1076 = vmatprep.subr.mxu0 0.0
      %1077 = vmatpush1.xpose.msra.mxu0 0.0
      %1078 = vmatprep.subr.mxu0 0.0
      %1079 = vmatpush1.xpose.msra.mxu0 0.0
      %1080 = vmatprep.subr.mxu0 0.0
      %1081 = vmatpush1.xpose.msra.mxu0 0.0
      %1082 = vmatprep.subr.mxu0 0.0
      %1083 = vmatpush1.xpose.msra.mxu0 0.0
      %1084 = vmatprep.subr.mxu0 0.0
      %1085 = vmatpush1.xpose.msra.mxu0 0.0
      %1086 = vmatprep.subr.mxu0 0.0
      %1087 = vmatpush1.xpose.msra.mxu0 0.0
      %1088 = vmatprep.subr.mxu0 0.0
      %1089 = vmatpush1.xpose.msra.mxu0 0.0
      %1090 = vmatprep.subr.mxu0 0.0
      %1091 = vmatpush1.xpose.msra.mxu0 0.0
      %1092 = vmatprep.subr.mxu0 0.0
      %1093 = vmatpush1.xpose.msra.mxu0 0.0
      %1094 = vmatprep.subr.mxu0 0.0
      %1095 = vmatpush1.xpose.msra.mxu0 0.0
      %1096 = vmatprep.subr.mxu0 0.0
      %1097 = vmatpush1.xpose.msra.mxu0 0.0
      %1098 = vmatprep.subr.mxu0 0.0
      %1099 = vmatpush1.xpose.msra.mxu0 0.0
      %1100 = vmatprep.subr.mxu0 0.0
      %1101 = vmatpush1.xpose.msra.mxu0 0.0
      %1102 = vmatprep.subr.mxu0 0.0
      %1103 = vmatpush1.xpose.msra.mxu0 0.0
      %1104 = vmatprep.subr.mxu0 0.0
      %1105 = vmatpush1.xpose.msra.mxu0 0.0
      %1106 = vmatprep.subr.mxu0 0.0
      %1107 = vmatpush1.xpose.msra.mxu0 0.0
      %1108 = vmatprep.subr.mxu0 0.0
      %1109 = vmatpush1.xpose.msra.mxu0 0.0
      %1110 = vmatprep.subr.mxu0 0.0
      %1111 = vmatpush1.xpose.msra.mxu0 0.0
      %1112 = vmatprep.subr.mxu0 0.0
      %1113 = vmatpush1.xpose.msra.mxu0 0.0
      %1114 = vmatprep.subr.mxu0 0.0
      %1115 = vmatpush1.xpose.msra.mxu0 0.0
      %1116 = vmatprep.subr.mxu0 0.0
      %1117 = vmatpush1.xpose.msra.mxu0 0.0
      %1118 = vmatprep.subr.mxu0 0.0
      %1119 = vmatpush1.xpose.msra.mxu0 0.0
      %1120 = vmatprep.subr.mxu0 0.0
      %1121 = vmatpush1.xpose.msra.mxu0 0.0
      %1122 = vmatprep.subr.mxu0 0.0
      %1123 = vmatpush1.xpose.msra.mxu0 0.0
      %1124 = vmatprep.subr.mxu0 0.0
      %1125 = vmatpush1.xpose.msra.mxu0 0.0
      %1126 = vmatprep.subr.mxu0 0.0
      %1127 = vmatpush1.xpose.msra.mxu0 0.0
      %1128 = vmatprep.subr.mxu0 0.0
      %1129 = vmatpush1.xpose.msra.mxu0 0.0
      %1130 = vmatprep.subr.mxu0 0.0
      %1131 = vmatpush1.xpose.msra.mxu0 0.0
      %1132 = vmatprep.subr.mxu0 0.0
      %1133 = vmatpush1.xpose.msra.mxu0 0.0
      %1134 = vmatprep.mubr.f32.mxu0 0.0
      %1135 = vmatmul.mubr.f32.gmra.mrb[0].mxu0 %v1066
      %v1136 = vpop.f32.mrb[0].mxu0
      %v1137 = vadd.f32 0.0, %v1136
      %v1138 = vpop.f32.mrb[0].mxu0
      %1139 = vdwg.mxu0
      %v1140 = vsel %vm986, %v1059, -inf
      %1141 = vmax.xlane.f32.xlu0 %v1140
      %v1142 = vpop.xlane.xlu0 %1141
      %v1143 = vsel %vm986, %v1137, -inf
      %1144 = vmax.xlane.f32.xlu0 %v1143
      %v1145 = vpop.xlane.xlu0 %1144
      %v1146 = vsub.f32 %v1059, %v1142
      %v1147 = vsub.f32 %v1137, %v1145
      %v1148 = vmul.f32 %v1146, 1.442695
      %v1149 = vpow.pop %v1148
      %v1150 = vmul.f32 %v1147, 1.442695
      %v1151 = vpow.pop %v1150
      %v1152 = vsel %vm986, %v1149, 0.0
      %1153 = vadd.xlane.f32.xlu0 %v1152
      %v1154 = vpop.xlane.xlu0 %1153
      %v1155 = vsel %vm986, %v1151, 0.0
      %1156 = vadd.xlane.f32.xlu0 %v1155
      %v1157 = vpop.xlane.xlu0 %1156
      %v1158 = vrcp.pop %v1154
      %v1159 = vmul.f32 %v1149, %v1158
      %v1160 = vrcp.pop %v1157
      %v1161 = vmul.f32 %v1151, %v1160
      %v1162 = vadd.f32 %v1159, 0.0
      %v1163 = vadd.f32 %v1161, 0.0
      %1164 = vrot.lane.b32.xlu0 %v973, 64
      %v1165 = vpop.permute.xlu0 %1164
      %v1168 = vsel %vm986, %v1159, 0
      %1170 = vmatprep.subr.mxu0 0.0
      %1171 = vmatpush1.msra.mxu0 %v1165
      %1172 = vmatprep.subr.mxu0 0.0
      %1173 = vmatpush1.msra.mxu0 0.0
      %1174 = vmatprep.subr.mxu0 0.0
      %1175 = vmatpush1.msra.mxu0 0.0
      %1176 = vmatprep.subr.mxu0 0.0
      %1177 = vmatpush1.msra.mxu0 0.0
      %1178 = vmatprep.subr.mxu0 0.0
      %1179 = vmatpush1.msra.mxu0 0.0
      %1180 = vmatprep.subr.mxu0 0.0
      %1181 = vmatpush1.msra.mxu0 0.0
      %1182 = vmatprep.subr.mxu0 0.0
      %1183 = vmatpush1.msra.mxu0 0.0
      %1184 = vmatprep.subr.mxu0 0.0
      %1185 = vmatpush1.msra.mxu0 0.0
      %1186 = vmatprep.subr.mxu0 0.0
      %1187 = vmatpush1.msra.mxu0 0.0
      %1188 = vmatprep.subr.mxu0 0.0
      %1189 = vmatpush1.msra.mxu0 0.0
      %1190 = vmatprep.subr.mxu0 0.0
      %1191 = vmatpush1.msra.mxu0 0.0
      %1192 = vmatprep.subr.mxu0 0.0
      %1193 = vmatpush1.msra.mxu0 0.0
      %1194 = vmatprep.subr.mxu0 0.0
      %1195 = vmatpush1.msra.mxu0 0.0
      %1196 = vmatprep.subr.mxu0 0.0
      %1197 = vmatpush1.msra.mxu0 0.0
      %1198 = vmatprep.subr.mxu0 0.0
      %1199 = vmatpush1.msra.mxu0 0.0
      %1200 = vmatprep.subr.mxu0 0.0
      %1201 = vmatpush1.msra.mxu0 0.0
      %1202 = vmatprep.subr.mxu0 0.0
      %1203 = vmatpush1.msra.mxu0 0.0
      %1204 = vmatprep.subr.mxu0 0.0
      %1205 = vmatpush1.msra.mxu0 0.0
      %1206 = vmatprep.subr.mxu0 0.0
      %1207 = vmatpush1.msra.mxu0 0.0
      %1208 = vmatprep.subr.mxu0 0.0
      %1209 = vmatpush1.msra.mxu0 0.0
      %1210 = vmatprep.subr.mxu0 0.0
      %1211 = vmatpush1.msra.mxu0 0.0
      %1212 = vmatprep.subr.mxu0 0.0
      %1213 = vmatpush1.msra.mxu0 0.0
      %1214 = vmatprep.subr.mxu0 0.0
      %1215 = vmatpush1.msra.mxu0 0.0
      %1216 = vmatprep.subr.mxu0 0.0
      %1217 = vmatpush1.msra.mxu0 0.0
      %1218 = vmatprep.subr.mxu0 0.0
      %1219 = vmatpush1.msra.mxu0 0.0
      %1220 = vmatprep.subr.mxu0 0.0
      %1221 = vmatpush1.msra.mxu0 0.0
      %1222 = vmatprep.subr.mxu0 0.0
      %1223 = vmatpush1.msra.mxu0 0.0
      %1224 = vmatprep.subr.mxu0 0.0
      %1225 = vmatpush1.msra.mxu0 0.0
      %1226 = vmatprep.subr.mxu0 0.0
      %1227 = vmatpush1.msra.mxu0 0.0
      %1228 = vmatprep.subr.mxu0 0.0
      %1229 = vmatpush1.msra.mxu0 0.0
      %1230 = vmatprep.subr.mxu0 0.0
      %1231 = vmatpush1.msra.mxu0 0.0
      %1232 = vmatprep.subr.mxu0 0.0
      %1233 = vmatpush1.msra.mxu0 0.0
      %1234 = vmatprep.mubr.f32.mxu0 0.0
      %1235 = vmatmul.mubr.f32.gmra.mrb[0].mxu0 %v1168
      %v1236 = vpop.f32.mrb[0].mxu0
      %v1237 = vadd.f32 0.0, %v1236
      %v1238 = vpop.f32.mrb[0].mxu0
      %1239 = vdwg.mxu0
      %1240 = vrot.lane.b32.xlu0 %v978, 64
      %v1241 = vpop.permute.xlu0 %1240
      %v1244 = vsel %vm986, %v1161, 0
      %1246 = vmatprep.subr.mxu0 0.0
      %1247 = vmatpush1.msra.mxu0 %v1241
      %1248 = vmatprep.subr.mxu0 0.0
      %1249 = vmatpush1.msra.mxu0 0.0
      %1250 = vmatprep.subr.mxu0 0.0
      %1251 = vmatpush1.msra.mxu0 0.0
      %1252 = vmatprep.subr.mxu0 0.0
      %1253 = vmatpush1.msra.mxu0 0.0
      %1254 = vmatprep.subr.mxu0 0.0
      %1255 = vmatpush1.msra.mxu0 0.0
      %1256 = vmatprep.subr.mxu0 0.0
      %1257 = vmatpush1.msra.mxu0 0.0
      %1258 = vmatprep.subr.mxu0 0.0
      %1259 = vmatpush1.msra.mxu0 0.0
      %1260 = vmatprep.subr.mxu0 0.0
      %1261 = vmatpush1.msra.mxu0 0.0
      %1262 = vmatprep.subr.mxu0 0.0
      %1263 = vmatpush1.msra.mxu0 0.0
      %1264 = vmatprep.subr.mxu0 0.0
      %1265 = vmatpush1.msra.mxu0 0.0
      %1266 = vmatprep.subr.mxu0 0.0
      %1267 = vmatpush1.msra.mxu0 0.0
      %1268 = vmatprep.subr.mxu0 0.0
      %1269 = vmatpush1.msra.mxu0 0.0
      %1270 = vmatprep.subr.mxu0 0.0
      %1271 = vmatpush1.msra.mxu0 0.0
      %1272 = vmatprep.subr.mxu0 0.0
      %1273 = vmatpush1.msra.mxu0 0.0
      %1274 = vmatprep.subr.mxu0 0.0
      %1275 = vmatpush1.msra.mxu0 0.0
      %1276 = vmatprep.subr.mxu0 0.0
      %1277 = vmatpush1.msra.mxu0 0.0
      %1278 = vmatprep.subr.mxu0 0.0
      %1279 = vmatpush1.msra.mxu0 0.0
      %1280 = vmatprep.subr.mxu0 0.0
      %1281 = vmatpush1.msra.mxu0 0.0
      %1282 = vmatprep.subr.mxu0 0.0
      %1283 = vmatpush1.msra.mxu0 0.0
      %1284 = vmatprep.subr.mxu0 0.0
      %1285 = vmatpush1.msra.mxu0 0.0
      %1286 = vmatprep.subr.mxu0 0.0
      %1287 = vmatpush1.msra.mxu0 0.0
      %1288 = vmatprep.subr.mxu0 0.0
      %1289 = vmatpush1.msra.mxu0 0.0
      %1290 = vmatprep.subr.mxu0 0.0
      %1291 = vmatpush1.msra.mxu0 0.0
      %1292 = vmatprep.subr.mxu0 0.0
      %1293 = vmatpush1.msra.mxu0 0.0
      %1294 = vmatprep.subr.mxu0 0.0
      %1295 = vmatpush1.msra.mxu0 0.0
      %1296 = vmatprep.subr.mxu0 0.0
      %1297 = vmatpush1.msra.mxu0 0.0
      %1298 = vmatprep.subr.mxu0 0.0
      %1299 = vmatpush1.msra.mxu0 0.0
      %1300 = vmatprep.subr.mxu0 0.0
      %1301 = vmatpush1.msra.mxu0 0.0
      %1302 = vmatprep.subr.mxu0 0.0
      %1303 = vmatpush1.msra.mxu0 0.0
      %1304 = vmatprep.subr.mxu0 0.0
      %1305 = vmatpush1.msra.mxu0 0.0
      %1306 = vmatprep.subr.mxu0 0.0
      %1307 = vmatpush1.msra.mxu0 0.0
      %1308 = vmatprep.subr.mxu0 0.0
      %1309 = vmatpush1.msra.mxu0 0.0
      %1310 = vmatprep.mubr.f32.mxu0 0.0
      %1311 = vmatmul.mubr.f32.gmra.mrb[0].mxu0 %v1244
      %v1312 = vpop.f32.mrb[0].mxu0
      %v1313 = vadd.f32 0.0, %v1312
      %v1314 = vpop.f32.mrb[0].mxu0
      %1315 = vdwg.mxu0
      %1316 = vrot.lane.b32.xlu0 %v981, 120
      %v1317 = vpop.permute.xlu0 %1316
      %1318 = vrot.lane.b32.xlu0 %v973, 88
      %v1319 = vpop.permute.xlu0 %1318
      %v1320 = vsel %vm986, %v1317, 0
      %v1322 = vsel %vm986, %v1319, 0
      %1324 = vmatprep.subr.mxu0 0.0
      %1325 = vmatpush1.xpose.msra.mxu0 %v1322
      %1326 = vmatprep.subr.mxu0 0.0
      %1327 = vmatpush1.xpose.msra.mxu0 0.0
      %1328 = vmatprep.subr.mxu0 0.0
      %1329 = vmatpush1.xpose.msra.mxu0 0.0
      %1330 = vmatprep.subr.mxu0 0.0
      %1331 = vmatpush1.xpose.msra.mxu0 0.0
      %1332 = vmatprep.subr.mxu0 0.0
      %1333 = vmatpush1.xpose.msra.mxu0 0.0
      %1334 = vmatprep.subr.mxu0 0.0
      %1335 = vmatpush1.xpose.msra.mxu0 0.0
      %1336 = vmatprep.subr.mxu0 0.0
      %1337 = vmatpush1.xpose.msra.mxu0 0.0
      %1338 = vmatprep.subr.mxu0 0.0
      %1339 = vmatpush1.xpose.msra.mxu0 0.0
      %1340 = vmatprep.subr.mxu0 0.0
      %1341 = vmatpush1.xpose.msra.mxu0 0.0
      %1342 = vmatprep.subr.mxu0 0.0
      %1343 = vmatpush1.xpose.msra.mxu0 0.0
      %1344 = vmatprep.subr.mxu0 0.0
      %1345 = vmatpush1.xpose.msra.mxu0 0.0
      %1346 = vmatprep.subr.mxu0 0.0
      %1347 = vmatpush1.xpose.msra.mxu0 0.0
      %1348 = vmatprep.subr.mxu0 0.0
      %1349 = vmatpush1.xpose.msra.mxu0 0.0
      %1350 = vmatprep.subr.mxu0 0.0
      %1351 = vmatpush1.xpose.msra.mxu0 0.0
      %1352 = vmatprep.subr.mxu0 0.0
      %1353 = vmatpush1.xpose.msra.mxu0 0.0
      %1354 = vmatprep.subr.mxu0 0.0
      %1355 = vmatpush1.xpose.msra.mxu0 0.0
      %1356 = vmatprep.subr.mxu0 0.0
      %1357 = vmatpush1.xpose.msra.mxu0 0.0
      %1358 = vmatprep.subr.mxu0 0.0
      %1359 = vmatpush1.xpose.msra.mxu0 0.0
      %1360 = vmatprep.subr.mxu0 0.0
      %1361 = vmatpush1.xpose.msra.mxu0 0.0
      %1362 = vmatprep.subr.mxu0 0.0
      %1363 = vmatpush1.xpose.msra.mxu0 0.0
      %1364 = vmatprep.subr.mxu0 0.0
      %1365 = vmatpush1.xpose.msra.mxu0 0.0
      %1366 = vmatprep.subr.mxu0 0.0
      %1367 = vmatpush1.xpose.msra.mxu0 0.0
      %1368 = vmatprep.subr.mxu0 0.0
      %1369 = vmatpush1.xpose.msra.mxu0 0.0
      %1370 = vmatprep.subr.mxu0 0.0
      %1371 = vmatpush1.xpose.msra.mxu0 0.0
      %1372 = vmatprep.subr.mxu0 0.0
      %1373 = vmatpush1.xpose.msra.mxu0 0.0
      %1374 = vmatprep.subr.mxu0 0.0
      %1375 = vmatpush1.xpose.msra.mxu0 0.0
      %1376 = vmatprep.subr.mxu0 0.0
      %1377 = vmatpush1.xpose.msra.mxu0 0.0
      %1378 = vmatprep.subr.mxu0 0.0
      %1379 = vmatpush1.xpose.msra.mxu0 0.0
      %1380 = vmatprep.subr.mxu0 0.0
      %1381 = vmatpush1.xpose.msra.mxu0 0.0
      %1382 = vmatprep.subr.mxu0 0.0
      %1383 = vmatpush1.xpose.msra.mxu0 0.0
      %1384 = vmatprep.subr.mxu0 0.0
      %1385 = vmatpush1.xpose.msra.mxu0 0.0
      %1386 = vmatprep.subr.mxu0 0.0
      %1387 = vmatpush1.xpose.msra.mxu0 0.0
      %1388 = vmatprep.mubr.f32.mxu0 0.0
      %1389 = vmatmul.mubr.f32.gmra.mrb[0].mxu0 %v1320
      %v1390 = vpop.f32.mrb[0].mxu0
      %v1391 = vadd.f32 0.0, %v1390
      %v1392 = vpop.f32.mrb[0].mxu0
      %1393 = vdwg.mxu0
      %1394 = vrot.lane.b32.xlu0 %v982, 120
      %v1395 = vpop.permute.xlu0 %1394
      %1396 = vrot.lane.b32.xlu0 %v978, 88
      %v1397 = vpop.permute.xlu0 %1396
      %v1398 = vsel %vm986, %v1395, 0
      %v1400 = vsel %vm986, %v1397, 0
      %1402 = vmatprep.subr.mxu0 0.0
      %1403 = vmatpush1.xpose.msra.mxu0 %v1400
      %1404 = vmatprep.subr.mxu0 0.0
      %1405 = vmatpush1.xpose.msra.mxu0 0.0
      %1406 = vmatprep.subr.mxu0 0.0
      %1407 = vmatpush1.xpose.msra.mxu0 0.0
      %1408 = vmatprep.subr.mxu0 0.0
      %1409 = vmatpush1.xpose.msra.mxu0 0.0
      %1410 = vmatprep.subr.mxu0 0.0
      %1411 = vmatpush1.xpose.msra.mxu0 0.0
      %1412 = vmatprep.subr.mxu0 0.0
      %1413 = vmatpush1.xpose.msra.mxu0 0.0
      %1414 = vmatprep.subr.mxu0 0.0
      %1415 = vmatpush1.xpose.msra.mxu0 0.0
      %1416 = vmatprep.subr.mxu0 0.0
      %1417 = vmatpush1.xpose.msra.mxu0 0.0
      %1418 = vmatprep.subr.mxu0 0.0
      %1419 = vmatpush1.xpose.msra.mxu0 0.0
      %1420 = vmatprep.subr.mxu0 0.0
      %1421 = vmatpush1.xpose.msra.mxu0 0.0
      %1422 = vmatprep.subr.mxu0 0.0
      %1423 = vmatpush1.xpose.msra.mxu0 0.0
      %1424 = vmatprep.subr.mxu0 0.0
      %1425 = vmatpush1.xpose.msra.mxu0 0.0
      %1426 = vmatprep.subr.mxu0 0.0
      %1427 = vmatpush1.xpose.msra.mxu0 0.0
      %1428 = vmatprep.subr.mxu0 0.0
      %1429 = vmatpush1.xpose.msra.mxu0 0.0
      %1430 = vmatprep.subr.mxu0 0.0
      %1431 = vmatpush1.xpose.msra.mxu0 0.0
      %1432 = vmatprep.subr.mxu0 0.0
      %1433 = vmatpush1.xpose.msra.mxu0 0.0
      %1434 = vmatprep.subr.mxu0 0.0
      %1435 = vmatpush1.xpose.msra.mxu0 0.0
      %1436 = vmatprep.subr.mxu0 0.0
      %1437 = vmatpush1.xpose.msra.mxu0 0.0
      %1438 = vmatprep.subr.mxu0 0.0
      %1439 = vmatpush1.xpose.msra.mxu0 0.0
      %1440 = vmatprep.subr.mxu0 0.0
      %1441 = vmatpush1.xpose.msra.mxu0 0.0
      %1442 = vmatprep.subr.mxu0 0.0
      %1443 = vmatpush1.xpose.msra.mxu0 0.0
      %1444 = vmatprep.subr.mxu0 0.0
      %1445 = vmatpush1.xpose.msra.mxu0 0.0
      %1446 = vmatprep.subr.mxu0 0.0
      %1447 = vmatpush1.xpose.msra.mxu0 0.0
      %1448 = vmatprep.subr.mxu0 0.0
      %1449 = vmatpush1.xpose.msra.mxu0 0.0
      %1450 = vmatprep.subr.mxu0 0.0
      %1451 = vmatpush1.xpose.msra.mxu0 0.0
      %1452 = vmatprep.subr.mxu0 0.0
      %1453 = vmatpush1.xpose.msra.mxu0 0.0
      %1454 = vmatprep.subr.mxu0 0.0
      %1455 = vmatpush1.xpose.msra.mxu0 0.0
      %1456 = vmatprep.subr.mxu0 0.0
      %1457 = vmatpush1.xpose.msra.mxu0 0.0
      %1458 = vmatprep.subr.mxu0 0.0
      %1459 = vmatpush1.xpose.msra.mxu0 0.0
      %1460 = vmatprep.subr.mxu0 0.0
      %1461 = vmatpush1.xpose.msra.mxu0 0.0
      %1462 = vmatprep.subr.mxu0 0.0
      %1463 = vmatpush1.xpose.msra.mxu0 0.0
      %1464 = vmatprep.subr.mxu0 0.0
      %1465 = vmatpush1.xpose.msra.mxu0 0.0
      %1466 = vmatprep.mubr.f32.mxu0 0.0
      %1467 = vmatmul.mubr.f32.gmra.mrb[0].mxu0 %v1398
      %v1468 = vpop.f32.mrb[0].mxu0
      %v1469 = vadd.f32 0.0, %v1468
      %v1470 = vpop.f32.mrb[0].mxu0
      %1471 = vdwg.mxu0
      %v1472 = vsel %vm986, %v1391, -inf
      %1473 = vmax.xlane.f32.xlu0 %v1472
      %v1474 = vpop.xlane.xlu0 %1473
      %v1475 = vsel %vm986, %v1469, -inf
      %1476 = vmax.xlane.f32.xlu0 %v1475
      %v1477 = vpop.xlane.xlu0 %1476
      %v1478 = vsub.f32 %v1391, %v1474
      %v1479 = vsub.f32 %v1469, %v1477
      %v1480 = vmul.f32 %v1478, 1.442695
      %v1481 = vpow.pop %v1480
      %v1482 = vmul.f32 %v1479, 1.442695
      %v1483 = vpow.pop %v1482
      %v1484 = vsel %vm986, %v1481, 0.0
      %1485 = vadd.xlane.f32.xlu0 %v1484
      %v1486 = vpop.xlane.xlu0 %1485
      %v1487 = vsel %vm986, %v1483, 0.0
      %1488 = vadd.xlane.f32.xlu0 %v1487
      %v1489 = vpop.xlane.xlu0 %1488
      %v1490 = vrcp.pop %v1486
      %v1491 = vmul.f32 %v1481, %v1490
      %v1492 = vrcp.pop %v1489
      %v1493 = vmul.f32 %v1483, %v1492
      %v1494 = vadd.f32 %v1162, %v1491
      %v1495 = vadd.f32 %v1163, %v1493
      %1496 = vrot.lane.b32.xlu0 %v973, 56
      %v1497 = vpop.permute.xlu0 %1496
      %v1500 = vsel %vm986, %v1491, 0
      %1502 = vmatprep.subr.mxu0 0.0
      %1503 = vmatpush1.msra.mxu0 %v1497
      %1504 = vmatprep.subr.mxu0 0.0
      %1505 = vmatpush1.msra.mxu0 0.0
      %1506 = vmatprep.subr.mxu0 0.0
      %1507 = vmatpush1.msra.mxu0 0.0
      %1508 = vmatprep.subr.mxu0 0.0
      %1509 = vmatpush1.msra.mxu0 0.0
      %1510 = vmatprep.subr.mxu0 0.0
      %1511 = vmatpush1.msra.mxu0 0.0
      %1512 = vmatprep.subr.mxu0 0.0
      %1513 = vmatpush1.msra.mxu0 0.0
      %1514 = vmatprep.subr.mxu0 0.0
      %1515 = vmatpush1.msra.mxu0 0.0
      %1516 = vmatprep.subr.mxu0 0.0
      %1517 = vmatpush1.msra.mxu0 0.0
      %1518 = vmatprep.subr.mxu0 0.0
      %1519 = vmatpush1.msra.mxu0 0.0
      %1520 = vmatprep.subr.mxu0 0.0
      %1521 = vmatpush1.msra.mxu0 0.0
      %1522 = vmatprep.subr.mxu0 0.0
      %1523 = vmatpush1.msra.mxu0 0.0
      %1524 = vmatprep.subr.mxu0 0.0
      %1525 = vmatpush1.msra.mxu0 0.0
      %1526 = vmatprep.subr.mxu0 0.0
      %1527 = vmatpush1.msra.mxu0 0.0
      %1528 = vmatprep.subr.mxu0 0.0
      %1529 = vmatpush1.msra.mxu0 0.0
      %1530 = vmatprep.subr.mxu0 0.0
      %1531 = vmatpush1.msra.mxu0 0.0
      %1532 = vmatprep.subr.mxu0 0.0
      %1533 = vmatpush1.msra.mxu0 0.0
      %1534 = vmatprep.subr.mxu0 0.0
      %1535 = vmatpush1.msra.mxu0 0.0
      %1536 = vmatprep.subr.mxu0 0.0
      %1537 = vmatpush1.msra.mxu0 0.0
      %1538 = vmatprep.subr.mxu0 0.0
      %1539 = vmatpush1.msra.mxu0 0.0
      %1540 = vmatprep.subr.mxu0 0.0
      %1541 = vmatpush1.msra.mxu0 0.0
      %1542 = vmatprep.subr.mxu0 0.0
      %1543 = vmatpush1.msra.mxu0 0.0
      %1544 = vmatprep.subr.mxu0 0.0
      %1545 = vmatpush1.msra.mxu0 0.0
      %1546 = vmatprep.subr.mxu0 0.0
      %1547 = vmatpush1.msra.mxu0 0.0
      %1548 = vmatprep.subr.mxu0 0.0
      %1549 = vmatpush1.msra.mxu0 0.0
      %1550 = vmatprep.subr.mxu0 0.0
      %1551 = vmatpush1.msra.mxu0 0.0
      %1552 = vmatprep.subr.mxu0 0.0
      %1553 = vmatpush1.msra.mxu0 0.0
      %1554 = vmatprep.subr.mxu0 0.0
      %1555 = vmatpush1.msra.mxu0 0.0
      %1556 = vmatprep.subr.mxu0 0.0
      %1557 = vmatpush1.msra.mxu0 0.0
      %1558 = vmatprep.subr.mxu0 0.0
      %1559 = vmatpush1.msra.mxu0 0.0
      %1560 = vmatprep.subr.mxu0 0.0
      %1561 = vmatpush1.msra.mxu0 0.0
      %1562 = vmatprep.subr.mxu0 0.0
      %1563 = vmatpush1.msra.mxu0 0.0
      %1564 = vmatprep.subr.mxu0 0.0
      %1565 = vmatpush1.msra.mxu0 0.0
      %1566 = vmatprep.mubr.f32.mxu0 0.0
      %1567 = vmatmul.mubr.f32.gmra.mrb[0].mxu0 %v1500
      %v1568 = vpop.f32.mrb[0].mxu0
      %v1569 = vadd.f32 0.0, %v1568
      %v1570 = vpop.f32.mrb[0].mxu0
      %1571 = vdwg.mxu0
      %1572 = vrot.lane.b32.xlu0 %v978, 56
      %v1573 = vpop.permute.xlu0 %1572
      %v1576 = vsel %vm986, %v1493, 0
      %1578 = vmatprep.subr.mxu0 0.0
      %1579 = vmatpush1.msra.mxu0 %v1573
      %1580 = vmatprep.subr.mxu0 0.0
      %1581 = vmatpush1.msra.mxu0 0.0
      %1582 = vmatprep.subr.mxu0 0.0
      %1583 = vmatpush1.msra.mxu0 0.0
      %1584 = vmatprep.subr.mxu0 0.0
      %1585 = vmatpush1.msra.mxu0 0.0
      %1586 = vmatprep.subr.mxu0 0.0
      %1587 = vmatpush1.msra.mxu0 0.0
      %1588 = vmatprep.subr.mxu0 0.0
      %1589 = vmatpush1.msra.mxu0 0.0
      %1590 = vmatprep.subr.mxu0 0.0
      %1591 = vmatpush1.msra.mxu0 0.0
      %1592 = vmatprep.subr.mxu0 0.0
      %1593 = vmatpush1.msra.mxu0 0.0
      %1594 = vmatprep.subr.mxu0 0.0
      %1595 = vmatpush1.msra.mxu0 0.0
      %1596 = vmatprep.subr.mxu0 0.0
      %1597 = vmatpush1.msra.mxu0 0.0
      %1598 = vmatprep.subr.mxu0 0.0
      %1599 = vmatpush1.msra.mxu0 0.0
      %1600 = vmatprep.subr.mxu0 0.0
      %1601 = vmatpush1.msra.mxu0 0.0
      %1602 = vmatprep.subr.mxu0 0.0
      %1603 = vmatpush1.msra.mxu0 0.0
      %1604 = vmatprep.subr.mxu0 0.0
      %1605 = vmatpush1.msra.mxu0 0.0
      %1606 = vmatprep.subr.mxu0 0.0
      %1607 = vmatpush1.msra.mxu0 0.0
      %1608 = vmatprep.subr.mxu0 0.0
      %1609 = vmatpush1.msra.mxu0 0.0
      %1610 = vmatprep.subr.mxu0 0.0
      %1611 = vmatpush1.msra.mxu0 0.0
      %1612 = vmatprep.subr.mxu0 0.0
      %1613 = vmatpush1.msra.mxu0 0.0
      %1614 = vmatprep.subr.mxu0 0.0
      %1615 = vmatpush1.msra.mxu0 0.0
      %1616 = vmatprep.subr.mxu0 0.0
      %1617 = vmatpush1.msra.mxu0 0.0
      %1618 = vmatprep.subr.mxu0 0.0
      %1619 = vmatpush1.msra.mxu0 0.0
      %1620 = vmatprep.subr.mxu0 0.0
      %1621 = vmatpush1.msra.mxu0 0.0
      %1622 = vmatprep.subr.mxu0 0.0
      %1623 = vmatpush1.msra.mxu0 0.0
      %1624 = vmatprep.subr.mxu0 0.0
      %1625 = vmatpush1.msra.mxu0 0.0
      %1626 = vmatprep.subr.mxu0 0.0
      %1627 = vmatpush1.msra.mxu0 0.0
      %1628 = vmatprep.subr.mxu0 0.0
      %1629 = vmatpush1.msra.mxu0 0.0
      %1630 = vmatprep.subr.mxu0 0.0
      %1631 = vmatpush1.msra.mxu0 0.0
      %1632 = vmatprep.subr.mxu0 0.0
      %1633 = vmatpush1.msra.mxu0 0.0
      %1634 = vmatprep.subr.mxu0 0.0
      %1635 = vmatpush1.msra.mxu0 0.0
      %1636 = vmatprep.subr.mxu0 0.0
      %1637 = vmatpush1.msra.mxu0 0.0
      %1638 = vmatprep.subr.mxu0 0.0
      %1639 = vmatpush1.msra.mxu0 0.0
      %1640 = vmatprep.subr.mxu0 0.0
      %1641 = vmatpush1.msra.mxu0 0.0
      %1642 = vmatprep.mubr.f32.mxu0 0.0
      %1643 = vmatmul.mubr.f32.gmra.mrb[0].mxu0 %v1576
      %v1644 = vpop.f32.mrb[0].mxu0
      %v1645 = vadd.f32 0.0, %v1644
      %v1646 = vpop.f32.mrb[0].mxu0
      %1647 = vdwg.mxu0
      %1648 = vrot.lane.b32.xlu0 %v981, 112
      %v1649 = vpop.permute.xlu0 %1648
      %1650 = vrot.lane.b32.xlu0 %v973, 80
      %v1651 = vpop.permute.xlu0 %1650
      %v1652 = vsel %vm986, %v1649, 0
      %v1654 = vsel %vm986, %v1651, 0
      %1656 = vmatprep.subr.mxu0 0.0
      %1657 = vmatpush1.xpose.msra.mxu0 %v1654
      %1658 = vmatprep.subr.mxu0 0.0
      %1659 = vmatpush1.xpose.msra.mxu0 0.0
      %1660 = vmatprep.subr.mxu0 0.0
      %1661 = vmatpush1.xpose.msra.mxu0 0.0
      %1662 = vmatprep.subr.mxu0 0.0
      %1663 = vmatpush1.xpose.msra.mxu0 0.0
      %1664 = vmatprep.subr.mxu0 0.0
      %1665 = vmatpush1.xpose.msra.mxu0 0.0
      %1666 = vmatprep.subr.mxu0 0.0
      %1667 = vmatpush1.xpose.msra.mxu0 0.0
      %1668 = vmatprep.subr.mxu0 0.0
      %1669 = vmatpush1.xpose.msra.mxu0 0.0
      %1670 = vmatprep.subr.mxu0 0.0
      %1671 = vmatpush1.xpose.msra.mxu0 0.0
      %1672 = vmatprep.subr.mxu0 0.0
      %1673 = vmatpush1.xpose.msra.mxu0 0.0
      %1674 = vmatprep.subr.mxu0 0.0
      %1675 = vmatpush1.xpose.msra.mxu0 0.0
      %1676 = vmatprep.subr.mxu0 0.0
      %1677 = vmatpush1.xpose.msra.mxu0 0.0
      %1678 = vmatprep.subr.mxu0 0.0
      %1679 = vmatpush1.xpose.msra.mxu0 0.0
      %1680 = vmatprep.subr.mxu0 0.0
      %1681 = vmatpush1.xpose.msra.mxu0 0.0
      %1682 = vmatprep.subr.mxu0 0.0
      %1683 = vmatpush1.xpose.msra.mxu0 0.0
      %1684 = vmatprep.subr.mxu0 0.0
      %1685 = vmatpush1.xpose.msra.mxu0 0.0
      %1686 = vmatprep.subr.mxu0 0.0
      %1687 = vmatpush1.xpose.msra.mxu0 0.0
      %1688 = vmatprep.subr.mxu0 0.0
      %1689 = vmatpush1.xpose.msra.mxu0 0.0
      %1690 = vmatprep.subr.mxu0 0.0
      %1691 = vmatpush1.xpose.msra.mxu0 0.0
      %1692 = vmatprep.subr.mxu0 0.0
      %1693 = vmatpush1.xpose.msra.mxu0 0.0
      %1694 = vmatprep.subr.mxu0 0.0
      %1695 = vmatpush1.xpose.msra.mxu0 0.0
      %1696 = vmatprep.subr.mxu0 0.0
      %1697 = vmatpush1.xpose.msra.mxu0 0.0
      %1698 = vmatprep.subr.mxu0 0.0
      %1699 = vmatpush1.xpose.msra.mxu0 0.0
      %1700 = vmatprep.subr.mxu0 0.0
      %1701 = vmatpush1.xpose.msra.mxu0 0.0
      %1702 = vmatprep.subr.mxu0 0.0
      %1703 = vmatpush1.xpose.msra.mxu0 0.0
      %1704 = vmatprep.subr.mxu0 0.0
      %1705 = vmatpush1.xpose.msra.mxu0 0.0
      %1706 = vmatprep.subr.mxu0 0.0
      %1707 = vmatpush1.xpose.msra.mxu0 0.0
      %1708 = vmatprep.subr.mxu0 0.0
      %1709 = vmatpush1.xpose.msra.mxu0 0.0
      %1710 = vmatprep.subr.mxu0 0.0
      %1711 = vmatpush1.xpose.msra.mxu0 0.0
      %1712 = vmatprep.subr.mxu0 0.0
      %1713 = vmatpush1.xpose.msra.mxu0 0.0
      %1714 = vmatprep.subr.mxu0 0.0
      %1715 = vmatpush1.xpose.msra.mxu0 0.0
      %1716 = vmatprep.subr.mxu0 0.0
      %1717 = vmatpush1.xpose.msra.mxu0 0.0
      %1718 = vmatprep.subr.mxu0 0.0
      %1719 = vmatpush1.xpose.msra.mxu0 0.0
      %1720 = vmatprep.mubr.f32.mxu0 0.0
      %1721 = vmatmul.mubr.f32.gmra.mrb[0].mxu0 %v1652
      %v1722 = vpop.f32.mrb[0].mxu0
      %v1723 = vadd.f32 0.0, %v1722
      %v1724 = vpop.f32.mrb[0].mxu0
      %1725 = vdwg.mxu0
      %1726 = vrot.lane.b32.xlu0 %v982, 112
      %v1727 = vpop.permute.xlu0 %1726
      %1728 = vrot.lane.b32.xlu0 %v978, 80
      %v1729 = vpop.permute.xlu0 %1728
      %v1730 = vsel %vm986, %v1727, 0
      %v1732 = vsel %vm986, %v1729, 0
      %1734 = vmatprep.subr.mxu0 0.0
      %1735 = vmatpush1.xpose.msra.mxu0 %v1732
      %1736 = vmatprep.subr.mxu0 0.0
      %1737 = vmatpush1.xpose.msra.mxu0 0.0
      %1738 = vmatprep.subr.mxu0 0.0
      %1739 = vmatpush1.xpose.msra.mxu0 0.0
      %1740 = vmatprep.subr.mxu0 0.0
      %1741 = vmatpush1.xpose.msra.mxu0 0.0
      %1742 = vmatprep.subr.mxu0 0.0
      %1743 = vmatpush1.xpose.msra.mxu0 0.0
      %1744 = vmatprep.subr.mxu0 0.0
      %1745 = vmatpush1.xpose.msra.mxu0 0.0
      %1746 = vmatprep.subr.mxu0 0.0
      %1747 = vmatpush1.xpose.msra.mxu0 0.0
      %1748 = vmatprep.subr.mxu0 0.0
      %1749 = vmatpush1.xpose.msra.mxu0 0.0
      %1750 = vmatprep.subr.mxu0 0.0
      %1751 = vmatpush1.xpose.msra.mxu0 0.0
      %1752 = vmatprep.subr.mxu0 0.0
      %1753 = vmatpush1.xpose.msra.mxu0 0.0
      %1754 = vmatprep.subr.mxu0 0.0
      %1755 = vmatpush1.xpose.msra.mxu0 0.0
      %1756 = vmatprep.subr.mxu0 0.0
      %1757 = vmatpush1.xpose.msra.mxu0 0.0
      %1758 = vmatprep.subr.mxu0 0.0
      %1759 = vmatpush1.xpose.msra.mxu0 0.0
      %1760 = vmatprep.subr.mxu0 0.0
      %1761 = vmatpush1.xpose.msra.mxu0 0.0
      %1762 = vmatprep.subr.mxu0 0.0
      %1763 = vmatpush1.xpose.msra.mxu0 0.0
      %1764 = vmatprep.subr.mxu0 0.0
      %1765 = vmatpush1.xpose.msra.mxu0 0.0
      %1766 = vmatprep.subr.mxu0 0.0
      %1767 = vmatpush1.xpose.msra.mxu0 0.0
      %1768 = vmatprep.subr.mxu0 0.0
      %1769 = vmatpush1.xpose.msra.mxu0 0.0
      %1770 = vmatprep.subr.mxu0 0.0
      %1771 = vmatpush1.xpose.msra.mxu0 0.0
      %1772 = vmatprep.subr.mxu0 0.0
      %1773 = vmatpush1.xpose.msra.mxu0 0.0
      %1774 = vmatprep.subr.mxu0 0.0
      %1775 = vmatpush1.xpose.msra.mxu0 0.0
      %1776 = vmatprep.subr.mxu0 0.0
      %1777 = vmatpush1.xpose.msra.mxu0 0.0
      %1778 = vmatprep.subr.mxu0 0.0
      %1779 = vmatpush1.xpose.msra.mxu0 0.0
      %1780 = vmatprep.subr.mxu0 0.0
      %1781 = vmatpush1.xpose.msra.mxu0 0.0
      %1782 = vmatprep.subr.mxu0 0.0
      %1783 = vmatpush1.xpose.msra.mxu0 0.0
      %1784 = vmatprep.subr.mxu0 0.0
      %1785 = vmatpush1.xpose.msra.mxu0 0.0
      %1786 = vmatprep.subr.mxu0 0.0
      %1787 = vmatpush1.xpose.msra.mxu0 0.0
      %1788 = vmatprep.subr.mxu0 0.0
      %1789 = vmatpush1.xpose.msra.mxu0 0.0
      %1790 = vmatprep.subr.mxu0 0.0
      %1791 = vmatpush1.xpose.msra.mxu0 0.0
      %1792 = vmatprep.subr.mxu0 0.0
      %1793 = vmatpush1.xpose.msra.mxu0 0.0
      %1794 = vmatprep.subr.mxu0 0.0
      %1795 = vmatpush1.xpose.msra.mxu0 0.0
      %1796 = vmatprep.subr.mxu0 0.0
      %1797 = vmatpush1.xpose.msra.mxu0 0.0
      %1798 = vmatprep.mubr.f32.mxu0 0.0
      %1799 = vmatmul.mubr.f32.gmra.mrb[0].mxu0 %v1730
      %v1800 = vpop.f32.mrb[0].mxu0
      %v1801 = vadd.f32 0.0, %v1800
      %v1802 = vpop.f32.mrb[0].mxu0
      %1803 = vdwg.mxu0
      %v1804 = vsel %vm986, %v1723, -inf
      %1805 = vmax.xlane.f32.xlu0 %v1804
      %v1806 = vpop.xlane.xlu0 %1805
      %v1807 = vsel %vm986, %v1801, -inf
      %1808 = vmax.xlane.f32.xlu0 %v1807
      %v1809 = vpop.xlane.xlu0 %1808
      %v1810 = vsub.f32 %v1723, %v1806
      %v1811 = vsub.f32 %v1801, %v1809
      %v1812 = vmul.f32 %v1810, 1.442695
      %v1813 = vpow.pop %v1812
      %v1814 = vmul.f32 %v1811, 1.442695
      %v1815 = vpow.pop %v1814
      %v1816 = vsel %vm986, %v1813, 0.0
      %1817 = vadd.xlane.f32.xlu0 %v1816
      %v1818 = vpop.xlane.xlu0 %1817
      %v1819 = vsel %vm986, %v1815, 0.0
      %1820 = vadd.xlane.f32.xlu0 %v1819
      %v1821 = vpop.xlane.xlu0 %1820
      %v1822 = vrcp.pop %v1818
      %v1823 = vmul.f32 %v1813, %v1822
      %v1824 = vrcp.pop %v1821
      %v1825 = vmul.f32 %v1815, %v1824
      %v1826 = vadd.f32 %v1494, %v1823
      %v1827 = vadd.f32 %v1495, %v1825
      %1828 = vrot.lane.b32.xlu0 %v973, 48
      %v1829 = vpop.permute.xlu0 %1828
      %v1832 = vsel %vm986, %v1823, 0
      %1834 = vmatprep.subr.mxu0 0.0
      %1835 = vmatpush1.msra.mxu0 %v1829
      %1836 = vmatprep.subr.mxu0 0.0
      %1837 = vmatpush1.msra.mxu0 0.0
      %1838 = vmatprep.subr.mxu0 0.0
      %1839 = vmatpush1.msra.mxu0 0.0
      %1840 = vmatprep.subr.mxu0 0.0
      %1841 = vmatpush1.msra.mxu0 0.0
      %1842 = vmatprep.subr.mxu0 0.0
      %1843 = vmatpush1.msra.mxu0 0.0
      %1844 = vmatprep.subr.mxu0 0.0
      %1845 = vmatpush1.msra.mxu0 0.0
      %1846 = vmatprep.subr.mxu0 0.0
      %1847 = vmatpush1.msra.mxu0 0.0
      %1848 = vmatprep.subr.mxu0 0.0
      %1849 = vmatpush1.msra.mxu0 0.0
      %1850 = vmatprep.subr.mxu0 0.0
      %1851 = vmatpush1.msra.mxu0 0.0
      %1852 = vmatprep.subr.mxu0 0.0
      %1853 = vmatpush1.msra.mxu0 0.0
      %1854 = vmatprep.subr.mxu0 0.0
      %1855 = vmatpush1.msra.mxu0 0.0
      %1856 = vmatprep.subr.mxu0 0.0
      %1857 = vmatpush1.msra.mxu0 0.0
      %1858 = vmatprep.subr.mxu0 0.0
      %1859 = vmatpush1.msra.mxu0 0.0
      %1860 = vmatprep.subr.mxu0 0.0
      %1861 = vmatpush1.msra.mxu0 0.0
      %1862 = vmatprep.subr.mxu0 0.0
      %1863 = vmatpush1.msra.mxu0 0.0
      %1864 = vmatprep.subr.mxu0 0.0
      %1865 = vmatpush1.msra.mxu0 0.0
      %1866 = vmatprep.subr.mxu0 0.0
      %1867 = vmatpush1.msra.mxu0 0.0
      %1868 = vmatprep.subr.mxu0 0.0
      %1869 = vmatpush1.msra.mxu0 0.0
      %1870 = vmatprep.subr.mxu0 0.0
      %1871 = vmatpush1.msra.mxu0 0.0
      %1872 = vmatprep.subr.mxu0 0.0
      %1873 = vmatpush1.msra.mxu0 0.0
      %1874 = vmatprep.subr.mxu0 0.0
      %1875 = vmatpush1.msra.mxu0 0.0
      %1876 = vmatprep.subr.mxu0 0.0
      %1877 = vmatpush1.msra.mxu0 0.0
      %1878 = vmatprep.subr.mxu0 0.0
      %1879 = vmatpush1.msra.mxu0 0.0
      %1880 = vmatprep.subr.mxu0 0.0
      %1881 = vmatpush1.msra.mxu0 0.0
      %1882 = vmatprep.subr.mxu0 0.0
      %1883 = vmatpush1.msra.mxu0 0.0
      %1884 = vmatprep.subr.mxu0 0.0
      %1885 = vmatpush1.msra.mxu0 0.0
      %1886 = vmatprep.subr.mxu0 0.0
      %1887 = vmatpush1.msra.mxu0 0.0
      %1888 = vmatprep.subr.mxu0 0.0
      %1889 = vmatpush1.msra.mxu0 0.0
      %1890 = vmatprep.subr.mxu0 0.0
      %1891 = vmatpush1.msra.mxu0 0.0
      %1892 = vmatprep.subr.mxu0 0.0
      %1893 = vmatpush1.msra.mxu0 0.0
      %1894 = vmatprep.subr.mxu0 0.0
      %1895 = vmatpush1.msra.mxu0 0.0
      %1896 = vmatprep.subr.mxu0 0.0
      %1897 = vmatpush1.msra.mxu0 0.0
      %1898 = vmatprep.mubr.f32.mxu0 0.0
      %1899 = vmatmul.mubr.f32.gmra.mrb[0].mxu0 %v1832
      %v1900 = vpop.f32.mrb[0].mxu0
      %v1901 = vadd.f32 0.0, %v1900
      %v1902 = vpop.f32.mrb[0].mxu0
      %1903 = vdwg.mxu0
      %1904 = vrot.lane.b32.xlu0 %v978, 48
      %v1905 = vpop.permute.xlu0 %1904
      %v1908 = vsel %vm986, %v1825, 0
      %1910 = vmatprep.subr.mxu0 0.0
      %1911 = vmatpush1.msra.mxu0 %v1905
      %1912 = vmatprep.subr.mxu0 0.0
      %1913 = vmatpush1.msra.mxu0 0.0
      %1914 = vmatprep.subr.mxu0 0.0
      %1915 = vmatpush1.msra.mxu0 0.0
      %1916 = vmatprep.subr.mxu0 0.0
      %1917 = vmatpush1.msra.mxu0 0.0
      %1918 = vmatprep.subr.mxu0 0.0
      %1919 = vmatpush1.msra.mxu0 0.0
      %1920 = vmatprep.subr.mxu0 0.0
      %1921 = vmatpush1.msra.mxu0 0.0
      %1922 = vmatprep.subr.mxu0 0.0
      %1923 = vmatpush1.msra.mxu0 0.0
      %1924 = vmatprep.subr.mxu0 0.0
      %1925 = vmatpush1.msra.mxu0 0.0
      %1926 = vmatprep.subr.mxu0 0.0
      %1927 = vmatpush1.msra.mxu0 0.0
      %1928 = vmatprep.subr.mxu0 0.0
      %1929 = vmatpush1.msra.mxu0 0.0
      %1930 = vmatprep.subr.mxu0 0.0
      %1931 = vmatpush1.msra.mxu0 0.0
      %1932 = vmatprep.subr.mxu0 0.0
      %1933 = vmatpush1.msra.mxu0 0.0
      %1934 = vmatprep.subr.mxu0 0.0
      %1935 = vmatpush1.msra.mxu0 0.0
      %1936 = vmatprep.subr.mxu0 0.0
      %1937 = vmatpush1.msra.mxu0 0.0
      %1938 = vmatprep.subr.mxu0 0.0
      %1939 = vmatpush1.msra.mxu0 0.0
      %1940 = vmatprep.subr.mxu0 0.0
      %1941 = vmatpush1.msra.mxu0 0.0
      %1942 = vmatprep.subr.mxu0 0.0
      %1943 = vmatpush1.msra.mxu0 0.0
      %1944 = vmatprep.subr.mxu0 0.0
      %1945 = vmatpush1.msra.mxu0 0.0
      %1946 = vmatprep.subr.mxu0 0.0
      %1947 = vmatpush1.msra.mxu0 0.0
      %1948 = vmatprep.subr.mxu0 0.0
      %1949 = vmatpush1.msra.mxu0 0.0
      %1950 = vmatprep.subr.mxu0 0.0
      %1951 = vmatpush1.msra.mxu0 0.0
      %1952 = vmatprep.subr.mxu0 0.0
      %1953 = vmatpush1.msra.mxu0 0.0
      %1954 = vmatprep.subr.mxu0 0.0
      %1955 = vmatpush1.msra.mxu0 0.0
      %1956 = vmatprep.subr.mxu0 0.0
      %1957 = vmatpush1.msra.mxu0 0.0
      %1958 = vmatprep.subr.mxu0 0.0
      %1959 = vmatpush1.msra.mxu0 0.0
      %1960 = vmatprep.subr.mxu0 0.0
      %1961 = vmatpush1.msra.mxu0 0.0
      %1962 = vmatprep.subr.mxu0 0.0
      %1963 = vmatpush1.msra.mxu0 0.0
      %1964 = vmatprep.subr.mxu0 0.0
      %1965 = vmatpush1.msra.mxu0 0.0
      %1966 = vmatprep.subr.mxu0 0.0
      %1967 = vmatpush1.msra.mxu0 0.0
      %1968 = vmatprep.subr.mxu0 0.0
      %1969 = vmatpush1.msra.mxu0 0.0
      %1970 = vmatprep.subr.mxu0 0.0
      %1971 = vmatpush1.msra.mxu0 0.0
      %1972 = vmatprep.subr.mxu0 0.0
      %1973 = vmatpush1.msra.mxu0 0.0
      %1974 = vmatprep.mubr.f32.mxu0 0.0
      %1975 = vmatmul.mubr.f32.gmra.mrb[0].mxu0 %v1908
      %v1976 = vpop.f32.mrb[0].mxu0
      %v1977 = vadd.f32 0.0, %v1976
      %v1978 = vpop.f32.mrb[0].mxu0
      %1979 = vdwg.mxu0
      %1980 = vrot.lane.b32.xlu0 %v981, 104
      %v1981 = vpop.permute.xlu0 %1980
      %1982 = vrot.lane.b32.xlu0 %v973, 72
      %v1983 = vpop.permute.xlu0 %1982
      %v1984 = vsel %vm986, %v1981, 0
      %v1986 = vsel %vm986, %v1983, 0
      %1988 = vmatprep.subr.mxu0 0.0
      %1989 = vmatpush1.xpose.msra.mxu0 %v1986
      %1990 = vmatprep.subr.mxu0 0.0
      %1991 = vmatpush1.xpose.msra.mxu0 0.0
      %1992 = vmatprep.subr.mxu0 0.0
      %1993 = vmatpush1.xpose.msra.mxu0 0.0
      %1994 = vmatprep.subr.mxu0 0.0
      %1995 = vmatpush1.xpose.msra.mxu0 0.0
      %1996 = vmatprep.subr.mxu0 0.0
      %1997 = vmatpush1.xpose.msra.mxu0 0.0
      %1998 = vmatprep.subr.mxu0 0.0
      %1999 = vmatpush1.xpose.msra.mxu0 0.0
      %2000 = vmatprep.subr.mxu0 0.0
      %2001 = vmatpush1.xpose.msra.mxu0 0.0
      %2002 = vmatprep.subr.mxu0 0.0
      %2003 = vmatpush1.xpose.msra.mxu0 0.0
      %2004 = vmatprep.subr.mxu0 0.0
      %2005 = vmatpush1.xpose.msra.mxu0 0.0
      %2006 = vmatprep.subr.mxu0 0.0
      %2007 = vmatpush1.xpose.msra.mxu0 0.0
      %2008 = vmatprep.subr.mxu0 0.0
      %2009 = vmatpush1.xpose.msra.mxu0 0.0
      %2010 = vmatprep.subr.mxu0 0.0
      %2011 = vmatpush1.xpose.msra.mxu0 0.0
      %2012 = vmatprep.subr.mxu0 0.0
      %2013 = vmatpush1.xpose.msra.mxu0 0.0
      %2014 = vmatprep.subr.mxu0 0.0
      %2015 = vmatpush1.xpose.msra.mxu0 0.0
      %2016 = vmatprep.subr.mxu0 0.0
      %2017 = vmatpush1.xpose.msra.mxu0 0.0
      %2018 = vmatprep.subr.mxu0 0.0
      %2019 = vmatpush1.xpose.msra.mxu0 0.0
      %2020 = vmatprep.subr.mxu0 0.0
      %2021 = vmatpush1.xpose.msra.mxu0 0.0
      %2022 = vmatprep.subr.mxu0 0.0
      %2023 = vmatpush1.xpose.msra.mxu0 0.0
      %2024 = vmatprep.subr.mxu0 0.0
      %2025 = vmatpush1.xpose.msra.mxu0 0.0
      %2026 = vmatprep.subr.mxu0 0.0
      %2027 = vmatpush1.xpose.msra.mxu0 0.0
      %2028 = vmatprep.subr.mxu0 0.0
      %2029 = vmatpush1.xpose.msra.mxu0 0.0
      %2030 = vmatprep.subr.mxu0 0.0
      %2031 = vmatpush1.xpose.msra.mxu0 0.0
      %2032 = vmatprep.subr.mxu0 0.0
      %2033 = vmatpush1.xpose.msra.mxu0 0.0
      %2034 = vmatprep.subr.mxu0 0.0
      %2035 = vmatpush1.xpose.msra.mxu0 0.0
      %2036 = vmatprep.subr.mxu0 0.0
      %2037 = vmatpush1.xpose.msra.mxu0 0.0
      %2038 = vmatprep.subr.mxu0 0.0
      %2039 = vmatpush1.xpose.msra.mxu0 0.0
      %2040 = vmatprep.subr.mxu0 0.0
      %2041 = vmatpush1.xpose.msra.mxu0 0.0
      %2042 = vmatprep.subr.mxu0 0.0
      %2043 = vmatpush1.xpose.msra.mxu0 0.0
      %2044 = vmatprep.subr.mxu0 0.0
      %2045 = vmatpush1.xpose.msra.mxu0 0.0
      %2046 = vmatprep.subr.mxu0 0.0
      %2047 = vmatpush1.xpose.msra.mxu0 0.0
      %2048 = vmatprep.subr.mxu0 0.0
      %2049 = vmatpush1.xpose.msra.mxu0 0.0
      %2050 = vmatprep.subr.mxu0 0.0
      %2051 = vmatpush1.xpose.msra.mxu0 0.0
      %2052 = vmatprep.mubr.f32.mxu0 0.0
      %2053 = vmatmul.mubr.f32.gmra.mrb[0].mxu0 %v1984
      %v2054 = vpop.f32.mrb[0].mxu0
      %v2055 = vadd.f32 0.0, %v2054
      %v2056 = vpop.f32.mrb[0].mxu0
      %2057 = vdwg.mxu0
      %2058 = vrot.lane.b32.xlu0 %v982, 104
      %v2059 = vpop.permute.xlu0 %2058
      %2060 = vrot.lane.b32.xlu0 %v978, 72
      %v2061 = vpop.permute.xlu0 %2060
      %v2062 = vsel %vm986, %v2059, 0
      %v2064 = vsel %vm986, %v2061, 0
      %2066 = vmatprep.subr.mxu0 0.0
      %2067 = vmatpush1.xpose.msra.mxu0 %v2064
      %2068 = vmatprep.subr.mxu0 0.0
      %2069 = vmatpush1.xpose.msra.mxu0 0.0
      %2070 = vmatprep.subr.mxu0 0.0
      %2071 = vmatpush1.xpose.msra.mxu0 0.0
      %2072 = vmatprep.subr.mxu0 0.0
      %2073 = vmatpush1.xpose.msra.mxu0 0.0
      %2074 = vmatprep.subr.mxu0 0.0
      %2075 = vmatpush1.xpose.msra.mxu0 0.0
      %2076 = vmatprep.subr.mxu0 0.0
      %2077 = vmatpush1.xpose.msra.mxu0 0.0
      %2078 = vmatprep.subr.mxu0 0.0
      %2079 = vmatpush1.xpose.msra.mxu0 0.0
      %2080 = vmatprep.subr.mxu0 0.0
      %2081 = vmatpush1.xpose.msra.mxu0 0.0
      %2082 = vmatprep.subr.mxu0 0.0
      %2083 = vmatpush1.xpose.msra.mxu0 0.0
      %2084 = vmatprep.subr.mxu0 0.0
      %2085 = vmatpush1.xpose.msra.mxu0 0.0
      %2086 = vmatprep.subr.mxu0 0.0
      %2087 = vmatpush1.xpose.msra.mxu0 0.0
      %2088 = vmatprep.subr.mxu0 0.0
      %2089 = vmatpush1.xpose.msra.mxu0 0.0
      %2090 = vmatprep.subr.mxu0 0.0
      %2091 = vmatpush1.xpose.msra.mxu0 0.0
      %2092 = vmatprep.subr.mxu0 0.0
      %2093 = vmatpush1.xpose.msra.mxu0 0.0
      %2094 = vmatprep.subr.mxu0 0.0
      %2095 = vmatpush1.xpose.msra.mxu0 0.0
      %2096 = vmatprep.subr.mxu0 0.0
      %2097 = vmatpush1.xpose.msra.mxu0 0.0
      %2098 = vmatprep.subr.mxu0 0.0
      %2099 = vmatpush1.xpose.msra.mxu0 0.0
      %2100 = vmatprep.subr.mxu0 0.0
      %2101 = vmatpush1.xpose.msra.mxu0 0.0
      %2102 = vmatprep.subr.mxu0 0.0
      %2103 = vmatpush1.xpose.msra.mxu0 0.0
      %2104 = vmatprep.subr.mxu0 0.0
      %2105 = vmatpush1.xpose.msra.mxu0 0.0
      %2106 = vmatprep.subr.mxu0 0.0
      %2107 = vmatpush1.xpose.msra.mxu0 0.0
      %2108 = vmatprep.subr.mxu0 0.0
      %2109 = vmatpush1.xpose.msra.mxu0 0.0
      %2110 = vmatprep.subr.mxu0 0.0
      %2111 = vmatpush1.xpose.msra.mxu0 0.0
      %2112 = vmatprep.subr.mxu0 0.0
      %2113 = vmatpush1.xpose.msra.mxu0 0.0
      %2114 = vmatprep.subr.mxu0 0.0
      %2115 = vmatpush1.xpose.msra.mxu0 0.0
      %2116 = vmatprep.subr.mxu0 0.0
      %2117 = vmatpush1.xpose.msra.mxu0 0.0
      %2118 = vmatprep.subr.mxu0 0.0
      %2119 = vmatpush1.xpose.msra.mxu0 0.0
      %2120 = vmatprep.subr.mxu0 0.0
      %2121 = vmatpush1.xpose.msra.mxu0 0.0
      %2122 = vmatprep.subr.mxu0 0.0
      %2123 = vmatpush1.xpose.msra.mxu0 0.0
      %2124 = vmatprep.subr.mxu0 0.0
      %2125 = vmatpush1.xpose.msra.mxu0 0.0
      %2126 = vmatprep.subr.mxu0 0.0
      %2127 = vmatpush1.xpose.msra.mxu0 0.0
      %2128 = vmatprep.subr.mxu0 0.0
      %2129 = vmatpush1.xpose.msra.mxu0 0.0
      %2130 = vmatprep.mubr.f32.mxu0 0.0
      %2131 = vmatmul.mubr.f32.gmra.mrb[0].mxu0 %v2062
      %v2132 = vpop.f32.mrb[0].mxu0
      %v2133 = vadd.f32 0.0, %v2132
      %v2134 = vpop.f32.mrb[0].mxu0
      %2135 = vdwg.mxu0
      %v2136 = vsel %vm986, %v2055, -inf
      %2137 = vmax.xlane.f32.xlu0 %v2136
      %v2138 = vpop.xlane.xlu0 %2137
      %v2139 = vsel %vm986, %v2133, -inf
      %2140 = vmax.xlane.f32.xlu0 %v2139
      %v2141 = vpop.xlane.xlu0 %2140
      %v2142 = vsub.f32 %v2055, %v2138
      %v2143 = vsub.f32 %v2133, %v2141
      %v2144 = vmul.f32 %v2142, 1.442695
      %v2145 = vpow.pop %v2144
      %v2146 = vmul.f32 %v2143, 1.442695
      %v2147 = vpow.pop %v2146
      %v2148 = vsel %vm986, %v2145, 0.0
      %2149 = vadd.xlane.f32.xlu0 %v2148
      %v2150 = vpop.xlane.xlu0 %2149
      %v2151 = vsel %vm986, %v2147, 0.0
      %2152 = vadd.xlane.f32.xlu0 %v2151
      %v2153 = vpop.xlane.xlu0 %2152
      %v2154 = vrcp.pop %v2150
      %v2155 = vmul.f32 %v2145, %v2154
      %v2156 = vrcp.pop %v2153
      %v2157 = vmul.f32 %v2147, %v2156
      %v2158 = vadd.f32 %v1826, %v2155
      %v2159 = vadd.f32 %v1827, %v2157
      %2160 = vrot.lane.b32.xlu0 %v973, 40
      %v2161 = vpop.permute.xlu0 %2160
      %v2164 = vsel %vm986, %v2155, 0
      %2166 = vmatprep.subr.mxu0 0.0
      %2167 = vmatpush1.msra.mxu0 %v2161
      %2168 = vmatprep.subr.mxu0 0.0
      %2169 = vmatpush1.msra.mxu0 0.0
      %2170 = vmatprep.subr.mxu0 0.0
      %2171 = vmatpush1.msra.mxu0 0.0
      %2172 = vmatprep.subr.mxu0 0.0
      %2173 = vmatpush1.msra.mxu0 0.0
      %2174 = vmatprep.subr.mxu0 0.0
      %2175 = vmatpush1.msra.mxu0 0.0
      %2176 = vmatprep.subr.mxu0 0.0
      %2177 = vmatpush1.msra.mxu0 0.0
      %2178 = vmatprep.subr.mxu0 0.0
      %2179 = vmatpush1.msra.mxu0 0.0
      %2180 = vmatprep.subr.mxu0 0.0
      %2181 = vmatpush1.msra.mxu0 0.0
      %2182 = vmatprep.subr.mxu0 0.0
      %2183 = vmatpush1.msra.mxu0 0.0
      %2184 = vmatprep.subr.mxu0 0.0
      %2185 = vmatpush1.msra.mxu0 0.0
      %2186 = vmatprep.subr.mxu0 0.0
      %2187 = vmatpush1.msra.mxu0 0.0
      %2188 = vmatprep.subr.mxu0 0.0
      %2189 = vmatpush1.msra.mxu0 0.0
      %2190 = vmatprep.subr.mxu0 0.0
      %2191 = vmatpush1.msra.mxu0 0.0
      %2192 = vmatprep.subr.mxu0 0.0
      %2193 = vmatpush1.msra.mxu0 0.0
      %2194 = vmatprep.subr.mxu0 0.0
      %2195 = vmatpush1.msra.mxu0 0.0
      %2196 = vmatprep.subr.mxu0 0.0
      %2197 = vmatpush1.msra.mxu0 0.0
      %2198 = vmatprep.subr.mxu0 0.0
      %2199 = vmatpush1.msra.mxu0 0.0
      %2200 = vmatprep.subr.mxu0 0.0
      %2201 = vmatpush1.msra.mxu0 0.0
      %2202 = vmatprep.subr.mxu0 0.0
      %2203 = vmatpush1.msra.mxu0 0.0
      %2204 = vmatprep.subr.mxu0 0.0
      %2205 = vmatpush1.msra.mxu0 0.0
      %2206 = vmatprep.subr.mxu0 0.0
      %2207 = vmatpush1.msra.mxu0 0.0
      %2208 = vmatprep.subr.mxu0 0.0
      %2209 = vmatpush1.msra.mxu0 0.0
      %2210 = vmatprep.subr.mxu0 0.0
      %2211 = vmatpush1.msra.mxu0 0.0
      %2212 = vmatprep.subr.mxu0 0.0
      %2213 = vmatpush1.msra.mxu0 0.0
      %2214 = vmatprep.subr.mxu0 0.0
      %2215 = vmatpush1.msra.mxu0 0.0
      %2216 = vmatprep.subr.mxu0 0.0
      %2217 = vmatpush1.msra.mxu0 0.0
      %2218 = vmatprep.subr.mxu0 0.0
      %2219 = vmatpush1.msra.mxu0 0.0
      %2220 = vmatprep.subr.mxu0 0.0
      %2221 = vmatpush1.msra.mxu0 0.0
      %2222 = vmatprep.subr.mxu0 0.0
      %2223 = vmatpush1.msra.mxu0 0.0
      %2224 = vmatprep.subr.mxu0 0.0
      %2225 = vmatpush1.msra.mxu0 0.0
      %2226 = vmatprep.subr.mxu0 0.0
      %2227 = vmatpush1.msra.mxu0 0.0
      %2228 = vmatprep.subr.mxu0 0.0
      %2229 = vmatpush1.msra.mxu0 0.0
      %2230 = vmatprep.mubr.f32.mxu0 0.0
      %2231 = vmatmul.mubr.f32.gmra.mrb[0].mxu0 %v2164
      %v2232 = vpop.f32.mrb[0].mxu0
      %v2233 = vadd.f32 0.0, %v2232
      %v2234 = vpop.f32.mrb[0].mxu0
      %2235 = vdwg.mxu0
      %2236 = vrot.lane.b32.xlu0 %v978, 40
      %v2237 = vpop.permute.xlu0 %2236
      %v2240 = vsel %vm986, %v2157, 0
      %2242 = vmatprep.subr.mxu0 0.0
      %2243 = vmatpush1.msra.mxu0 %v2237
      %2244 = vmatprep.subr.mxu0 0.0
      %2245 = vmatpush1.msra.mxu0 0.0
      %2246 = vmatprep.subr.mxu0 0.0
      %2247 = vmatpush1.msra.mxu0 0.0
      %2248 = vmatprep.subr.mxu0 0.0
      %2249 = vmatpush1.msra.mxu0 0.0
      %2250 = vmatprep.subr.mxu0 0.0
      %2251 = vmatpush1.msra.mxu0 0.0
      %2252 = vmatprep.subr.mxu0 0.0
      %2253 = vmatpush1.msra.mxu0 0.0
      %2254 = vmatprep.subr.mxu0 0.0
      %2255 = vmatpush1.msra.mxu0 0.0
      %2256 = vmatprep.subr.mxu0 0.0
      %2257 = vmatpush1.msra.mxu0 0.0
      %2258 = vmatprep.subr.mxu0 0.0
      %2259 = vmatpush1.msra.mxu0 0.0
      %2260 = vmatprep.subr.mxu0 0.0
      %2261 = vmatpush1.msra.mxu0 0.0
      %2262 = vmatprep.subr.mxu0 0.0
      %2263 = vmatpush1.msra.mxu0 0.0
      %2264 = vmatprep.subr.mxu0 0.0
      %2265 = vmatpush1.msra.mxu0 0.0
      %2266 = vmatprep.subr.mxu0 0.0
      %2267 = vmatpush1.msra.mxu0 0.0
      %2268 = vmatprep.subr.mxu0 0.0
      %2269 = vmatpush1.msra.mxu0 0.0
      %2270 = vmatprep.subr.mxu0 0.0
      %2271 = vmatpush1.msra.mxu0 0.0
      %2272 = vmatprep.subr.mxu0 0.0
      %2273 = vmatpush1.msra.mxu0 0.0
      %2274 = vmatprep.subr.mxu0 0.0
      %2275 = vmatpush1.msra.mxu0 0.0
      %2276 = vmatprep.subr.mxu0 0.0
      %2277 = vmatpush1.msra.mxu0 0.0
      %2278 = vmatprep.subr.mxu0 0.0
      %2279 = vmatpush1.msra.mxu0 0.0
      %2280 = vmatprep.subr.mxu0 0.0
      %2281 = vmatpush1.msra.mxu0 0.0
      %2282 = vmatprep.subr.mxu0 0.0
      %2283 = vmatpush1.msra.mxu0 0.0
      %2284 = vmatprep.subr.mxu0 0.0
      %2285 = vmatpush1.msra.mxu0 0.0
      %2286 = vmatprep.subr.mxu0 0.0
      %2287 = vmatpush1.msra.mxu0 0.0
      %2288 = vmatprep.subr.mxu0 0.0
      %2289 = vmatpush1.msra.mxu0 0.0
      %2290 = vmatprep.subr.mxu0 0.0
      %2291 = vmatpush1.msra.mxu0 0.0
      %2292 = vmatprep.subr.mxu0 0.0
      %2293 = vmatpush1.msra.mxu0 0.0
      %2294 = vmatprep.subr.mxu0 0.0
      %2295 = vmatpush1.msra.mxu0 0.0
      %2296 = vmatprep.subr.mxu0 0.0
      %2297 = vmatpush1.msra.mxu0 0.0
      %2298 = vmatprep.subr.mxu0 0.0
      %2299 = vmatpush1.msra.mxu0 0.0
      %2300 = vmatprep.subr.mxu0 0.0
      %2301 = vmatpush1.msra.mxu0 0.0
      %2302 = vmatprep.subr.mxu0 0.0
      %2303 = vmatpush1.msra.mxu0 0.0
      %2304 = vmatprep.subr.mxu0 0.0
      %2305 = vmatpush1.msra.mxu0 0.0
      %2306 = vmatprep.mubr.f32.mxu0 0.0
      %2307 = vmatmul.mubr.f32.gmra.mrb[0].mxu0 %v2240
      %v2308 = vpop.f32.mrb[0].mxu0
      %v2309 = vadd.f32 0.0, %v2308
      %v2310 = vpop.f32.mrb[0].mxu0
      %2311 = vdwg.mxu0
      %v2312 = vmul.f32 %v2158, 0.25
      %v2313 = vmul.f32 %v2159, 0.25
      %2314 = vst.msk [vmem:[%s868] sm:$0xff] %vm986, %v2312
      %2315 = vst.msk [vmem:[%s868 + $0x8] sm:$0xff] %vm986, %v2313
      %2318 = vrot.lane.b32.xlu0 %v1569, 8
      %v2319 = vpop.permute.xlu0 %2318
      %2320 = vrot.lane.b32.xlu0 %v1645, 8
      %v2321 = vpop.permute.xlu0 %2320
      %2326 = vrot.lane.b32.xlu0 %v1901, 16
      %v2327 = vpop.permute.xlu0 %2326
      %2328 = vrot.lane.b32.xlu0 %v1977, 16
      %v2329 = vpop.permute.xlu0 %2328
      %2334 = vrot.lane.b32.xlu0 %v2233, 24
      %v2335 = vpop.permute.xlu0 %2334
      %2336 = vrot.lane.b32.xlu0 %v2309, 24
      %v2337 = vpop.permute.xlu0 %2336
      %v2340 = vsel %vm986, %v1237, %v2319
      %v2341 = vsel %vm986, %v1313, %v2321
      %vm2342 = vcmask 130048
      %v2343 = vsel %vm2342, %v2340, %v2327
      %v2344 = vsel %vm2342, %v2341, %v2329
      %vm2345 = vcmask 195584
      %v2346 = vsel %vm2345, %v2343, %v2335
      %v2347 = vsel %vm2345, %v2344, %v2337
      %v2348 = vld [vmem:[%s806] sm:$0xff]
      %v2349 = vld [vmem:[%s806 + $0x8] sm:$0xff]
      %v2350 = vld [vmem:[%s806 + $0x10] sm:$0xff]
      %v2351 = vld [vmem:[%s806 + $0x18] sm:$0xff]
      %v2352 = vld [vmem:[%s809] sm:$0x1]
      %v2354 = vlaneseq
      %v2355 = vshrl.u32 %v2354, 7
      %v2356 = vsub.s32 0, %v2355
      %v2357 = vrot.slane %v2352, %v2356
      %v2360 = vsel %vm899, %v2346, 0
      %v2363 = vsel %vm899, %v2347, 0
      %2365 = vmatprep.subr.mxu0 0.0
      %2366 = vmatpush1.msra.mxu0 %v2348
      %2367 = vmatprep.subr.mxu0 0.0
      %2368 = vmatpush1.msra.mxu0 %v2349
      %2369 = vmatprep.subr.mxu0 0.0
      %2370 = vmatpush1.msra.mxu0 %v2350
      %2371 = vmatprep.subr.mxu0 0.0
      %2372 = vmatpush1.msra.mxu0 %v2351
      %2373 = vmatprep.subr.mxu0 0.0
      %2374 = vmatpush1.msra.mxu0 0.0
      %2375 = vmatprep.subr.mxu0 0.0
      %2376 = vmatpush1.msra.mxu0 0.0
      %2377 = vmatprep.subr.mxu0 0.0
      %2378 = vmatpush1.msra.mxu0 0.0
      %2379 = vmatprep.subr.mxu0 0.0
      %2380 = vmatpush1.msra.mxu0 0.0
      %2381 = vmatprep.subr.mxu0 0.0
      %2382 = vmatpush1.msra.mxu0 0.0
      %2383 = vmatprep.subr.mxu0 0.0
      %2384 = vmatpush1.msra.mxu0 0.0
      %2385 = vmatprep.subr.mxu0 0.0
      %2386 = vmatpush1.msra.mxu0 0.0
      %2387 = vmatprep.subr.mxu0 0.0
      %2388 = vmatpush1.msra.mxu0 0.0
      %2389 = vmatprep.subr.mxu0 0.0
      %2390 = vmatpush1.msra.mxu0 0.0
      %2391 = vmatprep.subr.mxu0 0.0
      %2392 = vmatpush1.msra.mxu0 0.0
      %2393 = vmatprep.subr.mxu0 0.0
      %2394 = vmatpush1.msra.mxu0 0.0
      %2395 = vmatprep.subr.mxu0 0.0
      %2396 = vmatpush1.msra.mxu0 0.0
      %2397 = vmatprep.subr.mxu0 0.0
      %2398 = vmatpush1.msra.mxu0 0.0
      %2399 = vmatprep.subr.mxu0 0.0
      %2400 = vmatpush1.msra.mxu0 0.0
      %2401 = vmatprep.subr.mxu0 0.0
      %2402 = vmatpush1.msra.mxu0 0.0
      %2403 = vmatprep.subr.mxu0 0.0
      %2404 = vmatpush1.msra.mxu0 0.0
      %2405 = vmatprep.subr.mxu0 0.0
      %2406 = vmatpush1.msra.mxu0 0.0
      %2407 = vmatprep.subr.mxu0 0.0
      %2408 = vmatpush1.msra.mxu0 0.0
      %2409 = vmatprep.subr.mxu0 0.0
      %2410 = vmatpush1.msra.mxu0 0.0
      %2411 = vmatprep.subr.mxu0 0.0
      %2412 = vmatpush1.msra.mxu0 0.0
      %2413 = vmatprep.subr.mxu0 0.0
      %2414 = vmatpush1.msra.mxu0 0.0
      %2415 = vmatprep.subr.mxu0 0.0
      %2416 = vmatpush1.msra.mxu0 0.0
      %2417 = vmatprep.subr.mxu0 0.0
      %2418 = vmatpush1.msra.mxu0 0.0
      %2419 = vmatprep.subr.mxu0 0.0
      %2420 = vmatpush1.msra.mxu0 0.0
      %2421 = vmatprep.subr.mxu0 0.0
      %2422 = vmatpush1.msra.mxu0 0.0
      %2423 = vmatprep.subr.mxu0 0.0
      %2424 = vmatpush1.msra.mxu0 0.0
      %2425 = vmatprep.subr.mxu0 0.0
      %2426 = vmatpush1.msra.mxu0 0.0
      %2427 = vmatprep.subr.mxu0 0.0
      %2428 = vmatpush1.msra.mxu0 0.0
      %2429 = vmatprep.mubr.f32.mxu0 0.0
      %2430 = vmatmul.mubr.f32.gmra.mrb[0].mxu0 %v2360
      %v2431 = vpop.f32.mrb[0].mxu0
      %v2432 = vadd.f32 %v2357, %v2431
      %v2433 = vpop.f32.mrb[0].mxu0
      %2434 = vmatprep.mubr.f32.mxu0 0.0
      %2435 = vmatmul.mubr.f32.gmra.mrb[0].mxu0 %v2363
      %v2436 = vpop.f32.mrb[0].mxu0
      %v2437 = vadd.f32 %v2357, %v2436
      %v2438 = vpop.f32.mrb[0].mxu0
      %2439 = vdwg.mxu0
      %v2440 = vadd.f32 %v886, %v2432
      %v2441 = vadd.f32 %v887, %v2437
      %v2442 = vld [vmem:[%s828] sm:$0x1]
      %v2443 = vld [vmem:[%s831] sm:$0x1]
      %v2444 = vsel %vm899, %v2440, 0.0
      %2445 = vadd.xlane.f32.xlu0 %v2444
      %v2446 = vpop.xlane.xlu0 %2445
      %v2447 = vsel %vm899, %v2441, 0.0
      %2448 = vadd.xlane.f32.xlu0 %v2447
      %v2449 = vpop.xlane.xlu0 %2448
      %v2450 = vrcp.pop 32.0
      %v2451 = vmul.f32 %v2446, %v2450
      %v2452 = vmul.f32 %v2449, %v2450
      %v2453 = vsub.f32 %v2440, %v2451
      %v2454 = vsub.f32 %v2441, %v2452
      %v2455 = vmul.f32 %v2453, %v2453
      %v2456 = vmul.f32 %v2454, %v2454
      %v2457 = vsel %vm899, %v2455, 0.0
      %2458 = vadd.xlane.f32.xlu0 %v2457
      %v2459 = vpop.xlane.xlu0 %2458
      %v2460 = vsel %vm899, %v2456, 0.0
      %2461 = vadd.xlane.f32.xlu0 %v2460
      %v2462 = vpop.xlane.xlu0 %2461
      %v2463 = vmul.f32 %v2459, %v2450
      %v2464 = vmul.f32 %v2462, %v2450
      %v2465 = vadd.f32 %v2463, 1e-05
      %v2466 = vadd.f32 %v2464, 1e-05
      %v2467 = vrsqrt.pop %v2465
      %v2468 = vrsqrt.pop %v2466
      %v2469 = vmul.f32 %v2453, %v2467
      %v2470 = vmul.f32 %v2454, %v2468
      %v2472 = vlaneseq
      %v2473 = vshrl.u32 %v2472, 7
      %v2474 = vsub.s32 0, %v2473
      %v2475 = vrot.slane %v2442, %v2474
      %v2477 = vmul.f32 %v2469, %v2475
      %v2478 = vmul.f32 %v2470, %v2475
      %v2480 = vlaneseq
      %v2481 = vshrl.u32 %v2480, 7
      %v2482 = vsub.s32 0, %v2481
      %v2483 = vrot.slane %v2443, %v2482
      %v2485 = vadd.f32 %v2477, %v2483
      %v2486 = vadd.f32 %v2478, %v2483
      %v2487 = vld [vmem:[%s814] sm:$0xff]
      %v2488 = vld [vmem:[%s814 + $0x8] sm:$0xff]
      %v2489 = vld [vmem:[%s814 + $0x10] sm:$0xff]
      %v2490 = vld [vmem:[%s814 + $0x18] sm:$0xff]
      %v2491 = vld [vmem:[%s817] sm:$0x1]
      %v2493 = vlaneseq
      %v2494 = vshrl.u32 %v2493, 7
      %v2495 = vsub.s32 0, %v2494
      %v2496 = vrot.slane %v2491, %v2495
      %v2499 = vsel %vm899, %v2485, 0
      %v2502 = vsel %vm899, %v2486, 0
      %2504 = vmatprep.subr.mxu0 0.0
      %2505 = vmatpush1.msra.mxu0 %v2487
      %2506 = vmatprep.subr.mxu0 0.0
      %2507 = vmatpush1.msra.mxu0 %v2488
      %2508 = vmatprep.subr.mxu0 0.0
      %2509 = vmatpush1.msra.mxu0 %v2489
      %2510 = vmatprep.subr.mxu0 0.0
      %2511 = vmatpush1.msra.mxu0 %v2490
      %2512 = vmatprep.subr.mxu0 0.0
      %2513 = vmatpush1.msra.mxu0 0.0
      %2514 = vmatprep.subr.mxu0 0.0
      %2515 = vmatpush1.msra.mxu0 0.0
      %2516 = vmatprep.subr.mxu0 0.0
      %2517 = vmatpush1.msra.mxu0 0.0
      %2518 = vmatprep.subr.mxu0 0.0
      %2519 = vmatpush1.msra.mxu0 0.0
      %2520 = vmatprep.subr.mxu0 0.0
      %2521 = vmatpush1.msra.mxu0 0.0
      %2522 = vmatprep.subr.mxu0 0.0
      %2523 = vmatpush1.msra.mxu0 0.0
      %2524 = vmatprep.subr.mxu0 0.0
      %2525 = vmatpush1.msra.mxu0 0.0
      %2526 = vmatprep.subr.mxu0 0.0
      %2527 = vmatpush1.msra.mxu0 0.0
      %2528 = vmatprep.subr.mxu0 0.0
      %2529 = vmatpush1.msra.mxu0 0.0
      %2530 = vmatprep.subr.mxu0 0.0
      %2531 = vmatpush1.msra.mxu0 0.0
      %2532 = vmatprep.subr.mxu0 0.0
      %2533 = vmatpush1.msra.mxu0 0.0
      %2534 = vmatprep.subr.mxu0 0.0
      %2535 = vmatpush1.msra.mxu0 0.0
      %2536 = vmatprep.subr.mxu0 0.0
      %2537 = vmatpush1.msra.mxu0 0.0
      %2538 = vmatprep.subr.mxu0 0.0
      %2539 = vmatpush1.msra.mxu0 0.0
      %2540 = vmatprep.subr.mxu0 0.0
      %2541 = vmatpush1.msra.mxu0 0.0
      %2542 = vmatprep.subr.mxu0 0.0
      %2543 = vmatpush1.msra.mxu0 0.0
      %2544 = vmatprep.subr.mxu0 0.0
      %2545 = vmatpush1.msra.mxu0 0.0
      %2546 = vmatprep.subr.mxu0 0.0
      %2547 = vmatpush1.msra.mxu0 0.0
      %2548 = vmatprep.subr.mxu0 0.0
      %2549 = vmatpush1.msra.mxu0 0.0
      %2550 = vmatprep.subr.mxu0 0.0
      %2551 = vmatpush1.msra.mxu0 0.0
      %2552 = vmatprep.subr.mxu0 0.0
      %2553 = vmatpush1.msra.mxu0 0.0
      %2554 = vmatprep.subr.mxu0 0.0
      %2555 = vmatpush1.msra.mxu0 0.0
      %2556 = vmatprep.subr.mxu0 0.0
      %2557 = vmatpush1.msra.mxu0 0.0
      %2558 = vmatprep.subr.mxu0 0.0
      %2559 = vmatpush1.msra.mxu0 0.0
      %2560 = vmatprep.subr.mxu0 0.0
      %2561 = vmatpush1.msra.mxu0 0.0
      %2562 = vmatprep.subr.mxu0 0.0
      %2563 = vmatpush1.msra.mxu0 0.0
      %2564 = vmatprep.subr.mxu0 0.0
      %2565 = vmatpush1.msra.mxu0 0.0
      %2566 = vmatprep.subr.mxu0 0.0
      %2567 = vmatpush1.msra.mxu0 0.0
      %2568 = vmatprep.mubr.f32.mxu0 0.0
      %2569 = vmatmul.mubr.f32.gmra.mrb[0].mxu0 %v2499
      %v2570 = vpop.f32.mrb[0].mxu0
      %v2571 = vadd.f32 %v2496, %v2570
      %v2572 = vpop.f32.mrb[0].mxu0
      %2573 = vmatprep.mubr.f32.mxu0 0.0
      %2574 = vmatmul.mubr.f32.gmra.mrb[0].mxu0 %v2502
      %v2575 = vpop.f32.mrb[0].mxu0
      %v2576 = vadd.f32 %v2496, %v2575
      %v2577 = vpop.f32.mrb[0].mxu0
      %2578 = vdwg.mxu0
      %v2579 = vmax.f32 %v2571, 0.0
      %v2580 = vmax.f32 %v2576, 0.0
      %v2581 = vld [vmem:[%s822] sm:$0xff]
      %v2582 = vld [vmem:[%s822 + $0x8] sm:$0xff]
      %v2583 = vld [vmem:[%s822 + $0x10] sm:$0xff]
      %v2584 = vld [vmem:[%s822 + $0x18] sm:$0xff]
      %v2585 = vld [vmem:[%s822 + $0x20] sm:$0xff]
      %v2586 = vld [vmem:[%s822 + $0x28] sm:$0xff]
      %v2587 = vld [vmem:[%s822 + $0x30] sm:$0xff]
      %v2588 = vld [vmem:[%s822 + $0x38] sm:$0xff]
      %v2589 = vld [vmem:[%s822 + $0x40] sm:$0xff]
      %v2590 = vld [vmem:[%s822 + $0x48] sm:$0xff]
      %v2591 = vld [vmem:[%s822 + $0x50] sm:$0xff]
      %v2592 = vld [vmem:[%s822 + $0x58] sm:$0xff]
      %v2593 = vld [vmem:[%s822 + $0x60] sm:$0xff]
      %v2594 = vld [vmem:[%s822 + $0x68] sm:$0xff]
      %v2595 = vld [vmem:[%s822 + $0x70] sm:$0xff]
      %v2596 = vld [vmem:[%s822 + $0x78] sm:$0xff]
      %v2597 = vld [vmem:[%s825] sm:$0x1]
      %v2599 = vlaneseq
      %v2600 = vshrl.u32 %v2599, 7
      %v2601 = vsub.s32 0, %v2600
      %v2602 = vrot.slane %v2597, %v2601
      %2604 = vmatprep.subr.mxu0 0.0
      %2605 = vmatpush1.msra.mxu0 %v2581
      %2606 = vmatprep.subr.mxu0 0.0
      %2607 = vmatpush1.msra.mxu0 %v2582
      %2608 = vmatprep.subr.mxu0 0.0
      %2609 = vmatpush1.msra.mxu0 %v2583
      %2610 = vmatprep.subr.mxu0 0.0
      %2611 = vmatpush1.msra.mxu0 %v2584
      %2612 = vmatprep.subr.mxu0 0.0
      %2613 = vmatpush1.msra.mxu0 %v2585
      %2614 = vmatprep.subr.mxu0 0.0
      %2615 = vmatpush1.msra.mxu0 %v2586
      %2616 = vmatprep.subr.mxu0 0.0
      %2617 = vmatpush1.msra.mxu0 %v2587
      %2618 = vmatprep.subr.mxu0 0.0
      %2619 = vmatpush1.msra.mxu0 %v2588
      %2620 = vmatprep.subr.mxu0 0.0
      %2621 = vmatpush1.msra.mxu0 %v2589
      %2622 = vmatprep.subr.mxu0 0.0
      %2623 = vmatpush1.msra.mxu0 %v2590
      %2624 = vmatprep.subr.mxu0 0.0
      %2625 = vmatpush1.msra.mxu0 %v2591
      %2626 = vmatprep.subr.mxu0 0.0
      %2627 = vmatpush1.msra.mxu0 %v2592
      %2628 = vmatprep.subr.mxu0 0.0
      %2629 = vmatpush1.msra.mxu0 %v2593
      %2630 = vmatprep.subr.mxu0 0.0
      %2631 = vmatpush1.msra.mxu0 %v2594
      %2632 = vmatprep.subr.mxu0 0.0
      %2633 = vmatpush1.msra.mxu0 %v2595
      %2634 = vmatprep.subr.mxu0 0.0
      %2635 = vmatpush1.msra.mxu0 %v2596
      %2636 = vmatprep.subr.mxu0 0.0
      %2637 = vmatpush1.msra.mxu0 0.0
      %2638 = vmatprep.subr.mxu0 0.0
      %2639 = vmatpush1.msra.mxu0 0.0
      %2640 = vmatprep.subr.mxu0 0.0
      %2641 = vmatpush1.msra.mxu0 0.0
      %2642 = vmatprep.subr.mxu0 0.0
      %2643 = vmatpush1.msra.mxu0 0.0
      %2644 = vmatprep.subr.mxu0 0.0
      %2645 = vmatpush1.msra.mxu0 0.0
      %2646 = vmatprep.subr.mxu0 0.0
      %2647 = vmatpush1.msra.mxu0 0.0
      %2648 = vmatprep.subr.mxu0 0.0
      %2649 = vmatpush1.msra.mxu0 0.0
      %2650 = vmatprep.subr.mxu0 0.0
      %2651 = vmatpush1.msra.mxu0 0.0
      %2652 = vmatprep.subr.mxu0 0.0
      %2653 = vmatpush1.msra.mxu0 0.0
      %2654 = vmatprep.subr.mxu0 0.0
      %2655 = vmatpush1.msra.mxu0 0.0
      %2656 = vmatprep.subr.mxu0 0.0
      %2657 = vmatpush1.msra.mxu0 0.0
      %2658 = vmatprep.subr.mxu0 0.0
      %2659 = vmatpush1.msra.mxu0 0.0
      %2660 = vmatprep.subr.mxu0 0.0
      %2661 = vmatpush1.msra.mxu0 0.0
      %2662 = vmatprep.subr.mxu0 0.0
      %2663 = vmatpush1.msra.mxu0 0.0
      %2664 = vmatprep.subr.mxu0 0.0
      %2665 = vmatpush1.msra.mxu0 0.0
      %2666 = vmatprep.subr.mxu0 0.0
      %2667 = vmatpush1.msra.mxu0 0.0
      %2668 = vmatprep.mubr.f32.mxu0 0.0
      %2669 = vmatmul.mubr.f32.gmra.mrb[0].mxu0 %v2579
      %v2670 = vpop.f32.mrb[0].mxu0
      %v2671 = vadd.f32 %v2602, %v2670
      %v2672 = vpop.f32.mrb[0].mxu0
      %2673 = vmatprep.mubr.f32.mxu0 0.0
      %2674 = vmatmul.mubr.f32.gmra.mrb[0].mxu0 %v2580
      %v2675 = vpop.f32.mrb[0].mxu0
      %v2676 = vadd.f32 %v2602, %v2675
      %v2677 = vpop.f32.mrb[0].mxu0
      %2678 = vdwg.mxu0
      %v2679 = vadd.f32 %v2485, %v2671
      %v2680 = vadd.f32 %v2486, %v2676
      %v2681 = vld [vmem:[%s834] sm:$0x1]
      %v2682 = vld [vmem:[%s837] sm:$0x1]
      %v2683 = vsel %vm899, %v2679, 0.0
      %2684 = vadd.xlane.f32.xlu0 %v2683
      %v2685 = vpop.xlane.xlu0 %2684
      %v2686 = vsel %vm899, %v2680, 0.0
      %2687 = vadd.xlane.f32.xlu0 %v2686
      %v2688 = vpop.xlane.xlu0 %2687
      %v2689 = vmul.f32 %v2685, %v2450
      %v2690 = vmul.f32 %v2688, %v2450
      %v2691 = vsub.f32 %v2679, %v2689
      %v2692 = vsub.f32 %v2680, %v2690
      %v2693 = vmul.f32 %v2691, %v2691
      %v2694 = vmul.f32 %v2692, %v2692
      %v2695 = vsel %vm899, %v2693, 0.0
      %2696 = vadd.xlane.f32.xlu0 %v2695
      %v2697 = vpop.xlane.xlu0 %2696
      %v2698 = vsel %vm899, %v2694, 0.0
      %2699 = vadd.xlane.f32.xlu0 %v2698
      %v2700 = vpop.xlane.xlu0 %2699
      %v2701 = vmul.f32 %v2697, %v2450
      %v2702 = vmul.f32 %v2700, %v2450
      %v2703 = vadd.f32 %v2701, 1e-05
      %v2704 = vadd.f32 %v2702, 1e-05
      %v2705 = vrsqrt.pop %v2703
      %v2706 = vrsqrt.pop %v2704
      %v2707 = vmul.f32 %v2691, %v2705
      %v2708 = vmul.f32 %v2692, %v2706
      %v2710 = vlaneseq
      %v2711 = vshrl.u32 %v2710, 7
      %v2712 = vsub.s32 0, %v2711
      %v2713 = vrot.slane %v2681, %v2712
      %v2715 = vmul.f32 %v2707, %v2713
      %v2716 = vmul.f32 %v2708, %v2713
      %v2718 = vlaneseq
      %v2719 = vshrl.u32 %v2718, 7
      %v2720 = vsub.s32 0, %v2719
      %v2721 = vrot.slane %v2682, %v2720
      %v2723 = vadd.f32 %v2715, %v2721
      %v2724 = vadd.f32 %v2716, %v2721
      %2725 = vst.msk [vmem:[#allocation2] sm:$0xff] %vm899, %v2723
      %2726 = vst.msk [vmem:[#allocation2 + $0x8] sm:$0xff] %vm899, %v2724
      %2727 = vst.msk [vmem:[%s858] sm:$0xff] %vm899, %v2723
      %2728 = vst.msk [vmem:[%s858 + $0x8] sm:$0xff] %vm899, %v2724
      %p2729 = scmp.eq.s32.totalorder %s36, 1
      // Predicated region
      $region89: #{transformer_encoder.1} parent=83 // pred_check
        %p2730 = pneg %p2729
      $region90: #{transformer_encoder.1} parent=83 // pred_check_branch
        %2732 = sbr.rel (%p2730) target = $region92
      $region91: #{transformer_encoder.1} parent=83 // pred_region
        %v2733 = vld [vmem:[%s14] sm:$0x1]
        %v2734 = vld [vmem:[%s15] sm:$0x1]
        %v2735 = vsel %vm899, %v2723, 0.0
        %2736 = vadd.xlane.f32.xlu0 %v2735
        %v2737 = vpop.xlane.xlu0 %2736
        %v2738 = vsel %vm899, %v2724, 0.0
        %2739 = vadd.xlane.f32.xlu0 %v2738
        %v2740 = vpop.xlane.xlu0 %2739
        %v2741 = vmul.f32 %v2737, %v2450
        %v2742 = vmul.f32 %v2740, %v2450
        %v2743 = vsub.f32 %v2723, %v2741
        %v2744 = vsub.f32 %v2724, %v2742
        %v2745 = vmul.f32 %v2743, %v2743
        %v2746 = vmul.f32 %v2744, %v2744
        %v2747 = vsel %vm899, %v2745, 0.0
        %2748 = vadd.xlane.f32.xlu0 %v2747
        %v2749 = vpop.xlane.xlu0 %2748
        %v2750 = vsel %vm899, %v2746, 0.0
        %2751 = vadd.xlane.f32.xlu0 %v2750
        %v2752 = vpop.xlane.xlu0 %2751
        %v2753 = vmul.f32 %v2749, %v2450
        %v2754 = vmul.f32 %v2752, %v2450
        %v2755 = vadd.f32 %v2753, 1e-05
        %v2756 = vadd.f32 %v2754, 1e-05
        %v2757 = vrsqrt.pop %v2755
        %v2758 = vrsqrt.pop %v2756
        %v2759 = vmul.f32 %v2743, %v2757
        %v2760 = vmul.f32 %v2744, %v2758
        %v2762 = vlaneseq
        %v2763 = vshrl.u32 %v2762, 7
        %v2764 = vsub.s32 0, %v2763
        %v2765 = vrot.slane %v2733, %v2764
        %v2767 = vmul.f32 %v2759, %v2765
        %v2768 = vmul.f32 %v2760, %v2765
        %v2770 = vlaneseq
        %v2771 = vshrl.u32 %v2770, 7
        %v2772 = vsub.s32 0, %v2771
        %v2773 = vrot.slane %v2734, %v2772
        %v2775 = vadd.f32 %v2767, %v2773
        %v2776 = vadd.f32 %v2768, %v2773
        %2777 = vst.msk [vmem:[%s842] sm:$0xff] %vm899, %v2775
        %2778 = vst.msk [vmem:[%s842 + $0x8] sm:$0xff] %vm899, %v2776
      $region92: #{transformer_encoder.1} parent=83 // pred_fallthru
        _
      %s2779 = smul.u32 2, %s35
      %p2780 = scmp.lt.s32.totalorder %s2779, 1
      %s2781 = scalar_select %p2780, %s2779, 1
      %s2782 = smul.addr %s2781, 8
      %s2783 = scalar_lea.vmem %s16, %s2782
      %s2784 = smul.u32 2, %s35
      %p2785 = scmp.lt.s32.totalorder %s2784, 1
      %s2786 = scalar_select %p2785, %s2784, 1
      %s2787 = smul.addr %s2786, 8
      %s2788 = scalar_lea.vmem %s17, %s2787
      %s2789 = smul.u32 2, %s35
      %p2790 = scmp.lt.s32.totalorder %s36, 1
      %s2791 = scalar_select %p2790, %s36, 1
      %p2792 = scmp.lt.s32.totalorder %s2789, 1
      %s2793 = scalar_select %p2792, %s2789, 1
      %s2794 = smul.addr %s2791, 2
      %s2795 = sadd.s32 %s2793, %s2794
      %s2796 = smul.addr %s2795, 8
      %s2797 = scalar_lea.vmem %s18, %s2796
      %s2798 = smul.u32 2, %s35
      %p2799 = scmp.lt.s32.totalorder %s36, 1
      %s2800 = scalar_select %p2799, %s36, 1
      %p2801 = scmp.lt.s32.totalorder %s2798, 1
      %s2802 = scalar_select %p2801, %s2798, 1
      %s2803 = smul.addr %s2800, 2
      %s2804 = sadd.s32 %s2802, %s2803
      %s2805 = smul.addr %s2804, 8
      %s2806 = scalar_lea.vmem %s19, %s2805
      // Predicated region
      $region93: #{transformer_encoder.1} parent=83 // pred_check
        %p2807 = pneg %p462
      $region94: #{transformer_encoder.1} parent=83 // pred_check_branch
        %2809 = sbr.rel (%p2807) target = $region96
      $region95: #{transformer_encoder.1} parent=83 // pred_region
        %s2810 = smul.u32 2, %s35
      $region96: #{transformer_encoder.1} parent=83 // pred_fallthru
        _
      // Predicated region
      $region97: #{transformer_encoder.1} parent=83 // pred_check
        %p2811 = pneg %p488
      $region98: #{transformer_encoder.1} parent=83 // pred_check_branch
        %2813 = sbr.rel (%p2811) target = $region100
      $region99: #{transformer_encoder.1} parent=83 // pred_region
        %s2814 = smul.u32 2, %s35
      $region100: #{transformer_encoder.1} parent=83 // pred_fallthru
        _
      // Predicated region
      $region101: #{transformer_encoder.1} parent=83 // pred_check
        %p2815 = pneg %p516
      $region102: #{transformer_encoder.1} parent=83 // pred_check_branch
        %2817 = sbr.rel (%p2815) target = $region104
      $region103: #{transformer_encoder.1} parent=83 // pred_region
        %s2818 = smul.u32 2, %s35
      $region104: #{transformer_encoder.1} parent=83 // pred_fallthru
        _
      // Predicated region
      $region105: #{transformer_encoder.1} parent=83 // pred_check
        %p2819 = pneg %p544
      $region106: #{transformer_encoder.1} parent=83 // pred_check_branch
        %2821 = sbr.rel (%p2819) target = $region108
      $region107: #{transformer_encoder.1} parent=83 // pred_region
        %s2822 = smul.u32 2, %s35
      $region108: #{transformer_encoder.1} parent=83 // pred_fallthru
        _
      // Predicated region
      $region109: #{transformer_encoder.1} parent=83 // pred_check
        %p2823 = pneg %p462
      $region110: #{transformer_encoder.1} parent=83 // pred_check_branch
        %2825 = sbr.rel (%p2823) target = $region112
      $region111: #{transformer_encoder.1} parent=83 // pred_region
        %s2826 = smul.u32 2, %s35
        %p2827 = scmp.lt.s32.totalorder %s2826, 1
        %s2828 = scalar_select %p2827, %s2826, 1
        %s2829 = smul.addr %s2828, 8
        %s2830 = scalar_lea.vmem %s16, %s2829
      $region112: #{transformer_encoder.1} parent=83 // pred_fallthru
        _
      // Predicated region
      $region113: #{transformer_encoder.1} parent=83 // pred_check
        %p2831 = pneg %p488
      $region114: #{transformer_encoder.1} parent=83 // pred_check_branch
        %2833 = sbr.rel (%p2831) target = $region116
      $region115: #{transformer_encoder.1} parent=83 // pred_region
        %s2834 = smul.u32 2, %s35
        %p2835 = scmp.lt.s32.totalorder %s2834, 1
        %s2836 = scalar_select %p2835, %s2834, 1
        %s2837 = smul.addr %s2836, 8
        %s2838 = scalar_lea.vmem %s17, %s2837
      $region116: #{transformer_encoder.1} parent=83 // pred_fallthru
        _
    $region84: #{transformer_encoder.1} parent=5 // pred_fallthru
      _
    %p2839 = scmp.le.s32.totalorder 2, %s26
    // Predicated region
    $region117: #{transformer_encoder.1} parent=5 // pred_check
      %p2840 = pneg %p2839
    $region118: #{transformer_encoder.1} parent=5 // pred_check_branch
      %2842 = sbr.rel (%p2840) target = $region120
    $region119: #{transformer_encoder.1} parent=5 // pred_region
      %s2843 = ssub.s32 %s26, 2
      // Predicated region
      $region121: #{transformer_encoder.1} parent=119 // pred_check
        %p2844 = pneg %p522
      $region122: #{transformer_encoder.1} parent=119 // pred_check_branch
        %2846 = sbr.rel (%p2844) target = $region124
      $region123: #{transformer_encoder.1} parent=119 // pred_region
        %s2847 = smul.u32 2, %s37
        %p2848 = scmp.lt.s32.totalorder %s38, 1
        %s2849 = scalar_select %p2848, %s38, 1
        %p2850 = scmp.lt.s32.totalorder %s2847, 1
        %s2851 = scalar_select %p2850, %s2847, 1
        %s2852 = smul.addr %s2849, 2
        %s2853 = sadd.s32 %s2851, %s2852
        %s2854 = smul.addr %s2853, 8
        %s2855 = scalar_lea.vmem %s18, %s2854
      $region124: #{transformer_encoder.1} parent=119 // pred_fallthru
        _
      // Predicated region
      $region125: #{transformer_encoder.1} parent=119 // pred_check
        %p2856 = pneg %p550
      $region126: #{transformer_encoder.1} parent=119 // pred_check_branch
        %2858 = sbr.rel (%p2856) target = $region128
      $region127: #{transformer_encoder.1} parent=119 // pred_region
        %s2859 = smul.u32 2, %s37
        %p2860 = scmp.lt.s32.totalorder %s38, 1
        %s2861 = scalar_select %p2860, %s38, 1
        %p2862 = scmp.lt.s32.totalorder %s2859, 1
        %s2863 = scalar_select %p2862, %s2859, 1
        %s2864 = smul.addr %s2861, 2
        %s2865 = sadd.s32 %s2863, %s2864
        %s2866 = smul.addr %s2865, 8
        %s2867 = scalar_lea.vmem %s19, %s2866
      $region128: #{transformer_encoder.1} parent=119 // pred_fallthru
        _
    $region120: #{transformer_encoder.1} parent=5 // pred_fallthru
      _
  $region6: #{transformer_encoder.1} parent=0 // loop_footer
    %s30 = sadd.s32 1, %s26
  $region7: #{transformer_encoder.1} parent=0 // loop_footer_branch
    %25 = sbr.rel target = $region3
  $region8: #{transformer_encoder.1} parent=0 // loop_exit
    _

</llo_original>
